<compile_context>
chip_gen: v6e
topology: v6e:2x2x1
jax: 0.10.0
libtpu: 0.0.40
codegen_flags: <defaults>
</compile_context>

<pallas_src>
import numpy as np
import jax
import jax.numpy as jnp
from jax import lax
from jax.experimental import pallas as pl
from jax.experimental.pallas import tpu as pltpu

# ---------------- module "__init__" configuration ----------------
N_FFT = 256
WIN_LENGTH = N_FFT            # rectangular window (torch.stft window=None)
HOP_LENGTH = N_FFT // 2       # 50% overlap (torchaudio-style default)
N_FREQ = N_FFT // 2 + 1       # onesided bins = 129
NF_PAD = ((N_FREQ + 127) // 128) * 128   # 256: lane-dense output width
TF = 256                      # frame tile: fills 256-row MXU, multiple of 128 for v5e

_PI = 3.141592653589793
_PI_2 = 1.5707963267948966
_PI_4 = 0.7853981633974483
_TAN_PI_8 = 0.4142135623730951
_TAN_3PI_8 = 2.414213562373095


# ---------------- deterministic parameter construction ----------------
def _stft_matrices(n_fft, win_length, nf_pad):
    """Windowed rDFT basis, cos|(-sin) fused and zero-padded: (n_fft, 2*nf_pad) f32."""
    n_freq = n_fft // 2 + 1
    win = np.zeros(n_fft, dtype=np.float64)
    off = (n_fft - win_length) // 2
    win[off:off + win_length] = 1.0              # torch.stft(window=None) -> ones
    n = np.arange(n_fft)[:, None]
    k = np.arange(n_freq)[None, :]
    ang = 2.0 * np.pi * n * k / n_fft
    cos_m = win[:, None] * np.cos(ang)           # X[k] = sum x*cos - i * sum x*sin
    sin_m = -win[:, None] * np.sin(ang)
    dft = np.zeros((n_fft, 2 * nf_pad), dtype=np.float32)
    dft[:, :n_freq] = cos_m
    dft[:, nf_pad:nf_pad + n_freq] = sin_m
    return dft


_DFT_F32 = _stft_matrices(N_FFT, WIN_LENGTH, NF_PAD)


# ---------------- in-kernel math helpers (VPU-only ops) ----------------
def _atan_pos(q):
    """atan(q) for q >= 0 (Cephes-style range reduction + odd minimax polynomial)."""
    big = q > _TAN_3PI_8
    mid = q > _TAN_PI_8
    x = jnp.where(big, -1.0 / q, jnp.where(mid, (q - 1.0) / (q + 1.0), q))
    z = x * x
    p = ((8.05374449538e-2 * z - 1.38776856032e-1) * z + 1.99777106478e-1) * z \
        - 3.33329491539e-1
    atan_x = p * z * x + x
    offset = jnp.where(big, _PI_2, jnp.where(mid, _PI_4, 0.0))
    return offset + atan_x


def _atan2(y, x):
    """Elementwise atan2(y, x) built from supported VPU ops (atan2(0,0) = 0)."""
    ax = jnp.abs(x)
    ay = jnp.abs(y)
    q = ay / jnp.where(ax == 0.0, 1.0, ax)
    base = _atan_pos(q)
    base = jnp.where(ax == 0.0, _PI_2, base)
    r = jnp.where(x < 0.0, _PI - base, base)
    r = jnp.where(y < 0.0, -r, r)
    return jnp.where((ax == 0.0) & (ay == 0.0), 0.0, r)


# ---------------- Pallas kernel ----------------
def stft_magphase_kernel(frames_ref, dft_hi_ref, dft_lo_ref, mag_ref, phase_ref):
    # frames_ref: (TF, N_FFT) f32   dft_hi/lo_ref: (N_FFT, 2*NF_PAD) bf16
    # mag_ref/phase_ref: (TF, NF_PAD) f32
    x = frames_ref[...]
    # bf16x3 split of the f32 LHS (~= lax.Precision.HIGH: 3 MXU passes vs HIGHEST's 6)
    x_hi = x.astype(jnp.bfloat16)
    x_lo = (x - x_hi.astype(jnp.float32)).astype(jnp.bfloat16)
    d_hi = dft_hi_ref[...]
    d_lo = dft_lo_ref[...]
    y = jnp.dot(x_hi, d_hi, preferred_element_type=jnp.float32)
    y = y + jnp.dot(x_lo, d_hi, preferred_element_type=jnp.float32)
    y = y + jnp.dot(x_hi, d_lo, preferred_element_type=jnp.float32)
    re = y[:, :NF_PAD]
    im = y[:, NF_PAD:]
    mag_ref[...] = jnp.sqrt(re * re + im * im)      # magphase power=1.0
    phase_ref[...] = _atan2(im, re)                 # angle


# ---------------- wrapper ----------------
@jax.jit
def spectrogram(samples):
    """samples: (B, T) f32 -> (mag, phase), each (B, n_freq, n_frames) f32."""
    B, T = samples.shape
    pad = N_FFT // 2
    xp = jnp.pad(samples.astype(jnp.float32), ((0, 0), (pad, pad)), mode="reflect")
    L = xp.shape[-1]
    n_frames = 1 + (L - N_FFT) // HOP_LENGTH

    if 2 * HOP_LENGTH == N_FFT:
        # 50% overlap: frame f = rows f and f+1 of the (L//hop, hop) view — no gather.
        n_rows = n_frames + 1
        rows = xp[:, :n_rows * HOP_LENGTH].reshape(B, n_rows, HOP_LENGTH)
        frames = jnp.concatenate([rows[:, :n_frames], rows[:, 1:n_frames + 1]], axis=-1)
    else:  # generic hop fallback
        idx = jnp.arange(n_frames)[:, None] * HOP_LENGTH + jnp.arange(N_FFT)[None, :]
        frames = xp[:, idx]
    frames = frames.reshape(B * n_frames, N_FFT)

    F = B * n_frames
    n_tiles = pl.cdiv(F, TF)
    F_pad = n_tiles * TF
    frames = jnp.pad(frames, ((0, F_pad - F), (0, 0)))

    dft = jnp.asarray(_DFT_F32)                    # constant; folded at compile time
    dft_hi = dft.astype(jnp.bfloat16)
    dft_lo = (dft - dft_hi.astype(jnp.float32)).astype(jnp.bfloat16)

    mag, phase = pl.pallas_call(
        stft_magphase_kernel,
        out_shape=(jax.ShapeDtypeStruct((F_pad, NF_PAD), jnp.float32),
                   jax.ShapeDtypeStruct((F_pad, NF_PAD), jnp.float32)),
        grid_spec=pltpu.PrefetchScalarGridSpec(
            num_scalar_prefetch=0,
            grid=(n_tiles,),
            in_specs=[
                pl.BlockSpec((TF, N_FFT), lambda i: (i, 0)),
                pl.BlockSpec((N_FFT, 2 * NF_PAD), lambda i: (0, 0)),
                pl.BlockSpec((N_FFT, 2 * NF_PAD), lambda i: (0, 0)),
            ],
            out_specs=[
                pl.BlockSpec((TF, NF_PAD), lambda i: (i, 0)),
                pl.BlockSpec((TF, NF_PAD), lambda i: (i, 0)),
            ],
        ),
        compiler_params=pltpu.CompilerParams(dimension_semantics=("parallel",)),
    )(frames, dft_hi, dft_lo)

    # drop padded frame rows and padded freq lanes, go to torch layout (B, freq, time)
    mag = mag[:F, :N_FREQ].reshape(B, n_frames, N_FREQ).transpose(0, 2, 1)
    phase = phase[:F, :N_FREQ].reshape(B, n_frames, N_FREQ).transpose(0, 2, 1)
    return mag, phase


# ---------------- pure-JAX reference ----------------
def spectrogram_ref(samples):
    B, T = samples.shape
    pad = N_FFT // 2
    xp = jnp.pad(samples.astype(jnp.float32), ((0, 0), (pad, pad)), mode="reflect")
    n_frames = 1 + (xp.shape[-1] - N_FFT) // HOP_LENGTH
    idx = jnp.arange(n_frames)[:, None] * HOP_LENGTH + jnp.arange(N_FFT)[None, :]
    frames = xp[:, idx]                                      # (B, n_frames, n_fft)
    win = np.zeros(N_FFT, dtype=np.float32)
    off = (N_FFT - WIN_LENGTH) // 2
    win[off:off + WIN_LENGTH] = 1.0
    spec = jnp.fft.rfft(frames * win, axis=-1)               # (B, n_frames, n_freq)
    mag = jnp.abs(spec).astype(jnp.float32)
    phase = jnp.angle(spec).astype(jnp.float32)
    return mag.transpose(0, 2, 1), phase.transpose(0, 2, 1)


if __name__ == "__main__":
    key = jax.random.PRNGKey(0)
    B, T = 2, 16384                       # ~1 s of 16 kHz audio; grid has >=2 tiles
    samples = jax.random.normal(key, (B, T), dtype=jnp.float32)

    mag, phase = spectrogram(samples)
    jax.block_until_ready((mag, phase))
    ref_mag, ref_phase = spectrogram_ref(samples)
    jax.block_until_ready((ref_mag, ref_phase))

    n_frames = 1 + T // HOP_LENGTH
    assert mag.shape == (B, N_FREQ, n_frames), mag.shape
    assert phase.shape == (B, N_FREQ, n_frames), phase.shape

    mag_np, phase_np = np.asarray(mag), np.asarray(phase)
    rmag_np, rphase_np = np.asarray(ref_mag), np.asarray(ref_phase)

    np.testing.assert_allclose(mag_np, rmag_np, rtol=2e-3, atol=5e-3)
    # Validate phase through the reconstructed complex STFT (avoids +/-pi branch-cut
    # ambiguity on bins whose magnitude is ~0).
    kc = mag_np * np.exp(1j * phase_np)
    rc = rmag_np * np.exp(1j * rphase_np)
    np.testing.assert_allclose(kc.real, rc.real, rtol=2e-3, atol=5e-3)
    np.testing.assert_allclose(kc.imag, rc.imag, rtol=2e-3, atol=5e-3)
    print("KERNEL_OK")
</pallas_src>

<mosaic_0001>
module attributes {stable_mosaic.version = 11 : i64} {
  func.func @stft_magphase_kernel(%arg0: i32, %arg1: memref<256x256xf32, #tpu.memory_space<vmem>>, %arg2: memref<256x512xbf16, #tpu.memory_space<vmem>>, %arg3: memref<256x512xbf16, #tpu.memory_space<vmem>>, %arg4: memref<256x256xf32, #tpu.memory_space<vmem>>, %arg5: memref<256x256xf32, #tpu.memory_space<vmem>>) attributes {dimension_semantics = [#tpu.dimension_semantics<parallel>], iteration_bounds = array<i64: 2>, scalar_prefetch = 0 : i64, scratch_operands = 0 : i64, tpu.core_type = #tpu.core_type<tc>, window_params = [{transform_indices = @transform_0, window_bounds = array<i64: 256, 256>}, {pipeline_mode = #tpu.pipeline_mode<synchronous>, transform_indices = @transform_1, window_bounds = array<i64: 256, 512>}, {pipeline_mode = #tpu.pipeline_mode<synchronous>, transform_indices = @transform_2, window_bounds = array<i64: 256, 512>}, {transform_indices = @transform_3, window_bounds = array<i64: 256, 256>}, {transform_indices = @transform_4, window_bounds = array<i64: 256, 256>}]} {
    %c0 = arith.constant 0 : index
    %c0_0 = arith.constant 0 : index
    %0 = vector.load %arg1[%c0, %c0_0] : memref<256x256xf32, #tpu.memory_space<vmem>>, vector<256x256xf32>
    %1 = arith.truncf %0 : vector<256x256xf32> to vector<256x256xbf16>
    %2 = arith.extf %1 : vector<256x256xbf16> to vector<256x256xf32>
    %3 = arith.subf %0, %2 : vector<256x256xf32>
    %4 = arith.truncf %3 : vector<256x256xf32> to vector<256x256xbf16>
    %c0_1 = arith.constant 0 : index
    %c0_2 = arith.constant 0 : index
    %5 = vector.load %arg2[%c0_1, %c0_2] : memref<256x512xbf16, #tpu.memory_space<vmem>>, vector<256x512xbf16>
    %c0_3 = arith.constant 0 : index
    %c0_4 = arith.constant 0 : index
    %6 = vector.load %arg3[%c0_3, %c0_4] : memref<256x512xbf16, #tpu.memory_space<vmem>>, vector<256x512xbf16>
    %cst = arith.constant dense<0.000000e+00> : vector<256x512xf32>
    %7 = tpu.matmul %1, %5, %cst {dimension_numbers = #tpu.dot_dimension_numbers<[1], [0], [0], [1], [0, 0, 1, 1], [], []>} : vector<256x256xbf16>, vector<256x512xbf16>, vector<256x512xf32> -> vector<256x512xf32>
    %cst_5 = arith.constant dense<0.000000e+00> : vector<256x512xf32>
    %8 = tpu.matmul %4, %5, %cst_5 {dimension_numbers = #tpu.dot_dimension_numbers<[1], [0], [0], [1], [0, 0, 1, 1], [], []>} : vector<256x256xbf16>, vector<256x512xbf16>, vector<256x512xf32> -> vector<256x512xf32>
    %9 = arith.addf %7, %8 : vector<256x512xf32>
    %cst_6 = arith.constant dense<0.000000e+00> : vector<256x512xf32>
    %10 = tpu.matmul %1, %6, %cst_6 {dimension_numbers = #tpu.dot_dimension_numbers<[1], [0], [0], [1], [0, 0, 1, 1], [], []>} : vector<256x256xbf16>, vector<256x512xbf16>, vector<256x512xf32> -> vector<256x512xf32>
    %11 = arith.addf %9, %10 : vector<256x512xf32>
    %12 = vector.extract_strided_slice %11 {offsets = [0, 0], sizes = [256, 256], strides = [1, 1]} : vector<256x512xf32> to vector<256x256xf32>
    %13 = vector.extract_strided_slice %11 {offsets = [0, 256], sizes = [256, 256], strides = [1, 1]} : vector<256x512xf32> to vector<256x256xf32>
    %14 = arith.mulf %12, %12 : vector<256x256xf32>
    %15 = arith.mulf %13, %13 : vector<256x256xf32>
    %16 = arith.addf %14, %15 : vector<256x256xf32>
    %17 = math.sqrt %16 : vector<256x256xf32>
    %c0_7 = arith.constant 0 : index
    %c0_8 = arith.constant 0 : index
    %18 = vector.load %arg4[%c0_7, %c0_8] : memref<256x256xf32, #tpu.memory_space<vmem>>, vector<256x256xf32>
    tpu.vector_store %arg4[%c0_7, %c0_8], %17 {strides = array<i32>} : memref<256x256xf32, #tpu.memory_space<vmem>>, vector<256x256xf32>,
    %19 = math.absf %12 : vector<256x256xf32>
    %20 = math.absf %13 : vector<256x256xf32>
    %cst_9 = arith.constant 0.000000e+00 : f32
    %21 = vector.broadcast %cst_9 : f32 to vector<256x256xf32>
    %22 = arith.cmpf oeq, %19, %21 : vector<256x256xf32>
    %cst_10 = arith.constant 1.000000e+00 : f32
    %23 = vector.broadcast %cst_10 : f32 to vector<256x256xf32>
    %24 = arith.select %22, %23, %19 : vector<256x256xi1>, vector<256x256xf32>
    %25 = arith.divf %20, %24 : vector<256x256xf32>
    %cst_11 = arith.constant 2.41421366 : f32
    %26 = vector.broadcast %cst_11 : f32 to vector<256x256xf32>
    %27 = arith.cmpf ogt, %25, %26 : vector<256x256xf32>
    %cst_12 = arith.constant 0.414213568 : f32
    %28 = vector.broadcast %cst_12 : f32 to vector<256x256xf32>
    %29 = arith.cmpf ogt, %25, %28 : vector<256x256xf32>
    %cst_13 = arith.constant -1.000000e+00 : f32
    %30 = vector.broadcast %cst_13 : f32 to vector<256x256xf32>
    %31 = arith.divf %30, %25 : vector<256x256xf32>
    %cst_14 = arith.constant 1.000000e+00 : f32
    %32 = vector.broadcast %cst_14 : f32 to vector<256x256xf32>
    %33 = arith.subf %25, %32 : vector<256x256xf32>
    %cst_15 = arith.constant 1.000000e+00 : f32
    %34 = vector.broadcast %cst_15 : f32 to vector<256x256xf32>
    %35 = arith.addf %25, %34 : vector<256x256xf32>
    %36 = arith.divf %33, %35 : vector<256x256xf32>
    %37 = arith.select %29, %36, %25 : vector<256x256xi1>, vector<256x256xf32>
    %38 = arith.select %27, %31, %37 : vector<256x256xi1>, vector<256x256xf32>
    %39 = arith.mulf %38, %38 : vector<256x256xf32>
    %cst_16 = arith.constant 0.0805374458 : f32
    %40 = vector.broadcast %cst_16 : f32 to vector<256x256xf32>
    %41 = arith.mulf %40, %39 : vector<256x256xf32>
    %cst_17 = arith.constant 0.138776854 : f32
    %42 = vector.broadcast %cst_17 : f32 to vector<256x256xf32>
    %43 = arith.subf %41, %42 : vector<256x256xf32>
    %44 = arith.mulf %43, %39 : vector<256x256xf32>
    %cst_18 = arith.constant 0.199777111 : f32
    %45 = vector.broadcast %cst_18 : f32 to vector<256x256xf32>
    %46 = arith.addf %44, %45 : vector<256x256xf32>
    %47 = arith.mulf %46, %39 : vector<256x256xf32>
    %cst_19 = arith.constant 0.333329499 : f32
    %48 = vector.broadcast %cst_19 : f32 to vector<256x256xf32>
    %49 = arith.subf %47, %48 : vector<256x256xf32>
    %50 = arith.mulf %49, %39 : vector<256x256xf32>
    %51 = arith.mulf %50, %38 : vector<256x256xf32>
    %52 = arith.addf %51, %38 : vector<256x256xf32>
    %cst_20 = arith.constant 0.785398185 : f32
    %cst_21 = arith.constant 0.000000e+00 : f32
    %53 = vector.broadcast %cst_20 : f32 to vector<256x256xf32>
    %54 = vector.broadcast %cst_21 : f32 to vector<256x256xf32>
    %55 = arith.select %29, %53, %54 : vector<256x256xi1>, vector<256x256xf32>
    %cst_22 = arith.constant 1.57079637 : f32
    %56 = vector.broadcast %cst_22 : f32 to vector<256x256xf32>
    %57 = arith.select %27, %56, %55 : vector<256x256xi1>, vector<256x256xf32>
    %58 = arith.addf %57, %52 : vector<256x256xf32>
    %cst_23 = arith.constant 0.000000e+00 : f32
    %59 = vector.broadcast %cst_23 : f32 to vector<256x256xf32>
    %60 = arith.cmpf oeq, %19, %59 : vector<256x256xf32>
    %cst_24 = arith.constant 1.57079637 : f32
    %61 = vector.broadcast %cst_24 : f32 to vector<256x256xf32>
    %62 = arith.select %60, %61, %58 : vector<256x256xi1>, vector<256x256xf32>
    %cst_25 = arith.constant 0.000000e+00 : f32
    %63 = vector.broadcast %cst_25 : f32 to vector<256x256xf32>
    %64 = arith.cmpf olt, %12, %63 : vector<256x256xf32>
    %cst_26 = arith.constant 3.14159274 : f32
    %65 = vector.broadcast %cst_26 : f32 to vector<256x256xf32>
    %66 = arith.subf %65, %62 : vector<256x256xf32>
    %67 = arith.select %64, %66, %62 : vector<256x256xi1>, vector<256x256xf32>
    %cst_27 = arith.constant 0.000000e+00 : f32
    %68 = vector.broadcast %cst_27 : f32 to vector<256x256xf32>
    %69 = arith.cmpf olt, %13, %68 : vector<256x256xf32>
    %cst_28 = arith.constant 0.000000e+00 : f32
    %70 = vector.broadcast %cst_28 : f32 to vector<256x256xf32>
    %71 = arith.subf %70, %67 : vector<256x256xf32>
    %72 = arith.select %69, %71, %67 : vector<256x256xi1>, vector<256x256xf32>
    %cst_29 = arith.constant 0.000000e+00 : f32
    %73 = vector.broadcast %cst_29 : f32 to vector<256x256xf32>
    %74 = arith.cmpf oeq, %19, %73 : vector<256x256xf32>
    %cst_30 = arith.constant 0.000000e+00 : f32
    %75 = vector.broadcast %cst_30 : f32 to vector<256x256xf32>
    %76 = arith.cmpf oeq, %20, %75 : vector<256x256xf32>
    %77 = arith.andi %74, %76 : vector<256x256xi1>
    %cst_31 = arith.constant 0.000000e+00 : f32
    %78 = vector.broadcast %cst_31 : f32 to vector<256x256xf32>
    %79 = arith.select %77, %78, %72 : vector<256x256xi1>, vector<256x256xf32>
    %c0_32 = arith.constant 0 : index
    %c0_33 = arith.constant 0 : index
    %80 = vector.load %arg5[%c0_32, %c0_33] : memref<256x256xf32, #tpu.memory_space<vmem>>, vector<256x256xf32>
    tpu.vector_store %arg5[%c0_32, %c0_33], %79 {strides = array<i32>} : memref<256x256xf32, #tpu.memory_space<vmem>>, vector<256x256xf32>,
    return
  }
  func.func @transform_0(%arg0: i32) -> (i32, i32) {
    %c0_i32 = arith.constant 0 : i32
    %c0_i32_0 = arith.constant 0 : i32
    return %arg0, %c0_i32 : i32, i32
  }
  func.func @transform_1(%arg0: i32) -> (i32, i32) {
    %c0_i32 = arith.constant 0 : i32
    %c0_i32_0 = arith.constant 0 : i32
    %c0_i32_1 = arith.constant 0 : i32
    return %c0_i32, %c0_i32_0 : i32, i32
  }
  func.func @transform_2(%arg0: i32) -> (i32, i32) {
    %c0_i32 = arith.constant 0 : i32
    %c0_i32_0 = arith.constant 0 : i32
    %c0_i32_1 = arith.constant 0 : i32
    return %c0_i32, %c0_i32_0 : i32, i32
  }
  func.func @transform_3(%arg0: i32) -> (i32, i32) {
    %c0_i32 = arith.constant 0 : i32
    %c0_i32_0 = arith.constant 0 : i32
    return %arg0, %c0_i32 : i32, i32
  }
  func.func @transform_4(%arg0: i32) -> (i32, i32) {
    %c0_i32 = arith.constant 0 : i32
    %c0_i32_0 = arith.constant 0 : i32
    return %arg0, %c0_i32 : i32, i32
  }
}

</mosaic_0001>

<llo_original>
// kernel: spectrogram.1
$region0: #{spectrogram.1}
  #allocation0 [shape = 'u32[]', space=smem, size = 0x4, offset = 0x4, fixed_abs, tag = 'smem constant byte address 0x4 - core index']
  #allocation1 [shape = 'u32[144,128]{1,0:T(1,128)}', space=vmem, size = 0x12000, scoped, tag = 'internal scratch']
  %s0 = inlined_call_operand.vmem [shape: f32[512,256], index: 0, kind: input, shape index: {}]
  %s1 = inlined_call_operand.vmem [shape: bf16[256,512], index: 1, kind: input, shape index: {}]
  %s2 = inlined_call_operand.vmem [shape: bf16[256,512], index: 2, kind: input, shape index: {}]
  %s3 = inlined_call_operand.vmem [shape: f32[512,256], index: 3, kind: output, shape index: {0}]
  %s4 = inlined_call_operand.vmem [shape: f32[512,256], index: 4, kind: output, shape index: {1}]
  %5 = xla_tuple %s3, %s4
  %s6 = sld [smem:[#allocation0]]
  $region53: #{spectrogram.1} parent=0
    _
  %s8 = ssub.s32 1, %s6
  %s9 = scalar_select 0, %s8, %s6
  loop: start=0, step=1, limit=4
  $region2: #{spectrogram.1} parent=0 // loop_pre_header
    _
  $region3: #{spectrogram.1} parent=0 // loop_header
    %s11 = sphi 0, %s15
    %p12 = scmp.ge.s32.totalorder %s11, 4
    %s21 = sphi 0, %s23
    %s24 = sphi 0, %s21
    %s25 = sphi 0, %s24
    %s41 = sphi 0, %s25
    %s45 = sphi 0, %s45
    %s47 = sphi 0, %s45
    %s48 = sphi 0, %s47
    %s62 = sphi 0, %s48
    %s66 = sphi 0, %s66
    %s68 = sphi 0, %s66
    %s69 = sphi 0, %s68
    %s83 = sphi 0, %s69
    %s89 = sphi 0, %s91
    %s92 = sphi 0, %s89
    %s93 = sphi 0, %s92
    %s109 = sphi 0, %s93
    %s115 = sphi 0, %s117
    %s118 = sphi 0, %s115
    %s119 = sphi 0, %s118
    %s135 = sphi 0, %s119
  $region4: #{spectrogram.1} parent=0 // loop_header_branch
    %14 = sbr.rel (%p12) target = $region8
  $region5: #{spectrogram.1} parent=0 // loop_body
    %s16 = ssub.s32 %s11, 1
    %s17 = ssub.s32 %s11, 2
    %s18 = sadd.s32 %s11, 1
    %s19 = ssub.s32 %s11, %s18
    %p20 = scmp.eq.s32.totalorder %s19, 0
    %s22 = sadd.s32 %s21, 1
    %s23 = scalar_select %p20, %s21, %s22
    %p26 = pneg %p20
    %p27 = scmp.eq.s32.totalorder %s11, 1
    %p28 = por %p26, %p27
    %p29 = scmp.ne.s32.totalorder %s21, %s24
    %p30 = scmp.eq.s32.totalorder %s11, 0
    %p31 = por %p29, %p30
    %p32 = scmp.ne.s32.totalorder %s21, %s24
    %p33 = scmp.eq.s32.totalorder %s16, 1
    %p34 = por %p32, %p33
    %p35 = scmp.ne.s32.totalorder %s24, %s25
    %p36 = scmp.eq.s32.totalorder %s16, 0
    %p37 = por %p35, %p36
    %p38 = scmp.ne.s32.totalorder %s24, %s25
    %p39 = scmp.eq.s32.totalorder %s17, 1
    %p40 = por %p38, %p39
    %p42 = scmp.ne.s32.totalorder %s25, %s41
    %p43 = scmp.eq.s32.totalorder %s17, 0
    %p44 = por %p42, %p43
    %s46 = sadd.s32 %s45, 1
    %p49 = scmp.eq.s32.totalorder %s11, 1
    %p50 = scmp.ne.s32.totalorder %s45, %s47
    %p51 = scmp.eq.s32.totalorder %s11, 0
    %p52 = por %p50, %p51
    %p53 = scmp.ne.s32.totalorder %s45, %s47
    %p54 = scmp.eq.s32.totalorder %s16, 1
    %p55 = por %p53, %p54
    %p56 = scmp.ne.s32.totalorder %s47, %s48
    %p57 = scmp.eq.s32.totalorder %s16, 0
    %p58 = por %p56, %p57
    %p59 = scmp.ne.s32.totalorder %s47, %s48
    %p60 = scmp.eq.s32.totalorder %s17, 1
    %p61 = por %p59, %p60
    %p63 = scmp.ne.s32.totalorder %s48, %s62
    %p64 = scmp.eq.s32.totalorder %s17, 0
    %p65 = por %p63, %p64
    %s67 = sadd.s32 %s66, 1
    %p70 = scmp.eq.s32.totalorder %s11, 1
    %p71 = scmp.ne.s32.totalorder %s66, %s68
    %p72 = scmp.eq.s32.totalorder %s11, 0
    %p73 = por %p71, %p72
    %p74 = scmp.ne.s32.totalorder %s66, %s68
    %p75 = scmp.eq.s32.totalorder %s16, 1
    %p76 = por %p74, %p75
    %p77 = scmp.ne.s32.totalorder %s68, %s69
    %p78 = scmp.eq.s32.totalorder %s16, 0
    %p79 = por %p77, %p78
    %p80 = scmp.ne.s32.totalorder %s68, %s69
    %p81 = scmp.eq.s32.totalorder %s17, 1
    %p82 = por %p80, %p81
    %p84 = scmp.ne.s32.totalorder %s69, %s83
    %p85 = scmp.eq.s32.totalorder %s17, 0
    %p86 = por %p84, %p85
    %s87 = ssub.s32 %s11, %s18
    %p88 = scmp.eq.s32.totalorder %s87, 0
    %s90 = sadd.s32 %s89, 1
    %s91 = scalar_select %p88, %s89, %s90
    %p94 = pneg %p88
    %p95 = scmp.eq.s32.totalorder %s11, 1
    %p96 = por %p94, %p95
    %p97 = scmp.ne.s32.totalorder %s89, %s92
    %p98 = scmp.eq.s32.totalorder %s11, 0
    %p99 = por %p97, %p98
    %p100 = scmp.ne.s32.totalorder %s89, %s92
    %p101 = scmp.eq.s32.totalorder %s16, 1
    %p102 = por %p100, %p101
    %p103 = scmp.ne.s32.totalorder %s92, %s93
    %p104 = scmp.eq.s32.totalorder %s16, 0
    %p105 = por %p103, %p104
    %p106 = scmp.ne.s32.totalorder %s92, %s93
    %p107 = scmp.eq.s32.totalorder %s17, 1
    %p108 = por %p106, %p107
    %p110 = scmp.ne.s32.totalorder %s93, %s109
    %p111 = scmp.eq.s32.totalorder %s17, 0
    %p112 = por %p110, %p111
    %s113 = ssub.s32 %s11, %s18
    %p114 = scmp.eq.s32.totalorder %s113, 0
    %s116 = sadd.s32 %s115, 1
    %s117 = scalar_select %p114, %s115, %s116
    %p120 = pneg %p114
    %p121 = scmp.eq.s32.totalorder %s11, 1
    %p122 = por %p120, %p121
    %p123 = scmp.ne.s32.totalorder %s115, %s118
    %p124 = scmp.eq.s32.totalorder %s11, 0
    %p125 = por %p123, %p124
    %p126 = scmp.ne.s32.totalorder %s115, %s118
    %p127 = scmp.eq.s32.totalorder %s16, 1
    %p128 = por %p126, %p127
    %p129 = scmp.ne.s32.totalorder %s118, %s119
    %p130 = scmp.eq.s32.totalorder %s16, 0
    %p131 = por %p129, %p130
    %p132 = scmp.ne.s32.totalorder %s118, %s119
    %p133 = scmp.eq.s32.totalorder %s17, 1
    %p134 = por %p132, %p133
    %p136 = scmp.ne.s32.totalorder %s119, %s135
    %p137 = scmp.eq.s32.totalorder %s17, 0
    %p138 = por %p136, %p137
    %p139 = scmp.le.s32.totalorder 1, %s11
    %p140 = scmp.lt.s32.totalorder %s11, 3
    %p141 = pnand %p139, %p140
    %p142 = pneg %p141
    // Predicated region
    $region9: #{spectrogram.1} parent=5 // pred_check
      _
    $region10: #{spectrogram.1} parent=5 // pred_check_branch
      %144 = sbr.rel (%p141) target = $region12
    $region11: #{spectrogram.1} parent=5 // pred_region
      %s145 = ssub.s32 %s11, 1
      // Predicated region
      $region13: #{spectrogram.1} parent=11 // pred_check
        %p146 = pneg %p58
      $region14: #{spectrogram.1} parent=11 // pred_check_branch
        %148 = sbr.rel (%p146) target = $region16
      $region15: #{spectrogram.1} parent=11 // pred_region
        _
      $region16: #{spectrogram.1} parent=11 // pred_fallthru
        _
      // Predicated region
      $region17: #{spectrogram.1} parent=11 // pred_check
        %p149 = pneg %p79
      $region18: #{spectrogram.1} parent=11 // pred_check_branch
        %151 = sbr.rel (%p149) target = $region20
      $region19: #{spectrogram.1} parent=11 // pred_region
        _
      $region20: #{spectrogram.1} parent=11 // pred_fallthru
        _
    $region12: #{spectrogram.1} parent=5 // pred_fallthru
      _
    %p152 = scmp.lt.s32.totalorder %s11, 2
    // Predicated region
    $region21: #{spectrogram.1} parent=5 // pred_check
      %p153 = pneg %p152
    $region22: #{spectrogram.1} parent=5 // pred_check_branch
      %155 = sbr.rel (%p153) target = $region24
    $region23: #{spectrogram.1} parent=5 // pred_region
      // Predicated region
      $region25: #{spectrogram.1} parent=23 // pred_check
        %p156 = pneg %p31
      $region26: #{spectrogram.1} parent=23 // pred_check_branch
        %158 = sbr.rel (%p156) target = $region28
      $region27: #{spectrogram.1} parent=23 // pred_region
        %s159 = smul.u32 32, %s11
        %p160 = scmp.lt.s32.totalorder %s159, 63
        %s161 = scalar_select %p160, %s159, 63
        %s162 = smul.addr %s161, 2
        %s163 = smul.addr %s162, 8
        %s164 = scalar_lea.vmem %s0, %s163
        %s165 = smul.u32 32, %s11
      $region28: #{spectrogram.1} parent=23 // pred_fallthru
        _
    $region24: #{spectrogram.1} parent=5 // pred_fallthru
      _
    %p166 = scmp.le.s32.totalorder 1, %s11
    %p167 = scmp.lt.s32.totalorder %s11, 3
    %p168 = pnand %p166, %p167
    %p169 = pneg %p168
    // Predicated region
    $region29: #{spectrogram.1} parent=5 // pred_check
      _
    $region30: #{spectrogram.1} parent=5 // pred_check_branch
      %171 = sbr.rel (%p168) target = $region32
    $region31: #{spectrogram.1} parent=5 // pred_region
      %s172 = ssub.s32 %s11, 1
      %s173 = smul.u32 32, %s16
      %p174 = scmp.lt.s32.totalorder %s173, 63
      %s175 = scalar_select %p174, %s173, 63
      %s176 = smul.addr %s175, 2
      %s177 = smul.addr %s176, 8
      %s178 = scalar_lea.vmem %s0, %s177
      %p179 = pneg %p37
      %p180 = pneg %p34
      %p181 = pneg %p58
      %p182 = pneg %p55
      %p183 = pneg %p79
      %p184 = pneg %p76
      %p185 = pneg %p105
      %p186 = pneg %p102
      %s187 = smul.u32 32, %s16
      %p188 = scmp.lt.s32.totalorder %s187, 63
      %s189 = scalar_select %p188, %s187, 63
      %s190 = smul.addr %s189, 2
      %s191 = smul.addr %s190, 8
      %s192 = scalar_lea.vmem %s3, %s191
      %p193 = pneg %p131
      %p194 = pneg %p128
      %s195 = smul.u32 32, %s16
      %p196 = scmp.lt.s32.totalorder %s195, 63
      %s197 = scalar_select %p196, %s195, 63
      %s198 = smul.addr %s197, 2
      %s199 = smul.addr %s198, 8
      %s200 = scalar_lea.vmem %s4, %s199
      %s201 = smul.u32 32, %s16
      %p202 = scmp.lt.s32.totalorder %s201, 63
      %s203 = scalar_select %p202, %s201, 63
      %s204 = smul.addr %s203, 2
      %s205 = smul.addr %s204, 8
      %s206 = scalar_lea.vmem %s0, %s205
      %s207 = smul.u32 32, %s16
      %s208 = smul.u32 32, %s16
      %p209 = scmp.lt.s32.totalorder %s208, 63
      %s210 = scalar_select %p209, %s208, 63
      %s211 = smul.addr %s210, 2
      %s212 = smul.addr %s211, 8
      %s213 = scalar_lea.vmem %s3, %s212
      %s214 = smul.u32 32, %s16
      %s215 = smul.u32 32, %s16
      %p216 = scmp.lt.s32.totalorder %s215, 63
      %s217 = scalar_select %p216, %s215, 63
      %s218 = smul.addr %s217, 2
      %s219 = smul.addr %s218, 8
      %s220 = scalar_lea.vmem %s4, %s219
      %s221 = smul.u32 32, %s16
      %v222 = vld [vmem:[%s206] sm:$0xff]
      %v223 = vld [vmem:[%s206 + $0x8] sm:$0xff]
      %v224 = vld [vmem:[%s206 + $0x10] sm:$0xff]
      %v225 = vld [vmem:[%s206 + $0x18] sm:$0xff]
      %v226 = vld [vmem:[%s206 + $0x20] sm:$0xff]
      %v227 = vld [vmem:[%s206 + $0x28] sm:$0xff]
      %v228 = vld [vmem:[%s206 + $0x30] sm:$0xff]
      %v229 = vld [vmem:[%s206 + $0x38] sm:$0xff]
      %v230 = vld [vmem:[%s206 + $0x40] sm:$0xff]
      %v231 = vld [vmem:[%s206 + $0x48] sm:$0xff]
      %v232 = vld [vmem:[%s206 + $0x50] sm:$0xff]
      %v233 = vld [vmem:[%s206 + $0x58] sm:$0xff]
      %v234 = vld [vmem:[%s206 + $0x60] sm:$0xff]
      %v235 = vld [vmem:[%s206 + $0x68] sm:$0xff]
      %v236 = vld [vmem:[%s206 + $0x70] sm:$0xff]
      %v237 = vld [vmem:[%s206 + $0x78] sm:$0xff]
      %v238 = vld [vmem:[%s206 + $0x80] sm:$0xff]
      %v239 = vld [vmem:[%s206 + $0x88] sm:$0xff]
      %v240 = vld [vmem:[%s206 + $0x90] sm:$0xff]
      %v241 = vld [vmem:[%s206 + $0x98] sm:$0xff]
      %v242 = vld [vmem:[%s206 + $0xa0] sm:$0xff]
      %v243 = vld [vmem:[%s206 + $0xa8] sm:$0xff]
      %v244 = vld [vmem:[%s206 + $0xb0] sm:$0xff]
      %v245 = vld [vmem:[%s206 + $0xb8] sm:$0xff]
      %v246 = vld [vmem:[%s206 + $0xc0] sm:$0xff]
      %v247 = vld [vmem:[%s206 + $0xc8] sm:$0xff]
      %v248 = vld [vmem:[%s206 + $0xd0] sm:$0xff]
      %v249 = vld [vmem:[%s206 + $0xd8] sm:$0xff]
      %v250 = vld [vmem:[%s206 + $0xe0] sm:$0xff]
      %v251 = vld [vmem:[%s206 + $0xe8] sm:$0xff]
      %v252 = vld [vmem:[%s206 + $0xf0] sm:$0xff]
      %v253 = vld [vmem:[%s206 + $0xf8] sm:$0xff]
      %v254 = vld [vmem:[%s206 + $0x100] sm:$0xff]
      %v255 = vld [vmem:[%s206 + $0x108] sm:$0xff]
      %v256 = vld [vmem:[%s206 + $0x110] sm:$0xff]
      %v257 = vld [vmem:[%s206 + $0x118] sm:$0xff]
      %v258 = vld [vmem:[%s206 + $0x120] sm:$0xff]
      %v259 = vld [vmem:[%s206 + $0x128] sm:$0xff]
      %v260 = vld [vmem:[%s206 + $0x130] sm:$0xff]
      %v261 = vld [vmem:[%s206 + $0x138] sm:$0xff]
      %v262 = vld [vmem:[%s206 + $0x140] sm:$0xff]
      %v263 = vld [vmem:[%s206 + $0x148] sm:$0xff]
      %v264 = vld [vmem:[%s206 + $0x150] sm:$0xff]
      %v265 = vld [vmem:[%s206 + $0x158] sm:$0xff]
      %v266 = vld [vmem:[%s206 + $0x160] sm:$0xff]
      %v267 = vld [vmem:[%s206 + $0x168] sm:$0xff]
      %v268 = vld [vmem:[%s206 + $0x170] sm:$0xff]
      %v269 = vld [vmem:[%s206 + $0x178] sm:$0xff]
      %v270 = vld [vmem:[%s206 + $0x180] sm:$0xff]
      %v271 = vld [vmem:[%s206 + $0x188] sm:$0xff]
      %v272 = vld [vmem:[%s206 + $0x190] sm:$0xff]
      %v273 = vld [vmem:[%s206 + $0x198] sm:$0xff]
      %v274 = vld [vmem:[%s206 + $0x1a0] sm:$0xff]
      %v275 = vld [vmem:[%s206 + $0x1a8] sm:$0xff]
      %v276 = vld [vmem:[%s206 + $0x1b0] sm:$0xff]
      %v277 = vld [vmem:[%s206 + $0x1b8] sm:$0xff]
      %v278 = vld [vmem:[%s206 + $0x1c0] sm:$0xff]
      %v279 = vld [vmem:[%s206 + $0x1c8] sm:$0xff]
      %v280 = vld [vmem:[%s206 + $0x1d0] sm:$0xff]
      %v281 = vld [vmem:[%s206 + $0x1d8] sm:$0xff]
      %v282 = vld [vmem:[%s206 + $0x1e0] sm:$0xff]
      %v283 = vld [vmem:[%s206 + $0x1e8] sm:$0xff]
      %v284 = vld [vmem:[%s206 + $0x1f0] sm:$0xff]
      %v285 = vld [vmem:[%s206 + $0x1f8] sm:$0xff]
      %v286 = vpack.c.bf16 %v224, %v222
      %v287 = vpack.c.bf16 %v225, %v223
      %v288 = vpack.c.bf16 %v228, %v226
      %v289 = vpack.c.bf16 %v229, %v227
      %v290 = vpack.c.bf16 %v232, %v230
      %v291 = vpack.c.bf16 %v233, %v231
      %v292 = vpack.c.bf16 %v236, %v234
      %v293 = vpack.c.bf16 %v237, %v235
      %v294 = vpack.c.bf16 %v240, %v238
      %v295 = vpack.c.bf16 %v241, %v239
      %v296 = vpack.c.bf16 %v244, %v242
      %v297 = vpack.c.bf16 %v245, %v243
      %v298 = vpack.c.bf16 %v248, %v246
      %v299 = vpack.c.bf16 %v249, %v247
      %v300 = vpack.c.bf16 %v252, %v250
      %v301 = vpack.c.bf16 %v253, %v251
      %v302 = vpack.c.bf16 %v256, %v254
      %v303 = vpack.c.bf16 %v257, %v255
      %v304 = vpack.c.bf16 %v260, %v258
      %v305 = vpack.c.bf16 %v261, %v259
      %v306 = vpack.c.bf16 %v264, %v262
      %v307 = vpack.c.bf16 %v265, %v263
      %v308 = vpack.c.bf16 %v268, %v266
      %v309 = vpack.c.bf16 %v269, %v267
      %v310 = vpack.c.bf16 %v272, %v270
      %v311 = vpack.c.bf16 %v273, %v271
      %v312 = vpack.c.bf16 %v276, %v274
      %v313 = vpack.c.bf16 %v277, %v275
      %v314 = vpack.c.bf16 %v280, %v278
      %v315 = vpack.c.bf16 %v281, %v279
      %v316 = vpack.c.bf16 %v284, %v282
      %v317 = vpack.c.bf16 %v285, %v283
      %v318 = vunpack.c.l.bf16 %v286
      %v319 = vunpack.c.l.bf16 %v287
      %v320 = vunpack.c.h.bf16 %v286
      %v321 = vunpack.c.h.bf16 %v287
      %v322 = vunpack.c.l.bf16 %v288
      %v323 = vunpack.c.l.bf16 %v289
      %v324 = vunpack.c.h.bf16 %v288
      %v325 = vunpack.c.h.bf16 %v289
      %v326 = vunpack.c.l.bf16 %v290
      %v327 = vunpack.c.l.bf16 %v291
      %v328 = vunpack.c.h.bf16 %v290
      %v329 = vunpack.c.h.bf16 %v291
      %v330 = vunpack.c.l.bf16 %v292
      %v331 = vunpack.c.l.bf16 %v293
      %v332 = vunpack.c.h.bf16 %v292
      %v333 = vunpack.c.h.bf16 %v293
      %v334 = vunpack.c.l.bf16 %v294
      %v335 = vunpack.c.l.bf16 %v295
      %v336 = vunpack.c.h.bf16 %v294
      %v337 = vunpack.c.h.bf16 %v295
      %v338 = vunpack.c.l.bf16 %v296
      %v339 = vunpack.c.l.bf16 %v297
      %v340 = vunpack.c.h.bf16 %v296
      %v341 = vunpack.c.h.bf16 %v297
      %v342 = vunpack.c.l.bf16 %v298
      %v343 = vunpack.c.l.bf16 %v299
      %v344 = vunpack.c.h.bf16 %v298
      %v345 = vunpack.c.h.bf16 %v299
      %v346 = vunpack.c.l.bf16 %v300
      %v347 = vunpack.c.l.bf16 %v301
      %v348 = vunpack.c.h.bf16 %v300
      %v349 = vunpack.c.h.bf16 %v301
      %v350 = vunpack.c.l.bf16 %v302
      %v351 = vunpack.c.l.bf16 %v303
      %v352 = vunpack.c.h.bf16 %v302
      %v353 = vunpack.c.h.bf16 %v303
      %v354 = vunpack.c.l.bf16 %v304
      %v355 = vunpack.c.l.bf16 %v305
      %v356 = vunpack.c.h.bf16 %v304
      %v357 = vunpack.c.h.bf16 %v305
      %v358 = vunpack.c.l.bf16 %v306
      %v359 = vunpack.c.l.bf16 %v307
      %v360 = vunpack.c.h.bf16 %v306
      %v361 = vunpack.c.h.bf16 %v307
      %v362 = vunpack.c.l.bf16 %v308
      %v363 = vunpack.c.l.bf16 %v309
      %v364 = vunpack.c.h.bf16 %v308
      %v365 = vunpack.c.h.bf16 %v309
      %v366 = vunpack.c.l.bf16 %v310
      %v367 = vunpack.c.l.bf16 %v311
      %v368 = vunpack.c.h.bf16 %v310
      %v369 = vunpack.c.h.bf16 %v311
      %v370 = vunpack.c.l.bf16 %v312
      %v371 = vunpack.c.l.bf16 %v313
      %v372 = vunpack.c.h.bf16 %v312
      %v373 = vunpack.c.h.bf16 %v313
      %v374 = vunpack.c.l.bf16 %v314
      %v375 = vunpack.c.l.bf16 %v315
      %v376 = vunpack.c.h.bf16 %v314
      %v377 = vunpack.c.h.bf16 %v315
      %v378 = vunpack.c.l.bf16 %v316
      %v379 = vunpack.c.l.bf16 %v317
      %v380 = vunpack.c.h.bf16 %v316
      %v381 = vunpack.c.h.bf16 %v317
      %v382 = vsub.f32 %v222, %v318
      %v383 = vsub.f32 %v223, %v319
      %v384 = vsub.f32 %v224, %v320
      %v385 = vsub.f32 %v225, %v321
      %v386 = vsub.f32 %v226, %v322
      %v387 = vsub.f32 %v227, %v323
      %v388 = vsub.f32 %v228, %v324
      %v389 = vsub.f32 %v229, %v325
      %v390 = vsub.f32 %v230, %v326
      %v391 = vsub.f32 %v231, %v327
      %v392 = vsub.f32 %v232, %v328
      %v393 = vsub.f32 %v233, %v329
      %v394 = vsub.f32 %v234, %v330
      %v395 = vsub.f32 %v235, %v331
      %v396 = vsub.f32 %v236, %v332
      %v397 = vsub.f32 %v237, %v333
      %v398 = vsub.f32 %v238, %v334
      %v399 = vsub.f32 %v239, %v335
      %v400 = vsub.f32 %v240, %v336
      %v401 = vsub.f32 %v241, %v337
      %v402 = vsub.f32 %v242, %v338
      %v403 = vsub.f32 %v243, %v339
      %v404 = vsub.f32 %v244, %v340
      %v405 = vsub.f32 %v245, %v341
      %v406 = vsub.f32 %v246, %v342
      %v407 = vsub.f32 %v247, %v343
      %v408 = vsub.f32 %v248, %v344
      %v409 = vsub.f32 %v249, %v345
      %v410 = vsub.f32 %v250, %v346
      %v411 = vsub.f32 %v251, %v347
      %v412 = vsub.f32 %v252, %v348
      %v413 = vsub.f32 %v253, %v349
      %v414 = vsub.f32 %v254, %v350
      %v415 = vsub.f32 %v255, %v351
      %v416 = vsub.f32 %v256, %v352
      %v417 = vsub.f32 %v257, %v353
      %v418 = vsub.f32 %v258, %v354
      %v419 = vsub.f32 %v259, %v355
      %v420 = vsub.f32 %v260, %v356
      %v421 = vsub.f32 %v261, %v357
      %v422 = vsub.f32 %v262, %v358
      %v423 = vsub.f32 %v263, %v359
      %v424 = vsub.f32 %v264, %v360
      %v425 = vsub.f32 %v265, %v361
      %v426 = vsub.f32 %v266, %v362
      %v427 = vsub.f32 %v267, %v363
      %v428 = vsub.f32 %v268, %v364
      %v429 = vsub.f32 %v269, %v365
      %v430 = vsub.f32 %v270, %v366
      %v431 = vsub.f32 %v271, %v367
      %v432 = vsub.f32 %v272, %v368
      %v433 = vsub.f32 %v273, %v369
      %v434 = vsub.f32 %v274, %v370
      %v435 = vsub.f32 %v275, %v371
      %v436 = vsub.f32 %v276, %v372
      %v437 = vsub.f32 %v277, %v373
      %v438 = vsub.f32 %v278, %v374
      %v439 = vsub.f32 %v279, %v375
      %v440 = vsub.f32 %v280, %v376
      %v441 = vsub.f32 %v281, %v377
      %v442 = vsub.f32 %v282, %v378
      %v443 = vsub.f32 %v283, %v379
      %v444 = vsub.f32 %v284, %v380
      %v445 = vsub.f32 %v285, %v381
      %v446 = vpack.c.bf16 %v384, %v382
      %v447 = vpack.c.bf16 %v385, %v383
      %v448 = vpack.c.bf16 %v388, %v386
      %v449 = vpack.c.bf16 %v389, %v387
      %v450 = vpack.c.bf16 %v392, %v390
      %v451 = vpack.c.bf16 %v393, %v391
      %v452 = vpack.c.bf16 %v396, %v394
      %v453 = vpack.c.bf16 %v397, %v395
      %v454 = vpack.c.bf16 %v400, %v398
      %v455 = vpack.c.bf16 %v401, %v399
      %v456 = vpack.c.bf16 %v404, %v402
      %v457 = vpack.c.bf16 %v405, %v403
      %v458 = vpack.c.bf16 %v408, %v406
      %v459 = vpack.c.bf16 %v409, %v407
      %v460 = vpack.c.bf16 %v412, %v410
      %v461 = vpack.c.bf16 %v413, %v411
      %v462 = vpack.c.bf16 %v416, %v414
      %v463 = vpack.c.bf16 %v417, %v415
      %v464 = vpack.c.bf16 %v420, %v418
      %v465 = vpack.c.bf16 %v421, %v419
      %v466 = vpack.c.bf16 %v424, %v422
      %v467 = vpack.c.bf16 %v425, %v423
      %v468 = vpack.c.bf16 %v428, %v426
      %v469 = vpack.c.bf16 %v429, %v427
      %v470 = vpack.c.bf16 %v432, %v430
      %v471 = vpack.c.bf16 %v433, %v431
      %v472 = vpack.c.bf16 %v436, %v434
      %v473 = vpack.c.bf16 %v437, %v435
      %v474 = vpack.c.bf16 %v440, %v438
      %v475 = vpack.c.bf16 %v441, %v439
      %v476 = vpack.c.bf16 %v444, %v442
      %v477 = vpack.c.bf16 %v445, %v443
      %v478 = vld [vmem:[%s1] sm:$0xff]
      %v479 = vld [vmem:[%s1 + $0x8] sm:$0xff]
      %v480 = vld [vmem:[%s1 + $0x10] sm:$0xff]
      %v481 = vld [vmem:[%s1 + $0x18] sm:$0xff]
      %v482 = vld [vmem:[%s1 + $0x20] sm:$0xff]
      %v483 = vld [vmem:[%s1 + $0x28] sm:$0xff]
      %v484 = vld [vmem:[%s1 + $0x30] sm:$0xff]
      %v485 = vld [vmem:[%s1 + $0x38] sm:$0xff]
      %v486 = vld [vmem:[%s1 + $0x40] sm:$0xff]
      %v487 = vld [vmem:[%s1 + $0x48] sm:$0xff]
      %v488 = vld [vmem:[%s1 + $0x50] sm:$0xff]
      %v489 = vld [vmem:[%s1 + $0x58] sm:$0xff]
      %v490 = vld [vmem:[%s1 + $0x60] sm:$0xff]
      %v491 = vld [vmem:[%s1 + $0x68] sm:$0xff]
      %v492 = vld [vmem:[%s1 + $0x70] sm:$0xff]
      %v493 = vld [vmem:[%s1 + $0x78] sm:$0xff]
      %v494 = vld [vmem:[%s1 + $0x80] sm:$0xff]
      %v495 = vld [vmem:[%s1 + $0x88] sm:$0xff]
      %v496 = vld [vmem:[%s1 + $0x90] sm:$0xff]
      %v497 = vld [vmem:[%s1 + $0x98] sm:$0xff]
      %v498 = vld [vmem:[%s1 + $0xa0] sm:$0xff]
      %v499 = vld [vmem:[%s1 + $0xa8] sm:$0xff]
      %v500 = vld [vmem:[%s1 + $0xb0] sm:$0xff]
      %v501 = vld [vmem:[%s1 + $0xb8] sm:$0xff]
      %v502 = vld [vmem:[%s1 + $0xc0] sm:$0xff]
      %v503 = vld [vmem:[%s1 + $0xc8] sm:$0xff]
      %v504 = vld [vmem:[%s1 + $0xd0] sm:$0xff]
      %v505 = vld [vmem:[%s1 + $0xd8] sm:$0xff]
      %v506 = vld [vmem:[%s1 + $0xe0] sm:$0xff]
      %v507 = vld [vmem:[%s1 + $0xe8] sm:$0xff]
      %v508 = vld [vmem:[%s1 + $0xf0] sm:$0xff]
      %v509 = vld [vmem:[%s1 + $0xf8] sm:$0xff]
      %v510 = vld [vmem:[%s1 + $0x100] sm:$0xff]
      %v511 = vld [vmem:[%s1 + $0x108] sm:$0xff]
      %v512 = vld [vmem:[%s1 + $0x110] sm:$0xff]
      %v513 = vld [vmem:[%s1 + $0x118] sm:$0xff]
      %v514 = vld [vmem:[%s1 + $0x120] sm:$0xff]
      %v515 = vld [vmem:[%s1 + $0x128] sm:$0xff]
      %v516 = vld [vmem:[%s1 + $0x130] sm:$0xff]
      %v517 = vld [vmem:[%s1 + $0x138] sm:$0xff]
      %v518 = vld [vmem:[%s1 + $0x140] sm:$0xff]
      %v519 = vld [vmem:[%s1 + $0x148] sm:$0xff]
      %v520 = vld [vmem:[%s1 + $0x150] sm:$0xff]
      %v521 = vld [vmem:[%s1 + $0x158] sm:$0xff]
      %v522 = vld [vmem:[%s1 + $0x160] sm:$0xff]
      %v523 = vld [vmem:[%s1 + $0x168] sm:$0xff]
      %v524 = vld [vmem:[%s1 + $0x170] sm:$0xff]
      %v525 = vld [vmem:[%s1 + $0x178] sm:$0xff]
      %v526 = vld [vmem:[%s1 + $0x180] sm:$0xff]
      %v527 = vld [vmem:[%s1 + $0x188] sm:$0xff]
      %v528 = vld [vmem:[%s1 + $0x190] sm:$0xff]
      %v529 = vld [vmem:[%s1 + $0x198] sm:$0xff]
      %v530 = vld [vmem:[%s1 + $0x1a0] sm:$0xff]
      %v531 = vld [vmem:[%s1 + $0x1a8] sm:$0xff]
      %v532 = vld [vmem:[%s1 + $0x1b0] sm:$0xff]
      %v533 = vld [vmem:[%s1 + $0x1b8] sm:$0xff]
      %v534 = vld [vmem:[%s1 + $0x1c0] sm:$0xff]
      %v535 = vld [vmem:[%s1 + $0x1c8] sm:$0xff]
      %v536 = vld [vmem:[%s1 + $0x1d0] sm:$0xff]
      %v537 = vld [vmem:[%s1 + $0x1d8] sm:$0xff]
      %v538 = vld [vmem:[%s1 + $0x1e0] sm:$0xff]
      %v539 = vld [vmem:[%s1 + $0x1e8] sm:$0xff]
      %v540 = vld [vmem:[%s1 + $0x1f0] sm:$0xff]
      %v541 = vld [vmem:[%s1 + $0x1f8] sm:$0xff]
      %v542 = vld [vmem:[%s2] sm:$0xff]
      %v543 = vld [vmem:[%s2 + $0x8] sm:$0xff]
      %v544 = vld [vmem:[%s2 + $0x10] sm:$0xff]
      %v545 = vld [vmem:[%s2 + $0x18] sm:$0xff]
      %v546 = vld [vmem:[%s2 + $0x20] sm:$0xff]
      %v547 = vld [vmem:[%s2 + $0x28] sm:$0xff]
      %v548 = vld [vmem:[%s2 + $0x30] sm:$0xff]
      %v549 = vld [vmem:[%s2 + $0x38] sm:$0xff]
      %v550 = vld [vmem:[%s2 + $0x40] sm:$0xff]
      %v551 = vld [vmem:[%s2 + $0x48] sm:$0xff]
      %v552 = vld [vmem:[%s2 + $0x50] sm:$0xff]
      %v553 = vld [vmem:[%s2 + $0x58] sm:$0xff]
      %v554 = vld [vmem:[%s2 + $0x60] sm:$0xff]
      %v555 = vld [vmem:[%s2 + $0x68] sm:$0xff]
      %v556 = vld [vmem:[%s2 + $0x70] sm:$0xff]
      %v557 = vld [vmem:[%s2 + $0x78] sm:$0xff]
      %v558 = vld [vmem:[%s2 + $0x80] sm:$0xff]
      %v559 = vld [vmem:[%s2 + $0x88] sm:$0xff]
      %v560 = vld [vmem:[%s2 + $0x90] sm:$0xff]
      %v561 = vld [vmem:[%s2 + $0x98] sm:$0xff]
      %v562 = vld [vmem:[%s2 + $0xa0] sm:$0xff]
      %v563 = vld [vmem:[%s2 + $0xa8] sm:$0xff]
      %v564 = vld [vmem:[%s2 + $0xb0] sm:$0xff]
      %v565 = vld [vmem:[%s2 + $0xb8] sm:$0xff]
      %v566 = vld [vmem:[%s2 + $0xc0] sm:$0xff]
      %v567 = vld [vmem:[%s2 + $0xc8] sm:$0xff]
      %v568 = vld [vmem:[%s2 + $0xd0] sm:$0xff]
      %v569 = vld [vmem:[%s2 + $0xd8] sm:$0xff]
      %v570 = vld [vmem:[%s2 + $0xe0] sm:$0xff]
      %v571 = vld [vmem:[%s2 + $0xe8] sm:$0xff]
      %v572 = vld [vmem:[%s2 + $0xf0] sm:$0xff]
      %v573 = vld [vmem:[%s2 + $0xf8] sm:$0xff]
      %v574 = vld [vmem:[%s2 + $0x100] sm:$0xff]
      %v575 = vld [vmem:[%s2 + $0x108] sm:$0xff]
      %v576 = vld [vmem:[%s2 + $0x110] sm:$0xff]
      %v577 = vld [vmem:[%s2 + $0x118] sm:$0xff]
      %v578 = vld [vmem:[%s2 + $0x120] sm:$0xff]
      %v579 = vld [vmem:[%s2 + $0x128] sm:$0xff]
      %v580 = vld [vmem:[%s2 + $0x130] sm:$0xff]
      %v581 = vld [vmem:[%s2 + $0x138] sm:$0xff]
      %v582 = vld [vmem:[%s2 + $0x140] sm:$0xff]
      %v583 = vld [vmem:[%s2 + $0x148] sm:$0xff]
      %v584 = vld [vmem:[%s2 + $0x150] sm:$0xff]
      %v585 = vld [vmem:[%s2 + $0x158] sm:$0xff]
      %v586 = vld [vmem:[%s2 + $0x160] sm:$0xff]
      %v587 = vld [vmem:[%s2 + $0x168] sm:$0xff]
      %v588 = vld [vmem:[%s2 + $0x170] sm:$0xff]
      %v589 = vld [vmem:[%s2 + $0x178] sm:$0xff]
      %v590 = vld [vmem:[%s2 + $0x180] sm:$0xff]
      %v591 = vld [vmem:[%s2 + $0x188] sm:$0xff]
      %v592 = vld [vmem:[%s2 + $0x190] sm:$0xff]
      %v593 = vld [vmem:[%s2 + $0x198] sm:$0xff]
      %v594 = vld [vmem:[%s2 + $0x1a0] sm:$0xff]
      %v595 = vld [vmem:[%s2 + $0x1a8] sm:$0xff]
      %v596 = vld [vmem:[%s2 + $0x1b0] sm:$0xff]
      %v597 = vld [vmem:[%s2 + $0x1b8] sm:$0xff]
      %v598 = vld [vmem:[%s2 + $0x1c0] sm:$0xff]
      %v599 = vld [vmem:[%s2 + $0x1c8] sm:$0xff]
      %v600 = vld [vmem:[%s2 + $0x1d0] sm:$0xff]
      %v601 = vld [vmem:[%s2 + $0x1d8] sm:$0xff]
      %v602 = vld [vmem:[%s2 + $0x1e0] sm:$0xff]
      %v603 = vld [vmem:[%s2 + $0x1e8] sm:$0xff]
      %v604 = vld [vmem:[%s2 + $0x1f0] sm:$0xff]
      %v605 = vld [vmem:[%s2 + $0x1f8] sm:$0xff]
      %v670 = vunpack.c.l.b16 %v478
      %v671 = vunpack.c.h.b16 %v478
      %v672 = vunpack.c.l.b16 %v479
      %v673 = vunpack.c.h.b16 %v479
      %v674 = vunpack.c.l.b16 %v480
      %v675 = vunpack.c.h.b16 %v480
      %v676 = vunpack.c.l.b16 %v481
      %v677 = vunpack.c.h.b16 %v481
      %v678 = vunpack.c.l.b16 %v482
      %v679 = vunpack.c.h.b16 %v482
      %v680 = vunpack.c.l.b16 %v483
      %v681 = vunpack.c.h.b16 %v483
      %v682 = vunpack.c.l.b16 %v484
      %v683 = vunpack.c.h.b16 %v484
      %v684 = vunpack.c.l.b16 %v485
      %v685 = vunpack.c.h.b16 %v485
      %v686 = vunpack.c.l.b16 %v486
      %v687 = vunpack.c.h.b16 %v486
      %v688 = vunpack.c.l.b16 %v487
      %v689 = vunpack.c.h.b16 %v487
      %v690 = vunpack.c.l.b16 %v488
      %v691 = vunpack.c.h.b16 %v488
      %v692 = vunpack.c.l.b16 %v489
      %v693 = vunpack.c.h.b16 %v489
      %v694 = vunpack.c.l.b16 %v490
      %v695 = vunpack.c.h.b16 %v490
      %v696 = vunpack.c.l.b16 %v491
      %v697 = vunpack.c.h.b16 %v491
      %v698 = vunpack.c.l.b16 %v492
      %v699 = vunpack.c.h.b16 %v492
      %v700 = vunpack.c.l.b16 %v493
      %v701 = vunpack.c.h.b16 %v493
      %v702 = vunpack.c.l.b16 %v494
      %v703 = vunpack.c.h.b16 %v494
      %v704 = vunpack.c.l.b16 %v495
      %v705 = vunpack.c.h.b16 %v495
      %v706 = vunpack.c.l.b16 %v496
      %v707 = vunpack.c.h.b16 %v496
      %v708 = vunpack.c.l.b16 %v497
      %v709 = vunpack.c.h.b16 %v497
      %v710 = vunpack.c.l.b16 %v498
      %v711 = vunpack.c.h.b16 %v498
      %v712 = vunpack.c.l.b16 %v499
      %v713 = vunpack.c.h.b16 %v499
      %v714 = vunpack.c.l.b16 %v500
      %v715 = vunpack.c.h.b16 %v500
      %v716 = vunpack.c.l.b16 %v501
      %v717 = vunpack.c.h.b16 %v501
      %v718 = vunpack.c.l.b16 %v502
      %v719 = vunpack.c.h.b16 %v502
      %v720 = vunpack.c.l.b16 %v503
      %v721 = vunpack.c.h.b16 %v503
      %v722 = vunpack.c.l.b16 %v504
      %v723 = vunpack.c.h.b16 %v504
      %v724 = vunpack.c.l.b16 %v505
      %v725 = vunpack.c.h.b16 %v505
      %v726 = vunpack.c.l.b16 %v506
      %v727 = vunpack.c.h.b16 %v506
      %v728 = vunpack.c.l.b16 %v507
      %v729 = vunpack.c.h.b16 %v507
      %v730 = vunpack.c.l.b16 %v508
      %v731 = vunpack.c.h.b16 %v508
      %v732 = vunpack.c.l.b16 %v509
      %v733 = vunpack.c.h.b16 %v509
      %v734 = vunpack.c.l.b16 %v510
      %v735 = vunpack.c.h.b16 %v510
      %v736 = vunpack.c.l.b16 %v511
      %v737 = vunpack.c.h.b16 %v511
      %v738 = vunpack.c.l.b16 %v512
      %v739 = vunpack.c.h.b16 %v512
      %v740 = vunpack.c.l.b16 %v513
      %v741 = vunpack.c.h.b16 %v513
      %v742 = vunpack.c.l.b16 %v514
      %v743 = vunpack.c.h.b16 %v514
      %v744 = vunpack.c.l.b16 %v515
      %v745 = vunpack.c.h.b16 %v515
      %v746 = vunpack.c.l.b16 %v516
      %v747 = vunpack.c.h.b16 %v516
      %v748 = vunpack.c.l.b16 %v517
      %v749 = vunpack.c.h.b16 %v517
      %v750 = vunpack.c.l.b16 %v518
      %v751 = vunpack.c.h.b16 %v518
      %v752 = vunpack.c.l.b16 %v519
      %v753 = vunpack.c.h.b16 %v519
      %v754 = vunpack.c.l.b16 %v520
      %v755 = vunpack.c.h.b16 %v520
      %v756 = vunpack.c.l.b16 %v521
      %v757 = vunpack.c.h.b16 %v521
      %v758 = vunpack.c.l.b16 %v522
      %v759 = vunpack.c.h.b16 %v522
      %v760 = vunpack.c.l.b16 %v523
      %v761 = vunpack.c.h.b16 %v523
      %v762 = vunpack.c.l.b16 %v524
      %v763 = vunpack.c.h.b16 %v524
      %v764 = vunpack.c.l.b16 %v525
      %v765 = vunpack.c.h.b16 %v525
      %v766 = vunpack.c.l.b16 %v526
      %v767 = vunpack.c.h.b16 %v526
      %v768 = vunpack.c.l.b16 %v527
      %v769 = vunpack.c.h.b16 %v527
      %v770 = vunpack.c.l.b16 %v528
      %v771 = vunpack.c.h.b16 %v528
      %v772 = vunpack.c.l.b16 %v529
      %v773 = vunpack.c.h.b16 %v529
      %v774 = vunpack.c.l.b16 %v530
      %v775 = vunpack.c.h.b16 %v530
      %v776 = vunpack.c.l.b16 %v531
      %v777 = vunpack.c.h.b16 %v531
      %v778 = vunpack.c.l.b16 %v532
      %v779 = vunpack.c.h.b16 %v532
      %v780 = vunpack.c.l.b16 %v533
      %v781 = vunpack.c.h.b16 %v533
      %v782 = vunpack.c.l.b16 %v534
      %v783 = vunpack.c.h.b16 %v534
      %v784 = vunpack.c.l.b16 %v535
      %v785 = vunpack.c.h.b16 %v535
      %v786 = vunpack.c.l.b16 %v536
      %v787 = vunpack.c.h.b16 %v536
      %v788 = vunpack.c.l.b16 %v537
      %v789 = vunpack.c.h.b16 %v537
      %v790 = vunpack.c.l.b16 %v538
      %v791 = vunpack.c.h.b16 %v538
      %v792 = vunpack.c.l.b16 %v539
      %v793 = vunpack.c.h.b16 %v539
      %v794 = vunpack.c.l.b16 %v540
      %v795 = vunpack.c.h.b16 %v540
      %v796 = vunpack.c.l.b16 %v541
      %v797 = vunpack.c.h.b16 %v541
      %v798 = vpack.c.b16 %v674, %v670
      %v799 = vpack.c.b16 %v675, %v671
      %v800 = vpack.c.b16 %v676, %v672
      %v801 = vpack.c.b16 %v677, %v673
      %v802 = vpack.c.b16 %v682, %v678
      %v803 = vpack.c.b16 %v683, %v679
      %v804 = vpack.c.b16 %v684, %v680
      %v805 = vpack.c.b16 %v685, %v681
      %v806 = vpack.c.b16 %v690, %v686
      %v807 = vpack.c.b16 %v691, %v687
      %v808 = vpack.c.b16 %v692, %v688
      %v809 = vpack.c.b16 %v693, %v689
      %v810 = vpack.c.b16 %v698, %v694
      %v811 = vpack.c.b16 %v699, %v695
      %v812 = vpack.c.b16 %v700, %v696
      %v813 = vpack.c.b16 %v701, %v697
      %v814 = vpack.c.b16 %v706, %v702
      %v815 = vpack.c.b16 %v707, %v703
      %v816 = vpack.c.b16 %v708, %v704
      %v817 = vpack.c.b16 %v709, %v705
      %v818 = vpack.c.b16 %v714, %v710
      %v819 = vpack.c.b16 %v715, %v711
      %v820 = vpack.c.b16 %v716, %v712
      %v821 = vpack.c.b16 %v717, %v713
      %v822 = vpack.c.b16 %v722, %v718
      %v823 = vpack.c.b16 %v723, %v719
      %v824 = vpack.c.b16 %v724, %v720
      %v825 = vpack.c.b16 %v725, %v721
      %v826 = vpack.c.b16 %v730, %v726
      %v827 = vpack.c.b16 %v731, %v727
      %v828 = vpack.c.b16 %v732, %v728
      %v829 = vpack.c.b16 %v733, %v729
      %v830 = vpack.c.b16 %v738, %v734
      %v831 = vpack.c.b16 %v739, %v735
      %v832 = vpack.c.b16 %v740, %v736
      %v833 = vpack.c.b16 %v741, %v737
      %v834 = vpack.c.b16 %v746, %v742
      %v835 = vpack.c.b16 %v747, %v743
      %v836 = vpack.c.b16 %v748, %v744
      %v837 = vpack.c.b16 %v749, %v745
      %v838 = vpack.c.b16 %v754, %v750
      %v839 = vpack.c.b16 %v755, %v751
      %v840 = vpack.c.b16 %v756, %v752
      %v841 = vpack.c.b16 %v757, %v753
      %v842 = vpack.c.b16 %v762, %v758
      %v843 = vpack.c.b16 %v763, %v759
      %v844 = vpack.c.b16 %v764, %v760
      %v845 = vpack.c.b16 %v765, %v761
      %v846 = vpack.c.b16 %v770, %v766
      %v847 = vpack.c.b16 %v771, %v767
      %v848 = vpack.c.b16 %v772, %v768
      %v849 = vpack.c.b16 %v773, %v769
      %v850 = vpack.c.b16 %v778, %v774
      %v851 = vpack.c.b16 %v779, %v775
      %v852 = vpack.c.b16 %v780, %v776
      %v853 = vpack.c.b16 %v781, %v777
      %v854 = vpack.c.b16 %v786, %v782
      %v855 = vpack.c.b16 %v787, %v783
      %v856 = vpack.c.b16 %v788, %v784
      %v857 = vpack.c.b16 %v789, %v785
      %v858 = vpack.c.b16 %v794, %v790
      %v859 = vpack.c.b16 %v795, %v791
      %v860 = vpack.c.b16 %v796, %v792
      %v861 = vpack.c.b16 %v797, %v793
      %926 = vmatprep.subr.bf16.mxu0 %v827
      %927 = vmatpush1.bf16.msra.mxu0 %v826
      %928 = vmatprep.subr.bf16.mxu0 %v823
      %929 = vmatpush1.bf16.msra.mxu0 %v822
      %930 = vmatprep.subr.bf16.mxu0 %v819
      %931 = vmatpush1.bf16.msra.mxu0 %v818
      %932 = vmatprep.subr.bf16.mxu0 %v815
      %933 = vmatpush1.bf16.msra.mxu0 %v814
      %934 = vmatprep.subr.bf16.mxu0 %v811
      %935 = vmatpush1.bf16.msra.mxu0 %v810
      %936 = vmatprep.subr.bf16.mxu0 %v807
      %937 = vmatpush1.bf16.msra.mxu0 %v806
      %938 = vmatprep.subr.bf16.mxu0 %v803
      %939 = vmatpush1.bf16.msra.mxu0 %v802
      %940 = vmatprep.subr.bf16.mxu0 %v799
      %941 = vmatpush1.bf16.msra.mxu0 %v798
      %942 = vmatprep.subr.bf16.mxu0 %v859
      %943 = vmatpush2.bf16.msra.mxu0 %v858
      %944 = vmatprep.subr.bf16.mxu0 %v855
      %945 = vmatpush2.bf16.msra.mxu0 %v854
      %946 = vmatprep.subr.bf16.mxu0 %v851
      %947 = vmatpush2.bf16.msra.mxu0 %v850
      %948 = vmatprep.subr.bf16.mxu0 %v847
      %949 = vmatpush2.bf16.msra.mxu0 %v846
      %950 = vmatprep.subr.bf16.mxu0 %v843
      %951 = vmatpush2.bf16.msra.mxu0 %v842
      %952 = vmatprep.subr.bf16.mxu0 %v839
      %953 = vmatpush2.bf16.msra.mxu0 %v838
      %954 = vmatprep.subr.bf16.mxu0 %v835
      %955 = vmatpush2.bf16.msra.mxu0 %v834
      %956 = vmatprep.subr.bf16.mxu0 %v831
      %957 = vmatpush2.bf16.msra.mxu0 %v830
      %958 = vmatprep.mubr.bf16.mxu0 %v447
      %959 = vmatmul.mubr.bf16.gmra.mxu0 %v446
      %v960 = vpop.f32.mrf.mxu0
      %v961 = vadd.f32 0.0, %v960
      %v962 = vpop.f32.mrf.mxu0
      %v963 = vadd.f32 0.0, %v962
      %v964 = vpop.f32.mrf.mxu0
      %v965 = vadd.f32 0.0, %v964
      %v966 = vpop.f32.mrf.mxu0
      %v967 = vadd.f32 0.0, %v966
      %968 = vmatprep.mubr.bf16.mxu0 %v449
      %969 = vmatmul.mubr.bf16.gmra.mxu0 %v448
      %v970 = vpop.f32.mrf.mxu0
      %v971 = vadd.f32 0.0, %v970
      %v972 = vpop.f32.mrf.mxu0
      %v973 = vadd.f32 0.0, %v972
      %v974 = vpop.f32.mrf.mxu0
      %v975 = vadd.f32 0.0, %v974
      %v976 = vpop.f32.mrf.mxu0
      %v977 = vadd.f32 0.0, %v976
      %978 = vmatprep.mubr.bf16.mxu0 %v451
      %979 = vmatmul.mubr.bf16.gmra.mxu0 %v450
      %v980 = vpop.f32.mrf.mxu0
      %v981 = vadd.f32 0.0, %v980
      %v982 = vpop.f32.mrf.mxu0
      %v983 = vadd.f32 0.0, %v982
      %v984 = vpop.f32.mrf.mxu0
      %v985 = vadd.f32 0.0, %v984
      %v986 = vpop.f32.mrf.mxu0
      %v987 = vadd.f32 0.0, %v986
      %988 = vmatprep.mubr.bf16.mxu0 %v453
      %989 = vmatmul.mubr.bf16.gmra.mxu0 %v452
      %v990 = vpop.f32.mrf.mxu0
      %v991 = vadd.f32 0.0, %v990
      %v992 = vpop.f32.mrf.mxu0
      %v993 = vadd.f32 0.0, %v992
      %v994 = vpop.f32.mrf.mxu0
      %v995 = vadd.f32 0.0, %v994
      %v996 = vpop.f32.mrf.mxu0
      %v997 = vadd.f32 0.0, %v996
      %998 = vmatprep.mubr.bf16.mxu0 %v455
      %999 = vmatmul.mubr.bf16.gmra.mxu0 %v454
      %v1000 = vpop.f32.mrf.mxu0
      %v1001 = vadd.f32 0.0, %v1000
      %v1002 = vpop.f32.mrf.mxu0
      %v1003 = vadd.f32 0.0, %v1002
      %v1004 = vpop.f32.mrf.mxu0
      %v1005 = vadd.f32 0.0, %v1004
      %v1006 = vpop.f32.mrf.mxu0
      %v1007 = vadd.f32 0.0, %v1006
      %1008 = vmatprep.mubr.bf16.mxu0 %v457
      %1009 = vmatmul.mubr.bf16.gmra.mxu0 %v456
      %v1010 = vpop.f32.mrf.mxu0
      %v1011 = vadd.f32 0.0, %v1010
      %v1012 = vpop.f32.mrf.mxu0
      %v1013 = vadd.f32 0.0, %v1012
      %v1014 = vpop.f32.mrf.mxu0
      %v1015 = vadd.f32 0.0, %v1014
      %v1016 = vpop.f32.mrf.mxu0
      %v1017 = vadd.f32 0.0, %v1016
      %1018 = vmatprep.mubr.bf16.mxu0 %v459
      %1019 = vmatmul.mubr.bf16.gmra.mxu0 %v458
      %v1020 = vpop.f32.mrf.mxu0
      %v1021 = vadd.f32 0.0, %v1020
      %v1022 = vpop.f32.mrf.mxu0
      %v1023 = vadd.f32 0.0, %v1022
      %v1024 = vpop.f32.mrf.mxu0
      %v1025 = vadd.f32 0.0, %v1024
      %v1026 = vpop.f32.mrf.mxu0
      %v1027 = vadd.f32 0.0, %v1026
      %1028 = vmatprep.mubr.bf16.mxu0 %v461
      %1029 = vmatmul.mubr.bf16.gmra.mxu0 %v460
      %v1030 = vpop.f32.mrf.mxu0
      %v1031 = vadd.f32 0.0, %v1030
      %v1032 = vpop.f32.mrf.mxu0
      %v1033 = vadd.f32 0.0, %v1032
      %v1034 = vpop.f32.mrf.mxu0
      %v1035 = vadd.f32 0.0, %v1034
      %v1036 = vpop.f32.mrf.mxu0
      %v1037 = vadd.f32 0.0, %v1036
      %1038 = vmatprep.mubr.bf16.mxu0 %v463
      %1039 = vmatmul.mubr.bf16.gmra.mxu0 %v462
      %v1040 = vpop.f32.mrf.mxu0
      %v1041 = vadd.f32 0.0, %v1040
      %v1042 = vpop.f32.mrf.mxu0
      %v1043 = vadd.f32 0.0, %v1042
      %v1044 = vpop.f32.mrf.mxu0
      %v1045 = vadd.f32 0.0, %v1044
      %v1046 = vpop.f32.mrf.mxu0
      %v1047 = vadd.f32 0.0, %v1046
      %1048 = vmatprep.mubr.bf16.mxu0 %v465
      %1049 = vmatmul.mubr.bf16.gmra.mxu0 %v464
      %v1050 = vpop.f32.mrf.mxu0
      %v1051 = vadd.f32 0.0, %v1050
      %v1052 = vpop.f32.mrf.mxu0
      %v1053 = vadd.f32 0.0, %v1052
      %v1054 = vpop.f32.mrf.mxu0
      %v1055 = vadd.f32 0.0, %v1054
      %v1056 = vpop.f32.mrf.mxu0
      %v1057 = vadd.f32 0.0, %v1056
      %1058 = vmatprep.mubr.bf16.mxu0 %v467
      %1059 = vmatmul.mubr.bf16.gmra.mxu0 %v466
      %v1060 = vpop.f32.mrf.mxu0
      %v1061 = vadd.f32 0.0, %v1060
      %v1062 = vpop.f32.mrf.mxu0
      %v1063 = vadd.f32 0.0, %v1062
      %v1064 = vpop.f32.mrf.mxu0
      %v1065 = vadd.f32 0.0, %v1064
      %v1066 = vpop.f32.mrf.mxu0
      %v1067 = vadd.f32 0.0, %v1066
      %1068 = vmatprep.mubr.bf16.mxu0 %v469
      %1069 = vmatmul.mubr.bf16.gmra.mxu0 %v468
      %v1070 = vpop.f32.mrf.mxu0
      %v1071 = vadd.f32 0.0, %v1070
      %v1072 = vpop.f32.mrf.mxu0
      %v1073 = vadd.f32 0.0, %v1072
      %v1074 = vpop.f32.mrf.mxu0
      %v1075 = vadd.f32 0.0, %v1074
      %v1076 = vpop.f32.mrf.mxu0
      %v1077 = vadd.f32 0.0, %v1076
      %1078 = vmatprep.mubr.bf16.mxu0 %v471
      %1079 = vmatmul.mubr.bf16.gmra.mxu0 %v470
      %v1080 = vpop.f32.mrf.mxu0
      %v1081 = vadd.f32 0.0, %v1080
      %v1082 = vpop.f32.mrf.mxu0
      %v1083 = vadd.f32 0.0, %v1082
      %v1084 = vpop.f32.mrf.mxu0
      %v1085 = vadd.f32 0.0, %v1084
      %v1086 = vpop.f32.mrf.mxu0
      %v1087 = vadd.f32 0.0, %v1086
      %1088 = vmatprep.mubr.bf16.mxu0 %v473
      %1089 = vmatmul.mubr.bf16.gmra.mxu0 %v472
      %v1090 = vpop.f32.mrf.mxu0
      %v1091 = vadd.f32 0.0, %v1090
      %v1092 = vpop.f32.mrf.mxu0
      %v1093 = vadd.f32 0.0, %v1092
      %v1094 = vpop.f32.mrf.mxu0
      %v1095 = vadd.f32 0.0, %v1094
      %v1096 = vpop.f32.mrf.mxu0
      %v1097 = vadd.f32 0.0, %v1096
      %1098 = vmatprep.mubr.bf16.mxu0 %v475
      %1099 = vmatmul.mubr.bf16.gmra.mxu0 %v474
      %v1100 = vpop.f32.mrf.mxu0
      %v1101 = vadd.f32 0.0, %v1100
      %v1102 = vpop.f32.mrf.mxu0
      %v1103 = vadd.f32 0.0, %v1102
      %v1104 = vpop.f32.mrf.mxu0
      %v1105 = vadd.f32 0.0, %v1104
      %v1106 = vpop.f32.mrf.mxu0
      %v1107 = vadd.f32 0.0, %v1106
      %1108 = vmatprep.mubr.bf16.mxu0 %v477
      %1109 = vmatmul.mubr.bf16.gmra.mxu0 %v476
      %v1110 = vpop.f32.mrf.mxu0
      %v1111 = vadd.f32 0.0, %v1110
      %v1112 = vpop.f32.mrf.mxu0
      %v1113 = vadd.f32 0.0, %v1112
      %v1114 = vpop.f32.mrf.mxu0
      %v1115 = vadd.f32 0.0, %v1114
      %v1116 = vpop.f32.mrf.mxu0
      %v1117 = vadd.f32 0.0, %v1116
      %1118 = vdwg.mxu0
      %1119 = vmatprep.subr.bf16.mxu0 %v829
      %1120 = vmatpush1.bf16.msra.mxu0 %v828
      %1121 = vmatprep.subr.bf16.mxu0 %v825
      %1122 = vmatpush1.bf16.msra.mxu0 %v824
      %1123 = vmatprep.subr.bf16.mxu0 %v821
      %1124 = vmatpush1.bf16.msra.mxu0 %v820
      %1125 = vmatprep.subr.bf16.mxu0 %v817
      %1126 = vmatpush1.bf16.msra.mxu0 %v816
      %1127 = vmatprep.subr.bf16.mxu0 %v813
      %1128 = vmatpush1.bf16.msra.mxu0 %v812
      %1129 = vmatprep.subr.bf16.mxu0 %v809
      %1130 = vmatpush1.bf16.msra.mxu0 %v808
      %1131 = vmatprep.subr.bf16.mxu0 %v805
      %1132 = vmatpush1.bf16.msra.mxu0 %v804
      %1133 = vmatprep.subr.bf16.mxu0 %v801
      %1134 = vmatpush1.bf16.msra.mxu0 %v800
      %1135 = vmatprep.subr.bf16.mxu0 %v861
      %1136 = vmatpush2.bf16.msra.mxu0 %v860
      %1137 = vmatprep.subr.bf16.mxu0 %v857
      %1138 = vmatpush2.bf16.msra.mxu0 %v856
      %1139 = vmatprep.subr.bf16.mxu0 %v853
      %1140 = vmatpush2.bf16.msra.mxu0 %v852
      %1141 = vmatprep.subr.bf16.mxu0 %v849
      %1142 = vmatpush2.bf16.msra.mxu0 %v848
      %1143 = vmatprep.subr.bf16.mxu0 %v845
      %1144 = vmatpush2.bf16.msra.mxu0 %v844
      %1145 = vmatprep.subr.bf16.mxu0 %v841
      %1146 = vmatpush2.bf16.msra.mxu0 %v840
      %1147 = vmatprep.subr.bf16.mxu0 %v837
      %1148 = vmatpush2.bf16.msra.mxu0 %v836
      %1149 = vmatprep.subr.bf16.mxu0 %v833
      %1150 = vmatpush2.bf16.msra.mxu0 %v832
      %1151 = vmatprep.mubr.bf16.mxu0 %v447
      %1152 = vmatmul.mubr.bf16.gmra.mxu0 %v446
      %v1153 = vpop.f32.mrf.mxu0
      %v1154 = vadd.f32 0.0, %v1153
      %v1155 = vpop.f32.mrf.mxu0
      %v1156 = vadd.f32 0.0, %v1155
      %v1157 = vpop.f32.mrf.mxu0
      %v1158 = vadd.f32 0.0, %v1157
      %v1159 = vpop.f32.mrf.mxu0
      %v1160 = vadd.f32 0.0, %v1159
      %1161 = vmatprep.mubr.bf16.mxu0 %v449
      %1162 = vmatmul.mubr.bf16.gmra.mxu0 %v448
      %v1163 = vpop.f32.mrf.mxu0
      %v1164 = vadd.f32 0.0, %v1163
      %v1165 = vpop.f32.mrf.mxu0
      %v1166 = vadd.f32 0.0, %v1165
      %v1167 = vpop.f32.mrf.mxu0
      %v1168 = vadd.f32 0.0, %v1167
      %v1169 = vpop.f32.mrf.mxu0
      %v1170 = vadd.f32 0.0, %v1169
      %1171 = vmatprep.mubr.bf16.mxu0 %v451
      %1172 = vmatmul.mubr.bf16.gmra.mxu0 %v450
      %v1173 = vpop.f32.mrf.mxu0
      %v1174 = vadd.f32 0.0, %v1173
      %v1175 = vpop.f32.mrf.mxu0
      %v1176 = vadd.f32 0.0, %v1175
      %v1177 = vpop.f32.mrf.mxu0
      %v1178 = vadd.f32 0.0, %v1177
      %v1179 = vpop.f32.mrf.mxu0
      %v1180 = vadd.f32 0.0, %v1179
      %1181 = vmatprep.mubr.bf16.mxu0 %v453
      %1182 = vmatmul.mubr.bf16.gmra.mxu0 %v452
      %v1183 = vpop.f32.mrf.mxu0
      %v1184 = vadd.f32 0.0, %v1183
      %v1185 = vpop.f32.mrf.mxu0
      %v1186 = vadd.f32 0.0, %v1185
      %v1187 = vpop.f32.mrf.mxu0
      %v1188 = vadd.f32 0.0, %v1187
      %v1189 = vpop.f32.mrf.mxu0
      %v1190 = vadd.f32 0.0, %v1189
      %1191 = vmatprep.mubr.bf16.mxu0 %v455
      %1192 = vmatmul.mubr.bf16.gmra.mxu0 %v454
      %v1193 = vpop.f32.mrf.mxu0
      %v1194 = vadd.f32 0.0, %v1193
      %v1195 = vpop.f32.mrf.mxu0
      %v1196 = vadd.f32 0.0, %v1195
      %v1197 = vpop.f32.mrf.mxu0
      %v1198 = vadd.f32 0.0, %v1197
      %v1199 = vpop.f32.mrf.mxu0
      %v1200 = vadd.f32 0.0, %v1199
      %1201 = vmatprep.mubr.bf16.mxu0 %v457
      %1202 = vmatmul.mubr.bf16.gmra.mxu0 %v456
      %v1203 = vpop.f32.mrf.mxu0
      %v1204 = vadd.f32 0.0, %v1203
      %v1205 = vpop.f32.mrf.mxu0
      %v1206 = vadd.f32 0.0, %v1205
      %v1207 = vpop.f32.mrf.mxu0
      %v1208 = vadd.f32 0.0, %v1207
      %v1209 = vpop.f32.mrf.mxu0
      %v1210 = vadd.f32 0.0, %v1209
      %1211 = vmatprep.mubr.bf16.mxu0 %v459
      %1212 = vmatmul.mubr.bf16.gmra.mxu0 %v458
      %v1213 = vpop.f32.mrf.mxu0
      %v1214 = vadd.f32 0.0, %v1213
      %v1215 = vpop.f32.mrf.mxu0
      %v1216 = vadd.f32 0.0, %v1215
      %v1217 = vpop.f32.mrf.mxu0
      %v1218 = vadd.f32 0.0, %v1217
      %v1219 = vpop.f32.mrf.mxu0
      %v1220 = vadd.f32 0.0, %v1219
      %1221 = vmatprep.mubr.bf16.mxu0 %v461
      %1222 = vmatmul.mubr.bf16.gmra.mxu0 %v460
      %v1223 = vpop.f32.mrf.mxu0
      %v1224 = vadd.f32 0.0, %v1223
      %v1225 = vpop.f32.mrf.mxu0
      %v1226 = vadd.f32 0.0, %v1225
      %v1227 = vpop.f32.mrf.mxu0
      %v1228 = vadd.f32 0.0, %v1227
      %v1229 = vpop.f32.mrf.mxu0
      %v1230 = vadd.f32 0.0, %v1229
      %1231 = vmatprep.mubr.bf16.mxu0 %v463
      %1232 = vmatmul.mubr.bf16.gmra.mxu0 %v462
      %v1233 = vpop.f32.mrf.mxu0
      %v1234 = vadd.f32 0.0, %v1233
      %v1235 = vpop.f32.mrf.mxu0
      %v1236 = vadd.f32 0.0, %v1235
      %v1237 = vpop.f32.mrf.mxu0
      %v1238 = vadd.f32 0.0, %v1237
      %v1239 = vpop.f32.mrf.mxu0
      %v1240 = vadd.f32 0.0, %v1239
      %1241 = vmatprep.mubr.bf16.mxu0 %v465
      %1242 = vmatmul.mubr.bf16.gmra.mxu0 %v464
      %v1243 = vpop.f32.mrf.mxu0
      %v1244 = vadd.f32 0.0, %v1243
      %v1245 = vpop.f32.mrf.mxu0
      %v1246 = vadd.f32 0.0, %v1245
      %v1247 = vpop.f32.mrf.mxu0
      %v1248 = vadd.f32 0.0, %v1247
      %v1249 = vpop.f32.mrf.mxu0
      %v1250 = vadd.f32 0.0, %v1249
      %1251 = vmatprep.mubr.bf16.mxu0 %v467
      %1252 = vmatmul.mubr.bf16.gmra.mxu0 %v466
      %v1253 = vpop.f32.mrf.mxu0
      %v1254 = vadd.f32 0.0, %v1253
      %v1255 = vpop.f32.mrf.mxu0
      %v1256 = vadd.f32 0.0, %v1255
      %v1257 = vpop.f32.mrf.mxu0
      %v1258 = vadd.f32 0.0, %v1257
      %v1259 = vpop.f32.mrf.mxu0
      %v1260 = vadd.f32 0.0, %v1259
      %1261 = vmatprep.mubr.bf16.mxu0 %v469
      %1262 = vmatmul.mubr.bf16.gmra.mxu0 %v468
      %v1263 = vpop.f32.mrf.mxu0
      %v1264 = vadd.f32 0.0, %v1263
      %v1265 = vpop.f32.mrf.mxu0
      %v1266 = vadd.f32 0.0, %v1265
      %v1267 = vpop.f32.mrf.mxu0
      %v1268 = vadd.f32 0.0, %v1267
      %v1269 = vpop.f32.mrf.mxu0
      %v1270 = vadd.f32 0.0, %v1269
      %1271 = vmatprep.mubr.bf16.mxu0 %v471
      %1272 = vmatmul.mubr.bf16.gmra.mxu0 %v470
      %v1273 = vpop.f32.mrf.mxu0
      %v1274 = vadd.f32 0.0, %v1273
      %v1275 = vpop.f32.mrf.mxu0
      %v1276 = vadd.f32 0.0, %v1275
      %v1277 = vpop.f32.mrf.mxu0
      %v1278 = vadd.f32 0.0, %v1277
      %v1279 = vpop.f32.mrf.mxu0
      %v1280 = vadd.f32 0.0, %v1279
      %1281 = vmatprep.mubr.bf16.mxu0 %v473
      %1282 = vmatmul.mubr.bf16.gmra.mxu0 %v472
      %v1283 = vpop.f32.mrf.mxu0
      %v1284 = vadd.f32 0.0, %v1283
      %v1285 = vpop.f32.mrf.mxu0
      %v1286 = vadd.f32 0.0, %v1285
      %v1287 = vpop.f32.mrf.mxu0
      %v1288 = vadd.f32 0.0, %v1287
      %v1289 = vpop.f32.mrf.mxu0
      %v1290 = vadd.f32 0.0, %v1289
      %1291 = vmatprep.mubr.bf16.mxu0 %v475
      %1292 = vmatmul.mubr.bf16.gmra.mxu0 %v474
      %v1293 = vpop.f32.mrf.mxu0
      %v1294 = vadd.f32 0.0, %v1293
      %v1295 = vpop.f32.mrf.mxu0
      %v1296 = vadd.f32 0.0, %v1295
      %v1297 = vpop.f32.mrf.mxu0
      %v1298 = vadd.f32 0.0, %v1297
      %v1299 = vpop.f32.mrf.mxu0
      %v1300 = vadd.f32 0.0, %v1299
      %1301 = vmatprep.mubr.bf16.mxu0 %v477
      %1302 = vmatmul.mubr.bf16.gmra.mxu0 %v476
      %v1303 = vpop.f32.mrf.mxu0
      %v1304 = vadd.f32 0.0, %v1303
      %v1305 = vpop.f32.mrf.mxu0
      %v1306 = vadd.f32 0.0, %v1305
      %v1307 = vpop.f32.mrf.mxu0
      %v1308 = vadd.f32 0.0, %v1307
      %v1309 = vpop.f32.mrf.mxu0
      %v1310 = vadd.f32 0.0, %v1309
      %1311 = vdwg.mxu0
      %1312 = vmatprep.subr.bf16.mxu0 %v827
      %1313 = vmatpush1.bf16.msra.mxu0 %v826
      %1314 = vmatprep.subr.bf16.mxu0 %v823
      %1315 = vmatpush1.bf16.msra.mxu0 %v822
      %1316 = vmatprep.subr.bf16.mxu0 %v819
      %1317 = vmatpush1.bf16.msra.mxu0 %v818
      %1318 = vmatprep.subr.bf16.mxu0 %v815
      %1319 = vmatpush1.bf16.msra.mxu0 %v814
      %1320 = vmatprep.subr.bf16.mxu0 %v811
      %1321 = vmatpush1.bf16.msra.mxu0 %v810
      %1322 = vmatprep.subr.bf16.mxu0 %v807
      %1323 = vmatpush1.bf16.msra.mxu0 %v806
      %1324 = vmatprep.subr.bf16.mxu0 %v803
      %1325 = vmatpush1.bf16.msra.mxu0 %v802
      %1326 = vmatprep.subr.bf16.mxu0 %v799
      %1327 = vmatpush1.bf16.msra.mxu0 %v798
      %1328 = vmatprep.subr.bf16.mxu0 %v859
      %1329 = vmatpush2.bf16.msra.mxu0 %v858
      %1330 = vmatprep.subr.bf16.mxu0 %v855
      %1331 = vmatpush2.bf16.msra.mxu0 %v854
      %1332 = vmatprep.subr.bf16.mxu0 %v851
      %1333 = vmatpush2.bf16.msra.mxu0 %v850
      %1334 = vmatprep.subr.bf16.mxu0 %v847
      %1335 = vmatpush2.bf16.msra.mxu0 %v846
      %1336 = vmatprep.subr.bf16.mxu0 %v843
      %1337 = vmatpush2.bf16.msra.mxu0 %v842
      %1338 = vmatprep.subr.bf16.mxu0 %v839
      %1339 = vmatpush2.bf16.msra.mxu0 %v838
      %1340 = vmatprep.subr.bf16.mxu0 %v835
      %1341 = vmatpush2.bf16.msra.mxu0 %v834
      %1342 = vmatprep.subr.bf16.mxu0 %v831
      %1343 = vmatpush2.bf16.msra.mxu0 %v830
      %1344 = vmatprep.mubr.bf16.mxu0 %v287
      %1345 = vmatmul.mubr.bf16.gmra.mxu0 %v286
      %v1346 = vpop.f32.mrf.mxu0
      %v1347 = vadd.f32 %v961, %v1346
      %v1348 = vpop.f32.mrf.mxu0
      %v1349 = vadd.f32 %v963, %v1348
      %v1350 = vpop.f32.mrf.mxu0
      %v1351 = vadd.f32 %v965, %v1350
      %v1352 = vpop.f32.mrf.mxu0
      %v1353 = vadd.f32 %v967, %v1352
      %1354 = vmatprep.mubr.bf16.mxu0 %v289
      %1355 = vmatmul.mubr.bf16.gmra.mxu0 %v288
      %v1356 = vpop.f32.mrf.mxu0
      %v1357 = vadd.f32 %v971, %v1356
      %v1358 = vpop.f32.mrf.mxu0
      %v1359 = vadd.f32 %v973, %v1358
      %v1360 = vpop.f32.mrf.mxu0
      %v1361 = vadd.f32 %v975, %v1360
      %v1362 = vpop.f32.mrf.mxu0
      %v1363 = vadd.f32 %v977, %v1362
      %1364 = vmatprep.mubr.bf16.mxu0 %v291
      %1365 = vmatmul.mubr.bf16.gmra.mxu0 %v290
      %v1366 = vpop.f32.mrf.mxu0
      %v1367 = vadd.f32 %v981, %v1366
      %v1368 = vpop.f32.mrf.mxu0
      %v1369 = vadd.f32 %v983, %v1368
      %v1370 = vpop.f32.mrf.mxu0
      %v1371 = vadd.f32 %v985, %v1370
      %v1372 = vpop.f32.mrf.mxu0
      %v1373 = vadd.f32 %v987, %v1372
      %1374 = vmatprep.mubr.bf16.mxu0 %v293
      %1375 = vmatmul.mubr.bf16.gmra.mxu0 %v292
      %v1376 = vpop.f32.mrf.mxu0
      %v1377 = vadd.f32 %v991, %v1376
      %v1378 = vpop.f32.mrf.mxu0
      %v1379 = vadd.f32 %v993, %v1378
      %v1380 = vpop.f32.mrf.mxu0
      %v1381 = vadd.f32 %v995, %v1380
      %v1382 = vpop.f32.mrf.mxu0
      %v1383 = vadd.f32 %v997, %v1382
      %1384 = vmatprep.mubr.bf16.mxu0 %v295
      %1385 = vmatmul.mubr.bf16.gmra.mxu0 %v294
      %v1386 = vpop.f32.mrf.mxu0
      %v1387 = vadd.f32 %v1001, %v1386
      %v1388 = vpop.f32.mrf.mxu0
      %v1389 = vadd.f32 %v1003, %v1388
      %v1390 = vpop.f32.mrf.mxu0
      %v1391 = vadd.f32 %v1005, %v1390
      %v1392 = vpop.f32.mrf.mxu0
      %v1393 = vadd.f32 %v1007, %v1392
      %1394 = vmatprep.mubr.bf16.mxu0 %v297
      %1395 = vmatmul.mubr.bf16.gmra.mxu0 %v296
      %v1396 = vpop.f32.mrf.mxu0
      %v1397 = vadd.f32 %v1011, %v1396
      %v1398 = vpop.f32.mrf.mxu0
      %v1399 = vadd.f32 %v1013, %v1398
      %v1400 = vpop.f32.mrf.mxu0
      %v1401 = vadd.f32 %v1015, %v1400
      %v1402 = vpop.f32.mrf.mxu0
      %v1403 = vadd.f32 %v1017, %v1402
      %1404 = vmatprep.mubr.bf16.mxu0 %v299
      %1405 = vmatmul.mubr.bf16.gmra.mxu0 %v298
      %v1406 = vpop.f32.mrf.mxu0
      %v1407 = vadd.f32 %v1021, %v1406
      %v1408 = vpop.f32.mrf.mxu0
      %v1409 = vadd.f32 %v1023, %v1408
      %v1410 = vpop.f32.mrf.mxu0
      %v1411 = vadd.f32 %v1025, %v1410
      %v1412 = vpop.f32.mrf.mxu0
      %v1413 = vadd.f32 %v1027, %v1412
      %1414 = vmatprep.mubr.bf16.mxu0 %v301
      %1415 = vmatmul.mubr.bf16.gmra.mxu0 %v300
      %v1416 = vpop.f32.mrf.mxu0
      %v1417 = vadd.f32 %v1031, %v1416
      %v1418 = vpop.f32.mrf.mxu0
      %v1419 = vadd.f32 %v1033, %v1418
      %v1420 = vpop.f32.mrf.mxu0
      %v1421 = vadd.f32 %v1035, %v1420
      %v1422 = vpop.f32.mrf.mxu0
      %v1423 = vadd.f32 %v1037, %v1422
      %1424 = vmatprep.mubr.bf16.mxu0 %v303
      %1425 = vmatmul.mubr.bf16.gmra.mxu0 %v302
      %v1426 = vpop.f32.mrf.mxu0
      %v1427 = vadd.f32 %v1041, %v1426
      %v1428 = vpop.f32.mrf.mxu0
      %v1429 = vadd.f32 %v1043, %v1428
      %v1430 = vpop.f32.mrf.mxu0
      %v1431 = vadd.f32 %v1045, %v1430
      %v1432 = vpop.f32.mrf.mxu0
      %v1433 = vadd.f32 %v1047, %v1432
      %1434 = vmatprep.mubr.bf16.mxu0 %v305
      %1435 = vmatmul.mubr.bf16.gmra.mxu0 %v304
      %v1436 = vpop.f32.mrf.mxu0
      %v1437 = vadd.f32 %v1051, %v1436
      %v1438 = vpop.f32.mrf.mxu0
      %v1439 = vadd.f32 %v1053, %v1438
      %v1440 = vpop.f32.mrf.mxu0
      %v1441 = vadd.f32 %v1055, %v1440
      %v1442 = vpop.f32.mrf.mxu0
      %v1443 = vadd.f32 %v1057, %v1442
      %1444 = vmatprep.mubr.bf16.mxu0 %v307
      %1445 = vmatmul.mubr.bf16.gmra.mxu0 %v306
      %v1446 = vpop.f32.mrf.mxu0
      %v1447 = vadd.f32 %v1061, %v1446
      %v1448 = vpop.f32.mrf.mxu0
      %v1449 = vadd.f32 %v1063, %v1448
      %v1450 = vpop.f32.mrf.mxu0
      %v1451 = vadd.f32 %v1065, %v1450
      %v1452 = vpop.f32.mrf.mxu0
      %v1453 = vadd.f32 %v1067, %v1452
      %1454 = vmatprep.mubr.bf16.mxu0 %v309
      %1455 = vmatmul.mubr.bf16.gmra.mxu0 %v308
      %v1456 = vpop.f32.mrf.mxu0
      %v1457 = vadd.f32 %v1071, %v1456
      %v1458 = vpop.f32.mrf.mxu0
      %v1459 = vadd.f32 %v1073, %v1458
      %v1460 = vpop.f32.mrf.mxu0
      %v1461 = vadd.f32 %v1075, %v1460
      %v1462 = vpop.f32.mrf.mxu0
      %v1463 = vadd.f32 %v1077, %v1462
      %1464 = vmatprep.mubr.bf16.mxu0 %v311
      %1465 = vmatmul.mubr.bf16.gmra.mxu0 %v310
      %v1466 = vpop.f32.mrf.mxu0
      %v1467 = vadd.f32 %v1081, %v1466
      %v1468 = vpop.f32.mrf.mxu0
      %v1469 = vadd.f32 %v1083, %v1468
      %v1470 = vpop.f32.mrf.mxu0
      %v1471 = vadd.f32 %v1085, %v1470
      %v1472 = vpop.f32.mrf.mxu0
      %v1473 = vadd.f32 %v1087, %v1472
      %1474 = vmatprep.mubr.bf16.mxu0 %v313
      %1475 = vmatmul.mubr.bf16.gmra.mxu0 %v312
      %v1476 = vpop.f32.mrf.mxu0
      %v1477 = vadd.f32 %v1091, %v1476
      %v1478 = vpop.f32.mrf.mxu0
      %v1479 = vadd.f32 %v1093, %v1478
      %v1480 = vpop.f32.mrf.mxu0
      %v1481 = vadd.f32 %v1095, %v1480
      %v1482 = vpop.f32.mrf.mxu0
      %v1483 = vadd.f32 %v1097, %v1482
      %1484 = vmatprep.mubr.bf16.mxu0 %v315
      %1485 = vmatmul.mubr.bf16.gmra.mxu0 %v314
      %v1486 = vpop.f32.mrf.mxu0
      %v1487 = vadd.f32 %v1101, %v1486
      %v1488 = vpop.f32.mrf.mxu0
      %v1489 = vadd.f32 %v1103, %v1488
      %v1490 = vpop.f32.mrf.mxu0
      %v1491 = vadd.f32 %v1105, %v1490
      %v1492 = vpop.f32.mrf.mxu0
      %v1493 = vadd.f32 %v1107, %v1492
      %1494 = vmatprep.mubr.bf16.mxu0 %v317
      %1495 = vmatmul.mubr.bf16.gmra.mxu0 %v316
      %v1496 = vpop.f32.mrf.mxu0
      %v1497 = vadd.f32 %v1111, %v1496
      %v1498 = vpop.f32.mrf.mxu0
      %v1499 = vadd.f32 %v1113, %v1498
      %v1500 = vpop.f32.mrf.mxu0
      %v1501 = vadd.f32 %v1115, %v1500
      %v1502 = vpop.f32.mrf.mxu0
      %v1503 = vadd.f32 %v1117, %v1502
      %1504 = vdwg.mxu0
      %1505 = vmatprep.subr.bf16.mxu0 %v829
      %1506 = vmatpush1.bf16.msra.mxu0 %v828
      %1507 = vmatprep.subr.bf16.mxu0 %v825
      %1508 = vmatpush1.bf16.msra.mxu0 %v824
      %1509 = vmatprep.subr.bf16.mxu0 %v821
      %1510 = vmatpush1.bf16.msra.mxu0 %v820
      %1511 = vmatprep.subr.bf16.mxu0 %v817
      %1512 = vmatpush1.bf16.msra.mxu0 %v816
      %1513 = vmatprep.subr.bf16.mxu0 %v813
      %1514 = vmatpush1.bf16.msra.mxu0 %v812
      %1515 = vmatprep.subr.bf16.mxu0 %v809
      %1516 = vmatpush1.bf16.msra.mxu0 %v808
      %1517 = vmatprep.subr.bf16.mxu0 %v805
      %1518 = vmatpush1.bf16.msra.mxu0 %v804
      %1519 = vmatprep.subr.bf16.mxu0 %v801
      %1520 = vmatpush1.bf16.msra.mxu0 %v800
      %1521 = vmatprep.subr.bf16.mxu0 %v861
      %1522 = vmatpush2.bf16.msra.mxu0 %v860
      %1523 = vmatprep.subr.bf16.mxu0 %v857
      %1524 = vmatpush2.bf16.msra.mxu0 %v856
      %1525 = vmatprep.subr.bf16.mxu0 %v853
      %1526 = vmatpush2.bf16.msra.mxu0 %v852
      %1527 = vmatprep.subr.bf16.mxu0 %v849
      %1528 = vmatpush2.bf16.msra.mxu0 %v848
      %1529 = vmatprep.subr.bf16.mxu0 %v845
      %1530 = vmatpush2.bf16.msra.mxu0 %v844
      %1531 = vmatprep.subr.bf16.mxu0 %v841
      %1532 = vmatpush2.bf16.msra.mxu0 %v840
      %1533 = vmatprep.subr.bf16.mxu0 %v837
      %1534 = vmatpush2.bf16.msra.mxu0 %v836
      %1535 = vmatprep.subr.bf16.mxu0 %v833
      %1536 = vmatpush2.bf16.msra.mxu0 %v832
      %1537 = vmatprep.mubr.bf16.mxu0 %v287
      %1538 = vmatmul.mubr.bf16.gmra.mxu0 %v286
      %v1539 = vpop.f32.mrf.mxu0
      %v1540 = vadd.f32 %v1154, %v1539
      %v1541 = vpop.f32.mrf.mxu0
      %v1542 = vadd.f32 %v1156, %v1541
      %v1543 = vpop.f32.mrf.mxu0
      %v1544 = vadd.f32 %v1158, %v1543
      %v1545 = vpop.f32.mrf.mxu0
      %v1546 = vadd.f32 %v1160, %v1545
      %1547 = vmatprep.mubr.bf16.mxu0 %v289
      %1548 = vmatmul.mubr.bf16.gmra.mxu0 %v288
      %v1549 = vpop.f32.mrf.mxu0
      %v1550 = vadd.f32 %v1164, %v1549
      %v1551 = vpop.f32.mrf.mxu0
      %v1552 = vadd.f32 %v1166, %v1551
      %v1553 = vpop.f32.mrf.mxu0
      %v1554 = vadd.f32 %v1168, %v1553
      %v1555 = vpop.f32.mrf.mxu0
      %v1556 = vadd.f32 %v1170, %v1555
      %1557 = vmatprep.mubr.bf16.mxu0 %v291
      %1558 = vmatmul.mubr.bf16.gmra.mxu0 %v290
      %v1559 = vpop.f32.mrf.mxu0
      %v1560 = vadd.f32 %v1174, %v1559
      %v1561 = vpop.f32.mrf.mxu0
      %v1562 = vadd.f32 %v1176, %v1561
      %v1563 = vpop.f32.mrf.mxu0
      %v1564 = vadd.f32 %v1178, %v1563
      %v1565 = vpop.f32.mrf.mxu0
      %v1566 = vadd.f32 %v1180, %v1565
      %1567 = vmatprep.mubr.bf16.mxu0 %v293
      %1568 = vmatmul.mubr.bf16.gmra.mxu0 %v292
      %v1569 = vpop.f32.mrf.mxu0
      %v1570 = vadd.f32 %v1184, %v1569
      %v1571 = vpop.f32.mrf.mxu0
      %v1572 = vadd.f32 %v1186, %v1571
      %v1573 = vpop.f32.mrf.mxu0
      %v1574 = vadd.f32 %v1188, %v1573
      %v1575 = vpop.f32.mrf.mxu0
      %v1576 = vadd.f32 %v1190, %v1575
      %1577 = vmatprep.mubr.bf16.mxu0 %v295
      %1578 = vmatmul.mubr.bf16.gmra.mxu0 %v294
      %v1579 = vpop.f32.mrf.mxu0
      %v1580 = vadd.f32 %v1194, %v1579
      %v1581 = vpop.f32.mrf.mxu0
      %v1582 = vadd.f32 %v1196, %v1581
      %v1583 = vpop.f32.mrf.mxu0
      %v1584 = vadd.f32 %v1198, %v1583
      %v1585 = vpop.f32.mrf.mxu0
      %v1586 = vadd.f32 %v1200, %v1585
      %1587 = vmatprep.mubr.bf16.mxu0 %v297
      %1588 = vmatmul.mubr.bf16.gmra.mxu0 %v296
      %v1589 = vpop.f32.mrf.mxu0
      %v1590 = vadd.f32 %v1204, %v1589
      %v1591 = vpop.f32.mrf.mxu0
      %v1592 = vadd.f32 %v1206, %v1591
      %v1593 = vpop.f32.mrf.mxu0
      %v1594 = vadd.f32 %v1208, %v1593
      %v1595 = vpop.f32.mrf.mxu0
      %v1596 = vadd.f32 %v1210, %v1595
      %1597 = vmatprep.mubr.bf16.mxu0 %v299
      %1598 = vmatmul.mubr.bf16.gmra.mxu0 %v298
      %v1599 = vpop.f32.mrf.mxu0
      %v1600 = vadd.f32 %v1214, %v1599
      %v1601 = vpop.f32.mrf.mxu0
      %v1602 = vadd.f32 %v1216, %v1601
      %v1603 = vpop.f32.mrf.mxu0
      %v1604 = vadd.f32 %v1218, %v1603
      %v1605 = vpop.f32.mrf.mxu0
      %v1606 = vadd.f32 %v1220, %v1605
      %1607 = vmatprep.mubr.bf16.mxu0 %v301
      %1608 = vmatmul.mubr.bf16.gmra.mxu0 %v300
      %v1609 = vpop.f32.mrf.mxu0
      %v1610 = vadd.f32 %v1224, %v1609
      %v1611 = vpop.f32.mrf.mxu0
      %v1612 = vadd.f32 %v1226, %v1611
      %v1613 = vpop.f32.mrf.mxu0
      %v1614 = vadd.f32 %v1228, %v1613
      %v1615 = vpop.f32.mrf.mxu0
      %v1616 = vadd.f32 %v1230, %v1615
      %1617 = vmatprep.mubr.bf16.mxu0 %v303
      %1618 = vmatmul.mubr.bf16.gmra.mxu0 %v302
      %v1619 = vpop.f32.mrf.mxu0
      %v1620 = vadd.f32 %v1234, %v1619
      %v1621 = vpop.f32.mrf.mxu0
      %v1622 = vadd.f32 %v1236, %v1621
      %v1623 = vpop.f32.mrf.mxu0
      %v1624 = vadd.f32 %v1238, %v1623
      %v1625 = vpop.f32.mrf.mxu0
      %v1626 = vadd.f32 %v1240, %v1625
      %1627 = vmatprep.mubr.bf16.mxu0 %v305
      %1628 = vmatmul.mubr.bf16.gmra.mxu0 %v304
      %v1629 = vpop.f32.mrf.mxu0
      %v1630 = vadd.f32 %v1244, %v1629
      %v1631 = vpop.f32.mrf.mxu0
      %v1632 = vadd.f32 %v1246, %v1631
      %v1633 = vpop.f32.mrf.mxu0
      %v1634 = vadd.f32 %v1248, %v1633
      %v1635 = vpop.f32.mrf.mxu0
      %v1636 = vadd.f32 %v1250, %v1635
      %1637 = vmatprep.mubr.bf16.mxu0 %v307
      %1638 = vmatmul.mubr.bf16.gmra.mxu0 %v306
      %v1639 = vpop.f32.mrf.mxu0
      %v1640 = vadd.f32 %v1254, %v1639
      %v1641 = vpop.f32.mrf.mxu0
      %v1642 = vadd.f32 %v1256, %v1641
      %v1643 = vpop.f32.mrf.mxu0
      %v1644 = vadd.f32 %v1258, %v1643
      %v1645 = vpop.f32.mrf.mxu0
      %v1646 = vadd.f32 %v1260, %v1645
      %1647 = vmatprep.mubr.bf16.mxu0 %v309
      %1648 = vmatmul.mubr.bf16.gmra.mxu0 %v308
      %v1649 = vpop.f32.mrf.mxu0
      %v1650 = vadd.f32 %v1264, %v1649
      %v1651 = vpop.f32.mrf.mxu0
      %v1652 = vadd.f32 %v1266, %v1651
      %v1653 = vpop.f32.mrf.mxu0
      %v1654 = vadd.f32 %v1268, %v1653
      %v1655 = vpop.f32.mrf.mxu0
      %v1656 = vadd.f32 %v1270, %v1655
      %1657 = vmatprep.mubr.bf16.mxu0 %v311
      %1658 = vmatmul.mubr.bf16.gmra.mxu0 %v310
      %v1659 = vpop.f32.mrf.mxu0
      %v1660 = vadd.f32 %v1274, %v1659
      %v1661 = vpop.f32.mrf.mxu0
      %v1662 = vadd.f32 %v1276, %v1661
      %v1663 = vpop.f32.mrf.mxu0
      %v1664 = vadd.f32 %v1278, %v1663
      %v1665 = vpop.f32.mrf.mxu0
      %v1666 = vadd.f32 %v1280, %v1665
      %1667 = vmatprep.mubr.bf16.mxu0 %v313
      %1668 = vmatmul.mubr.bf16.gmra.mxu0 %v312
      %v1669 = vpop.f32.mrf.mxu0
      %v1670 = vadd.f32 %v1284, %v1669
      %v1671 = vpop.f32.mrf.mxu0
      %v1672 = vadd.f32 %v1286, %v1671
      %v1673 = vpop.f32.mrf.mxu0
      %v1674 = vadd.f32 %v1288, %v1673
      %v1675 = vpop.f32.mrf.mxu0
      %v1676 = vadd.f32 %v1290, %v1675
      %1677 = vmatprep.mubr.bf16.mxu0 %v315
      %1678 = vmatmul.mubr.bf16.gmra.mxu0 %v314
      %v1679 = vpop.f32.mrf.mxu0
      %v1680 = vadd.f32 %v1294, %v1679
      %v1681 = vpop.f32.mrf.mxu0
      %v1682 = vadd.f32 %v1296, %v1681
      %v1683 = vpop.f32.mrf.mxu0
      %v1684 = vadd.f32 %v1298, %v1683
      %v1685 = vpop.f32.mrf.mxu0
      %v1686 = vadd.f32 %v1300, %v1685
      %1687 = vmatprep.mubr.bf16.mxu0 %v317
      %1688 = vmatmul.mubr.bf16.gmra.mxu0 %v316
      %v1689 = vpop.f32.mrf.mxu0
      %v1690 = vadd.f32 %v1304, %v1689
      %v1691 = vpop.f32.mrf.mxu0
      %v1692 = vadd.f32 %v1306, %v1691
      %v1693 = vpop.f32.mrf.mxu0
      %v1694 = vadd.f32 %v1308, %v1693
      %v1695 = vpop.f32.mrf.mxu0
      %v1696 = vadd.f32 %v1310, %v1695
      %1697 = vdwg.mxu0
      %v1762 = vunpack.c.l.b16 %v542
      %v1763 = vunpack.c.h.b16 %v542
      %v1764 = vunpack.c.l.b16 %v543
      %v1765 = vunpack.c.h.b16 %v543
      %v1766 = vunpack.c.l.b16 %v544
      %v1767 = vunpack.c.h.b16 %v544
      %v1768 = vunpack.c.l.b16 %v545
      %v1769 = vunpack.c.h.b16 %v545
      %v1770 = vunpack.c.l.b16 %v546
      %v1771 = vunpack.c.h.b16 %v546
      %v1772 = vunpack.c.l.b16 %v547
      %v1773 = vunpack.c.h.b16 %v547
      %v1774 = vunpack.c.l.b16 %v548
      %v1775 = vunpack.c.h.b16 %v548
      %v1776 = vunpack.c.l.b16 %v549
      %v1777 = vunpack.c.h.b16 %v549
      %v1778 = vunpack.c.l.b16 %v550
      %v1779 = vunpack.c.h.b16 %v550
      %v1780 = vunpack.c.l.b16 %v551
      %v1781 = vunpack.c.h.b16 %v551
      %v1782 = vunpack.c.l.b16 %v552
      %v1783 = vunpack.c.h.b16 %v552
      %v1784 = vunpack.c.l.b16 %v553
      %v1785 = vunpack.c.h.b16 %v553
      %v1786 = vunpack.c.l.b16 %v554
      %v1787 = vunpack.c.h.b16 %v554
      %v1788 = vunpack.c.l.b16 %v555
      %v1789 = vunpack.c.h.b16 %v555
      %v1790 = vunpack.c.l.b16 %v556
      %v1791 = vunpack.c.h.b16 %v556
      %v1792 = vunpack.c.l.b16 %v557
      %v1793 = vunpack.c.h.b16 %v557
      %v1794 = vunpack.c.l.b16 %v558
      %v1795 = vunpack.c.h.b16 %v558
      %v1796 = vunpack.c.l.b16 %v559
      %v1797 = vunpack.c.h.b16 %v559
      %v1798 = vunpack.c.l.b16 %v560
      %v1799 = vunpack.c.h.b16 %v560
      %v1800 = vunpack.c.l.b16 %v561
      %v1801 = vunpack.c.h.b16 %v561
      %v1802 = vunpack.c.l.b16 %v562
      %v1803 = vunpack.c.h.b16 %v562
      %v1804 = vunpack.c.l.b16 %v563
      %v1805 = vunpack.c.h.b16 %v563
      %v1806 = vunpack.c.l.b16 %v564
      %v1807 = vunpack.c.h.b16 %v564
      %v1808 = vunpack.c.l.b16 %v565
      %v1809 = vunpack.c.h.b16 %v565
      %v1810 = vunpack.c.l.b16 %v566
      %v1811 = vunpack.c.h.b16 %v566
      %v1812 = vunpack.c.l.b16 %v567
      %v1813 = vunpack.c.h.b16 %v567
      %v1814 = vunpack.c.l.b16 %v568
      %v1815 = vunpack.c.h.b16 %v568
      %v1816 = vunpack.c.l.b16 %v569
      %v1817 = vunpack.c.h.b16 %v569
      %v1818 = vunpack.c.l.b16 %v570
      %v1819 = vunpack.c.h.b16 %v570
      %v1820 = vunpack.c.l.b16 %v571
      %v1821 = vunpack.c.h.b16 %v571
      %v1822 = vunpack.c.l.b16 %v572
      %v1823 = vunpack.c.h.b16 %v572
      %v1824 = vunpack.c.l.b16 %v573
      %v1825 = vunpack.c.h.b16 %v573
      %v1826 = vunpack.c.l.b16 %v574
      %v1827 = vunpack.c.h.b16 %v574
      %v1828 = vunpack.c.l.b16 %v575
      %v1829 = vunpack.c.h.b16 %v575
      %v1830 = vunpack.c.l.b16 %v576
      %v1831 = vunpack.c.h.b16 %v576
      %v1832 = vunpack.c.l.b16 %v577
      %v1833 = vunpack.c.h.b16 %v577
      %v1834 = vunpack.c.l.b16 %v578
      %v1835 = vunpack.c.h.b16 %v578
      %v1836 = vunpack.c.l.b16 %v579
      %v1837 = vunpack.c.h.b16 %v579
      %v1838 = vunpack.c.l.b16 %v580
      %v1839 = vunpack.c.h.b16 %v580
      %v1840 = vunpack.c.l.b16 %v581
      %v1841 = vunpack.c.h.b16 %v581
      %v1842 = vunpack.c.l.b16 %v582
      %v1843 = vunpack.c.h.b16 %v582
      %v1844 = vunpack.c.l.b16 %v583
      %v1845 = vunpack.c.h.b16 %v583
      %v1846 = vunpack.c.l.b16 %v584
      %v1847 = vunpack.c.h.b16 %v584
      %v1848 = vunpack.c.l.b16 %v585
      %v1849 = vunpack.c.h.b16 %v585
      %v1850 = vunpack.c.l.b16 %v586
      %v1851 = vunpack.c.h.b16 %v586
      %v1852 = vunpack.c.l.b16 %v587
      %v1853 = vunpack.c.h.b16 %v587
      %v1854 = vunpack.c.l.b16 %v588
      %v1855 = vunpack.c.h.b16 %v588
      %v1856 = vunpack.c.l.b16 %v589
      %v1857 = vunpack.c.h.b16 %v589
      %v1858 = vunpack.c.l.b16 %v590
      %v1859 = vunpack.c.h.b16 %v590
      %v1860 = vunpack.c.l.b16 %v591
      %v1861 = vunpack.c.h.b16 %v591
      %v1862 = vunpack.c.l.b16 %v592
      %v1863 = vunpack.c.h.b16 %v592
      %v1864 = vunpack.c.l.b16 %v593
      %v1865 = vunpack.c.h.b16 %v593
      %v1866 = vunpack.c.l.b16 %v594
      %v1867 = vunpack.c.h.b16 %v594
      %v1868 = vunpack.c.l.b16 %v595
      %v1869 = vunpack.c.h.b16 %v595
      %v1870 = vunpack.c.l.b16 %v596
      %v1871 = vunpack.c.h.b16 %v596
      %v1872 = vunpack.c.l.b16 %v597
      %v1873 = vunpack.c.h.b16 %v597
      %v1874 = vunpack.c.l.b16 %v598
      %v1875 = vunpack.c.h.b16 %v598
      %v1876 = vunpack.c.l.b16 %v599
      %v1877 = vunpack.c.h.b16 %v599
      %v1878 = vunpack.c.l.b16 %v600
      %v1879 = vunpack.c.h.b16 %v600
      %v1880 = vunpack.c.l.b16 %v601
      %v1881 = vunpack.c.h.b16 %v601
      %v1882 = vunpack.c.l.b16 %v602
      %v1883 = vunpack.c.h.b16 %v602
      %v1884 = vunpack.c.l.b16 %v603
      %v1885 = vunpack.c.h.b16 %v603
      %v1886 = vunpack.c.l.b16 %v604
      %v1887 = vunpack.c.h.b16 %v604
      %v1888 = vunpack.c.l.b16 %v605
      %v1889 = vunpack.c.h.b16 %v605
      %v1890 = vpack.c.b16 %v1766, %v1762
      %v1891 = vpack.c.b16 %v1767, %v1763
      %v1892 = vpack.c.b16 %v1768, %v1764
      %v1893 = vpack.c.b16 %v1769, %v1765
      %v1894 = vpack.c.b16 %v1774, %v1770
      %v1895 = vpack.c.b16 %v1775, %v1771
      %v1896 = vpack.c.b16 %v1776, %v1772
      %v1897 = vpack.c.b16 %v1777, %v1773
      %v1898 = vpack.c.b16 %v1782, %v1778
      %v1899 = vpack.c.b16 %v1783, %v1779
      %v1900 = vpack.c.b16 %v1784, %v1780
      %v1901 = vpack.c.b16 %v1785, %v1781
      %v1902 = vpack.c.b16 %v1790, %v1786
      %v1903 = vpack.c.b16 %v1791, %v1787
      %v1904 = vpack.c.b16 %v1792, %v1788
      %v1905 = vpack.c.b16 %v1793, %v1789
      %v1906 = vpack.c.b16 %v1798, %v1794
      %v1907 = vpack.c.b16 %v1799, %v1795
      %v1908 = vpack.c.b16 %v1800, %v1796
      %v1909 = vpack.c.b16 %v1801, %v1797
      %v1910 = vpack.c.b16 %v1806, %v1802
      %v1911 = vpack.c.b16 %v1807, %v1803
      %v1912 = vpack.c.b16 %v1808, %v1804
      %v1913 = vpack.c.b16 %v1809, %v1805
      %v1914 = vpack.c.b16 %v1814, %v1810
      %v1915 = vpack.c.b16 %v1815, %v1811
      %v1916 = vpack.c.b16 %v1816, %v1812
      %v1917 = vpack.c.b16 %v1817, %v1813
      %v1918 = vpack.c.b16 %v1822, %v1818
      %v1919 = vpack.c.b16 %v1823, %v1819
      %v1920 = vpack.c.b16 %v1824, %v1820
      %v1921 = vpack.c.b16 %v1825, %v1821
      %v1922 = vpack.c.b16 %v1830, %v1826
      %v1923 = vpack.c.b16 %v1831, %v1827
      %v1924 = vpack.c.b16 %v1832, %v1828
      %v1925 = vpack.c.b16 %v1833, %v1829
      %v1926 = vpack.c.b16 %v1838, %v1834
      %v1927 = vpack.c.b16 %v1839, %v1835
      %v1928 = vpack.c.b16 %v1840, %v1836
      %v1929 = vpack.c.b16 %v1841, %v1837
      %v1930 = vpack.c.b16 %v1846, %v1842
      %v1931 = vpack.c.b16 %v1847, %v1843
      %v1932 = vpack.c.b16 %v1848, %v1844
      %v1933 = vpack.c.b16 %v1849, %v1845
      %v1934 = vpack.c.b16 %v1854, %v1850
      %v1935 = vpack.c.b16 %v1855, %v1851
      %v1936 = vpack.c.b16 %v1856, %v1852
      %v1937 = vpack.c.b16 %v1857, %v1853
      %v1938 = vpack.c.b16 %v1862, %v1858
      %v1939 = vpack.c.b16 %v1863, %v1859
      %v1940 = vpack.c.b16 %v1864, %v1860
      %v1941 = vpack.c.b16 %v1865, %v1861
      %v1942 = vpack.c.b16 %v1870, %v1866
      %v1943 = vpack.c.b16 %v1871, %v1867
      %v1944 = vpack.c.b16 %v1872, %v1868
      %v1945 = vpack.c.b16 %v1873, %v1869
      %v1946 = vpack.c.b16 %v1878, %v1874
      %v1947 = vpack.c.b16 %v1879, %v1875
      %v1948 = vpack.c.b16 %v1880, %v1876
      %v1949 = vpack.c.b16 %v1881, %v1877
      %v1950 = vpack.c.b16 %v1886, %v1882
      %v1951 = vpack.c.b16 %v1887, %v1883
      %v1952 = vpack.c.b16 %v1888, %v1884
      %v1953 = vpack.c.b16 %v1889, %v1885
      %2018 = vmatprep.subr.bf16.mxu0 %v1919
      %2019 = vmatpush1.bf16.msra.mxu0 %v1918
      %2020 = vmatprep.subr.bf16.mxu0 %v1915
      %2021 = vmatpush1.bf16.msra.mxu0 %v1914
      %2022 = vmatprep.subr.bf16.mxu0 %v1911
      %2023 = vmatpush1.bf16.msra.mxu0 %v1910
      %2024 = vmatprep.subr.bf16.mxu0 %v1907
      %2025 = vmatpush1.bf16.msra.mxu0 %v1906
      %2026 = vmatprep.subr.bf16.mxu0 %v1903
      %2027 = vmatpush1.bf16.msra.mxu0 %v1902
      %2028 = vmatprep.subr.bf16.mxu0 %v1899
      %2029 = vmatpush1.bf16.msra.mxu0 %v1898
      %2030 = vmatprep.subr.bf16.mxu0 %v1895
      %2031 = vmatpush1.bf16.msra.mxu0 %v1894
      %2032 = vmatprep.subr.bf16.mxu0 %v1891
      %2033 = vmatpush1.bf16.msra.mxu0 %v1890
      %2034 = vmatprep.subr.bf16.mxu0 %v1951
      %2035 = vmatpush2.bf16.msra.mxu0 %v1950
      %2036 = vmatprep.subr.bf16.mxu0 %v1947
      %2037 = vmatpush2.bf16.msra.mxu0 %v1946
      %2038 = vmatprep.subr.bf16.mxu0 %v1943
      %2039 = vmatpush2.bf16.msra.mxu0 %v1942
      %2040 = vmatprep.subr.bf16.mxu0 %v1939
      %2041 = vmatpush2.bf16.msra.mxu0 %v1938
      %2042 = vmatprep.subr.bf16.mxu0 %v1935
      %2043 = vmatpush2.bf16.msra.mxu0 %v1934
      %2044 = vmatprep.subr.bf16.mxu0 %v1931
      %2045 = vmatpush2.bf16.msra.mxu0 %v1930
      %2046 = vmatprep.subr.bf16.mxu0 %v1927
      %2047 = vmatpush2.bf16.msra.mxu0 %v1926
      %2048 = vmatprep.subr.bf16.mxu0 %v1923
      %2049 = vmatpush2.bf16.msra.mxu0 %v1922
      %2050 = vmatprep.mubr.bf16.mxu0 %v287
      %2051 = vmatmul.mubr.bf16.gmra.mxu0 %v286
      %v2052 = vpop.f32.mrf.mxu0
      %v2053 = vadd.f32 0.0, %v2052
      %v2054 = vpop.f32.mrf.mxu0
      %v2055 = vadd.f32 0.0, %v2054
      %v2056 = vpop.f32.mrf.mxu0
      %v2057 = vadd.f32 0.0, %v2056
      %v2058 = vpop.f32.mrf.mxu0
      %v2059 = vadd.f32 0.0, %v2058
      %2060 = vmatprep.mubr.bf16.mxu0 %v289
      %2061 = vmatmul.mubr.bf16.gmra.mxu0 %v288
      %v2062 = vpop.f32.mrf.mxu0
      %v2063 = vadd.f32 0.0, %v2062
      %v2064 = vpop.f32.mrf.mxu0
      %v2065 = vadd.f32 0.0, %v2064
      %v2066 = vpop.f32.mrf.mxu0
      %v2067 = vadd.f32 0.0, %v2066
      %v2068 = vpop.f32.mrf.mxu0
      %v2069 = vadd.f32 0.0, %v2068
      %2070 = vmatprep.mubr.bf16.mxu0 %v291
      %2071 = vmatmul.mubr.bf16.gmra.mxu0 %v290
      %v2072 = vpop.f32.mrf.mxu0
      %v2073 = vadd.f32 0.0, %v2072
      %v2074 = vpop.f32.mrf.mxu0
      %v2075 = vadd.f32 0.0, %v2074
      %v2076 = vpop.f32.mrf.mxu0
      %v2077 = vadd.f32 0.0, %v2076
      %v2078 = vpop.f32.mrf.mxu0
      %v2079 = vadd.f32 0.0, %v2078
      %2080 = vmatprep.mubr.bf16.mxu0 %v293
      %2081 = vmatmul.mubr.bf16.gmra.mxu0 %v292
      %v2082 = vpop.f32.mrf.mxu0
      %v2083 = vadd.f32 0.0, %v2082
      %v2084 = vpop.f32.mrf.mxu0
      %v2085 = vadd.f32 0.0, %v2084
      %v2086 = vpop.f32.mrf.mxu0
      %v2087 = vadd.f32 0.0, %v2086
      %v2088 = vpop.f32.mrf.mxu0
      %v2089 = vadd.f32 0.0, %v2088
      %2090 = vmatprep.mubr.bf16.mxu0 %v295
      %2091 = vmatmul.mubr.bf16.gmra.mxu0 %v294
      %v2092 = vpop.f32.mrf.mxu0
      %v2093 = vadd.f32 0.0, %v2092
      %v2094 = vpop.f32.mrf.mxu0
      %v2095 = vadd.f32 0.0, %v2094
      %v2096 = vpop.f32.mrf.mxu0
      %v2097 = vadd.f32 0.0, %v2096
      %v2098 = vpop.f32.mrf.mxu0
      %v2099 = vadd.f32 0.0, %v2098
      %2100 = vmatprep.mubr.bf16.mxu0 %v297
      %2101 = vmatmul.mubr.bf16.gmra.mxu0 %v296
      %v2102 = vpop.f32.mrf.mxu0
      %v2103 = vadd.f32 0.0, %v2102
      %v2104 = vpop.f32.mrf.mxu0
      %v2105 = vadd.f32 0.0, %v2104
      %v2106 = vpop.f32.mrf.mxu0
      %v2107 = vadd.f32 0.0, %v2106
      %v2108 = vpop.f32.mrf.mxu0
      %v2109 = vadd.f32 0.0, %v2108
      %2110 = vmatprep.mubr.bf16.mxu0 %v299
      %2111 = vmatmul.mubr.bf16.gmra.mxu0 %v298
      %v2112 = vpop.f32.mrf.mxu0
      %v2113 = vadd.f32 0.0, %v2112
      %v2114 = vpop.f32.mrf.mxu0
      %v2115 = vadd.f32 0.0, %v2114
      %v2116 = vpop.f32.mrf.mxu0
      %v2117 = vadd.f32 0.0, %v2116
      %v2118 = vpop.f32.mrf.mxu0
      %v2119 = vadd.f32 0.0, %v2118
      %2120 = vmatprep.mubr.bf16.mxu0 %v301
      %2121 = vmatmul.mubr.bf16.gmra.mxu0 %v300
      %v2122 = vpop.f32.mrf.mxu0
      %v2123 = vadd.f32 0.0, %v2122
      %v2124 = vpop.f32.mrf.mxu0
      %v2125 = vadd.f32 0.0, %v2124
      %v2126 = vpop.f32.mrf.mxu0
      %v2127 = vadd.f32 0.0, %v2126
      %v2128 = vpop.f32.mrf.mxu0
      %v2129 = vadd.f32 0.0, %v2128
      %2130 = vmatprep.mubr.bf16.mxu0 %v303
      %2131 = vmatmul.mubr.bf16.gmra.mxu0 %v302
      %v2132 = vpop.f32.mrf.mxu0
      %v2133 = vadd.f32 0.0, %v2132
      %v2134 = vpop.f32.mrf.mxu0
      %v2135 = vadd.f32 0.0, %v2134
      %v2136 = vpop.f32.mrf.mxu0
      %v2137 = vadd.f32 0.0, %v2136
      %v2138 = vpop.f32.mrf.mxu0
      %v2139 = vadd.f32 0.0, %v2138
      %2140 = vmatprep.mubr.bf16.mxu0 %v305
      %2141 = vmatmul.mubr.bf16.gmra.mxu0 %v304
      %v2142 = vpop.f32.mrf.mxu0
      %v2143 = vadd.f32 0.0, %v2142
      %v2144 = vpop.f32.mrf.mxu0
      %v2145 = vadd.f32 0.0, %v2144
      %v2146 = vpop.f32.mrf.mxu0
      %v2147 = vadd.f32 0.0, %v2146
      %v2148 = vpop.f32.mrf.mxu0
      %v2149 = vadd.f32 0.0, %v2148
      %2150 = vmatprep.mubr.bf16.mxu0 %v307
      %2151 = vmatmul.mubr.bf16.gmra.mxu0 %v306
      %v2152 = vpop.f32.mrf.mxu0
      %v2153 = vadd.f32 0.0, %v2152
      %v2154 = vpop.f32.mrf.mxu0
      %v2155 = vadd.f32 0.0, %v2154
      %v2156 = vpop.f32.mrf.mxu0
      %v2157 = vadd.f32 0.0, %v2156
      %v2158 = vpop.f32.mrf.mxu0
      %v2159 = vadd.f32 0.0, %v2158
      %2160 = vmatprep.mubr.bf16.mxu0 %v309
      %2161 = vmatmul.mubr.bf16.gmra.mxu0 %v308
      %v2162 = vpop.f32.mrf.mxu0
      %v2163 = vadd.f32 0.0, %v2162
      %v2164 = vpop.f32.mrf.mxu0
      %v2165 = vadd.f32 0.0, %v2164
      %v2166 = vpop.f32.mrf.mxu0
      %v2167 = vadd.f32 0.0, %v2166
      %v2168 = vpop.f32.mrf.mxu0
      %v2169 = vadd.f32 0.0, %v2168
      %2170 = vmatprep.mubr.bf16.mxu0 %v311
      %2171 = vmatmul.mubr.bf16.gmra.mxu0 %v310
      %v2172 = vpop.f32.mrf.mxu0
      %v2173 = vadd.f32 0.0, %v2172
      %v2174 = vpop.f32.mrf.mxu0
      %v2175 = vadd.f32 0.0, %v2174
      %v2176 = vpop.f32.mrf.mxu0
      %v2177 = vadd.f32 0.0, %v2176
      %v2178 = vpop.f32.mrf.mxu0
      %v2179 = vadd.f32 0.0, %v2178
      %2180 = vmatprep.mubr.bf16.mxu0 %v313
      %2181 = vmatmul.mubr.bf16.gmra.mxu0 %v312
      %v2182 = vpop.f32.mrf.mxu0
      %v2183 = vadd.f32 0.0, %v2182
      %v2184 = vpop.f32.mrf.mxu0
      %v2185 = vadd.f32 0.0, %v2184
      %v2186 = vpop.f32.mrf.mxu0
      %v2187 = vadd.f32 0.0, %v2186
      %v2188 = vpop.f32.mrf.mxu0
      %v2189 = vadd.f32 0.0, %v2188
      %2190 = vmatprep.mubr.bf16.mxu0 %v315
      %2191 = vmatmul.mubr.bf16.gmra.mxu0 %v314
      %v2192 = vpop.f32.mrf.mxu0
      %v2193 = vadd.f32 0.0, %v2192
      %v2194 = vpop.f32.mrf.mxu0
      %v2195 = vadd.f32 0.0, %v2194
      %v2196 = vpop.f32.mrf.mxu0
      %v2197 = vadd.f32 0.0, %v2196
      %v2198 = vpop.f32.mrf.mxu0
      %v2199 = vadd.f32 0.0, %v2198
      %2200 = vmatprep.mubr.bf16.mxu0 %v317
      %2201 = vmatmul.mubr.bf16.gmra.mxu0 %v316
      %v2202 = vpop.f32.mrf.mxu0
      %v2203 = vadd.f32 0.0, %v2202
      %v2204 = vpop.f32.mrf.mxu0
      %v2205 = vadd.f32 0.0, %v2204
      %v2206 = vpop.f32.mrf.mxu0
      %v2207 = vadd.f32 0.0, %v2206
      %v2208 = vpop.f32.mrf.mxu0
      %v2209 = vadd.f32 0.0, %v2208
      %2210 = vdwg.mxu0
      %2211 = vmatprep.subr.bf16.mxu0 %v1921
      %2212 = vmatpush1.bf16.msra.mxu0 %v1920
      %2213 = vmatprep.subr.bf16.mxu0 %v1917
      %2214 = vmatpush1.bf16.msra.mxu0 %v1916
      %2215 = vmatprep.subr.bf16.mxu0 %v1913
      %2216 = vmatpush1.bf16.msra.mxu0 %v1912
      %2217 = vmatprep.subr.bf16.mxu0 %v1909
      %2218 = vmatpush1.bf16.msra.mxu0 %v1908
      %2219 = vmatprep.subr.bf16.mxu0 %v1905
      %2220 = vmatpush1.bf16.msra.mxu0 %v1904
      %2221 = vmatprep.subr.bf16.mxu0 %v1901
      %2222 = vmatpush1.bf16.msra.mxu0 %v1900
      %2223 = vmatprep.subr.bf16.mxu0 %v1897
      %2224 = vmatpush1.bf16.msra.mxu0 %v1896
      %2225 = vmatprep.subr.bf16.mxu0 %v1893
      %2226 = vmatpush1.bf16.msra.mxu0 %v1892
      %2227 = vmatprep.subr.bf16.mxu0 %v1953
      %2228 = vmatpush2.bf16.msra.mxu0 %v1952
      %2229 = vmatprep.subr.bf16.mxu0 %v1949
      %2230 = vmatpush2.bf16.msra.mxu0 %v1948
      %2231 = vmatprep.subr.bf16.mxu0 %v1945
      %2232 = vmatpush2.bf16.msra.mxu0 %v1944
      %2233 = vmatprep.subr.bf16.mxu0 %v1941
      %2234 = vmatpush2.bf16.msra.mxu0 %v1940
      %2235 = vmatprep.subr.bf16.mxu0 %v1937
      %2236 = vmatpush2.bf16.msra.mxu0 %v1936
      %2237 = vmatprep.subr.bf16.mxu0 %v1933
      %2238 = vmatpush2.bf16.msra.mxu0 %v1932
      %2239 = vmatprep.subr.bf16.mxu0 %v1929
      %2240 = vmatpush2.bf16.msra.mxu0 %v1928
      %2241 = vmatprep.subr.bf16.mxu0 %v1925
      %2242 = vmatpush2.bf16.msra.mxu0 %v1924
      %2243 = vmatprep.mubr.bf16.mxu0 %v287
      %2244 = vmatmul.mubr.bf16.gmra.mxu0 %v286
      %v2245 = vpop.f32.mrf.mxu0
      %v2246 = vadd.f32 0.0, %v2245
      %v2247 = vpop.f32.mrf.mxu0
      %v2248 = vadd.f32 0.0, %v2247
      %v2249 = vpop.f32.mrf.mxu0
      %v2250 = vadd.f32 0.0, %v2249
      %v2251 = vpop.f32.mrf.mxu0
      %v2252 = vadd.f32 0.0, %v2251
      %2253 = vmatprep.mubr.bf16.mxu0 %v289
      %2254 = vmatmul.mubr.bf16.gmra.mxu0 %v288
      %v2255 = vpop.f32.mrf.mxu0
      %v2256 = vadd.f32 0.0, %v2255
      %v2257 = vpop.f32.mrf.mxu0
      %v2258 = vadd.f32 0.0, %v2257
      %v2259 = vpop.f32.mrf.mxu0
      %v2260 = vadd.f32 0.0, %v2259
      %v2261 = vpop.f32.mrf.mxu0
      %v2262 = vadd.f32 0.0, %v2261
      %2263 = vmatprep.mubr.bf16.mxu0 %v291
      %2264 = vmatmul.mubr.bf16.gmra.mxu0 %v290
      %v2265 = vpop.f32.mrf.mxu0
      %v2266 = vadd.f32 0.0, %v2265
      %v2267 = vpop.f32.mrf.mxu0
      %v2268 = vadd.f32 0.0, %v2267
      %v2269 = vpop.f32.mrf.mxu0
      %v2270 = vadd.f32 0.0, %v2269
      %v2271 = vpop.f32.mrf.mxu0
      %v2272 = vadd.f32 0.0, %v2271
      %2273 = vmatprep.mubr.bf16.mxu0 %v293
      %2274 = vmatmul.mubr.bf16.gmra.mxu0 %v292
      %v2275 = vpop.f32.mrf.mxu0
      %v2276 = vadd.f32 0.0, %v2275
      %v2277 = vpop.f32.mrf.mxu0
      %v2278 = vadd.f32 0.0, %v2277
      %v2279 = vpop.f32.mrf.mxu0
      %v2280 = vadd.f32 0.0, %v2279
      %v2281 = vpop.f32.mrf.mxu0
      %v2282 = vadd.f32 0.0, %v2281
      %2283 = vmatprep.mubr.bf16.mxu0 %v295
      %2284 = vmatmul.mubr.bf16.gmra.mxu0 %v294
      %v2285 = vpop.f32.mrf.mxu0
      %v2286 = vadd.f32 0.0, %v2285
      %v2287 = vpop.f32.mrf.mxu0
      %v2288 = vadd.f32 0.0, %v2287
      %v2289 = vpop.f32.mrf.mxu0
      %v2290 = vadd.f32 0.0, %v2289
      %v2291 = vpop.f32.mrf.mxu0
      %v2292 = vadd.f32 0.0, %v2291
      %2293 = vmatprep.mubr.bf16.mxu0 %v297
      %2294 = vmatmul.mubr.bf16.gmra.mxu0 %v296
      %v2295 = vpop.f32.mrf.mxu0
      %v2296 = vadd.f32 0.0, %v2295
      %v2297 = vpop.f32.mrf.mxu0
      %v2298 = vadd.f32 0.0, %v2297
      %v2299 = vpop.f32.mrf.mxu0
      %v2300 = vadd.f32 0.0, %v2299
      %v2301 = vpop.f32.mrf.mxu0
      %v2302 = vadd.f32 0.0, %v2301
      %2303 = vmatprep.mubr.bf16.mxu0 %v299
      %2304 = vmatmul.mubr.bf16.gmra.mxu0 %v298
      %v2305 = vpop.f32.mrf.mxu0
      %v2306 = vadd.f32 0.0, %v2305
      %v2307 = vpop.f32.mrf.mxu0
      %v2308 = vadd.f32 0.0, %v2307
      %v2309 = vpop.f32.mrf.mxu0
      %v2310 = vadd.f32 0.0, %v2309
      %v2311 = vpop.f32.mrf.mxu0
      %v2312 = vadd.f32 0.0, %v2311
      %2313 = vmatprep.mubr.bf16.mxu0 %v301
      %2314 = vmatmul.mubr.bf16.gmra.mxu0 %v300
      %v2315 = vpop.f32.mrf.mxu0
      %v2316 = vadd.f32 0.0, %v2315
      %v2317 = vpop.f32.mrf.mxu0
      %v2318 = vadd.f32 0.0, %v2317
      %v2319 = vpop.f32.mrf.mxu0
      %v2320 = vadd.f32 0.0, %v2319
      %v2321 = vpop.f32.mrf.mxu0
      %v2322 = vadd.f32 0.0, %v2321
      %2323 = vmatprep.mubr.bf16.mxu0 %v303
      %2324 = vmatmul.mubr.bf16.gmra.mxu0 %v302
      %v2325 = vpop.f32.mrf.mxu0
      %v2326 = vadd.f32 0.0, %v2325
      %v2327 = vpop.f32.mrf.mxu0
      %v2328 = vadd.f32 0.0, %v2327
      %v2329 = vpop.f32.mrf.mxu0
      %v2330 = vadd.f32 0.0, %v2329
      %v2331 = vpop.f32.mrf.mxu0
      %v2332 = vadd.f32 0.0, %v2331
      %2333 = vmatprep.mubr.bf16.mxu0 %v305
      %2334 = vmatmul.mubr.bf16.gmra.mxu0 %v304
      %v2335 = vpop.f32.mrf.mxu0
      %v2336 = vadd.f32 0.0, %v2335
      %v2337 = vpop.f32.mrf.mxu0
      %v2338 = vadd.f32 0.0, %v2337
      %v2339 = vpop.f32.mrf.mxu0
      %v2340 = vadd.f32 0.0, %v2339
      %v2341 = vpop.f32.mrf.mxu0
      %v2342 = vadd.f32 0.0, %v2341
      %2343 = vmatprep.mubr.bf16.mxu0 %v307
      %2344 = vmatmul.mubr.bf16.gmra.mxu0 %v306
      %v2345 = vpop.f32.mrf.mxu0
      %v2346 = vadd.f32 0.0, %v2345
      %v2347 = vpop.f32.mrf.mxu0
      %v2348 = vadd.f32 0.0, %v2347
      %v2349 = vpop.f32.mrf.mxu0
      %v2350 = vadd.f32 0.0, %v2349
      %v2351 = vpop.f32.mrf.mxu0
      %v2352 = vadd.f32 0.0, %v2351
      %2353 = vmatprep.mubr.bf16.mxu0 %v309
      %2354 = vmatmul.mubr.bf16.gmra.mxu0 %v308
      %v2355 = vpop.f32.mrf.mxu0
      %v2356 = vadd.f32 0.0, %v2355
      %v2357 = vpop.f32.mrf.mxu0
      %v2358 = vadd.f32 0.0, %v2357
      %v2359 = vpop.f32.mrf.mxu0
      %v2360 = vadd.f32 0.0, %v2359
      %v2361 = vpop.f32.mrf.mxu0
      %v2362 = vadd.f32 0.0, %v2361
      %2363 = vmatprep.mubr.bf16.mxu0 %v311
      %2364 = vmatmul.mubr.bf16.gmra.mxu0 %v310
      %v2365 = vpop.f32.mrf.mxu0
      %v2366 = vadd.f32 0.0, %v2365
      %v2367 = vpop.f32.mrf.mxu0
      %v2368 = vadd.f32 0.0, %v2367
      %v2369 = vpop.f32.mrf.mxu0
      %v2370 = vadd.f32 0.0, %v2369
      %v2371 = vpop.f32.mrf.mxu0
      %v2372 = vadd.f32 0.0, %v2371
      %2373 = vmatprep.mubr.bf16.mxu0 %v313
      %2374 = vmatmul.mubr.bf16.gmra.mxu0 %v312
      %v2375 = vpop.f32.mrf.mxu0
      %v2376 = vadd.f32 0.0, %v2375
      %v2377 = vpop.f32.mrf.mxu0
      %v2378 = vadd.f32 0.0, %v2377
      %v2379 = vpop.f32.mrf.mxu0
      %v2380 = vadd.f32 0.0, %v2379
      %v2381 = vpop.f32.mrf.mxu0
      %v2382 = vadd.f32 0.0, %v2381
      %2383 = vmatprep.mubr.bf16.mxu0 %v315
      %2384 = vmatmul.mubr.bf16.gmra.mxu0 %v314
      %v2385 = vpop.f32.mrf.mxu0
      %v2386 = vadd.f32 0.0, %v2385
      %v2387 = vpop.f32.mrf.mxu0
      %v2388 = vadd.f32 0.0, %v2387
      %v2389 = vpop.f32.mrf.mxu0
      %v2390 = vadd.f32 0.0, %v2389
      %v2391 = vpop.f32.mrf.mxu0
      %v2392 = vadd.f32 0.0, %v2391
      %2393 = vmatprep.mubr.bf16.mxu0 %v317
      %2394 = vmatmul.mubr.bf16.gmra.mxu0 %v316
      %v2395 = vpop.f32.mrf.mxu0
      %v2396 = vadd.f32 0.0, %v2395
      %v2397 = vpop.f32.mrf.mxu0
      %v2398 = vadd.f32 0.0, %v2397
      %v2399 = vpop.f32.mrf.mxu0
      %v2400 = vadd.f32 0.0, %v2399
      %v2401 = vpop.f32.mrf.mxu0
      %v2402 = vadd.f32 0.0, %v2401
      %2403 = vdwg.mxu0
      %v2404 = vadd.f32 %v1347, %v2053
      %v2405 = vadd.f32 %v1349, %v2055
      %v2406 = vadd.f32 %v1540, %v2246
      %v2407 = vadd.f32 %v1542, %v2248
      %v2408 = vadd.f32 %v1351, %v2057
      %v2409 = vadd.f32 %v1353, %v2059
      %v2410 = vadd.f32 %v1544, %v2250
      %v2411 = vadd.f32 %v1546, %v2252
      %v2412 = vadd.f32 %v1357, %v2063
      %v2413 = vadd.f32 %v1359, %v2065
      %v2414 = vadd.f32 %v1550, %v2256
      %v2415 = vadd.f32 %v1552, %v2258
      %v2416 = vadd.f32 %v1361, %v2067
      %v2417 = vadd.f32 %v1363, %v2069
      %v2418 = vadd.f32 %v1554, %v2260
      %v2419 = vadd.f32 %v1556, %v2262
      %v2420 = vadd.f32 %v1367, %v2073
      %v2421 = vadd.f32 %v1369, %v2075
      %v2422 = vadd.f32 %v1560, %v2266
      %v2423 = vadd.f32 %v1562, %v2268
      %v2424 = vadd.f32 %v1371, %v2077
      %v2425 = vadd.f32 %v1373, %v2079
      %v2426 = vadd.f32 %v1564, %v2270
      %v2427 = vadd.f32 %v1566, %v2272
      %v2428 = vadd.f32 %v1377, %v2083
      %v2429 = vadd.f32 %v1379, %v2085
      %v2430 = vadd.f32 %v1570, %v2276
      %v2431 = vadd.f32 %v1572, %v2278
      %v2432 = vadd.f32 %v1381, %v2087
      %v2433 = vadd.f32 %v1383, %v2089
      %v2434 = vadd.f32 %v1574, %v2280
      %v2435 = vadd.f32 %v1576, %v2282
      %v2436 = vadd.f32 %v1387, %v2093
      %v2437 = vadd.f32 %v1389, %v2095
      %v2438 = vadd.f32 %v1580, %v2286
      %v2439 = vadd.f32 %v1582, %v2288
      %v2440 = vadd.f32 %v1391, %v2097
      %v2441 = vadd.f32 %v1393, %v2099
      %v2442 = vadd.f32 %v1584, %v2290
      %v2443 = vadd.f32 %v1586, %v2292
      %v2444 = vadd.f32 %v1397, %v2103
      %v2445 = vadd.f32 %v1399, %v2105
      %v2446 = vadd.f32 %v1590, %v2296
      %v2447 = vadd.f32 %v1592, %v2298
      %v2448 = vadd.f32 %v1401, %v2107
      %v2449 = vadd.f32 %v1403, %v2109
      %v2450 = vadd.f32 %v1594, %v2300
      %v2451 = vadd.f32 %v1596, %v2302
      %v2452 = vadd.f32 %v1407, %v2113
      %v2453 = vadd.f32 %v1409, %v2115
      %v2454 = vadd.f32 %v1600, %v2306
      %v2455 = vadd.f32 %v1602, %v2308
      %v2456 = vadd.f32 %v1411, %v2117
      %v2457 = vadd.f32 %v1413, %v2119
      %v2458 = vadd.f32 %v1604, %v2310
      %v2459 = vadd.f32 %v1606, %v2312
      %v2460 = vadd.f32 %v1417, %v2123
      %v2461 = vadd.f32 %v1419, %v2125
      %v2462 = vadd.f32 %v1610, %v2316
      %v2463 = vadd.f32 %v1612, %v2318
      %v2464 = vadd.f32 %v1421, %v2127
      %v2465 = vadd.f32 %v1423, %v2129
      %v2466 = vadd.f32 %v1614, %v2320
      %v2467 = vadd.f32 %v1616, %v2322
      %v2468 = vadd.f32 %v1427, %v2133
      %v2469 = vadd.f32 %v1429, %v2135
      %v2470 = vadd.f32 %v1620, %v2326
      %v2471 = vadd.f32 %v1622, %v2328
      %v2472 = vadd.f32 %v1431, %v2137
      %v2473 = vadd.f32 %v1433, %v2139
      %v2474 = vadd.f32 %v1624, %v2330
      %v2475 = vadd.f32 %v1626, %v2332
      %v2476 = vadd.f32 %v1437, %v2143
      %v2477 = vadd.f32 %v1439, %v2145
      %v2478 = vadd.f32 %v1630, %v2336
      %v2479 = vadd.f32 %v1632, %v2338
      %v2480 = vadd.f32 %v1441, %v2147
      %v2481 = vadd.f32 %v1443, %v2149
      %v2482 = vadd.f32 %v1634, %v2340
      %v2483 = vadd.f32 %v1636, %v2342
      %v2484 = vadd.f32 %v1447, %v2153
      %v2485 = vadd.f32 %v1449, %v2155
      %v2486 = vadd.f32 %v1640, %v2346
      %v2487 = vadd.f32 %v1642, %v2348
      %v2488 = vadd.f32 %v1451, %v2157
      %v2489 = vadd.f32 %v1453, %v2159
      %v2490 = vadd.f32 %v1644, %v2350
      %v2491 = vadd.f32 %v1646, %v2352
      %v2492 = vadd.f32 %v1457, %v2163
      %v2493 = vadd.f32 %v1459, %v2165
      %v2494 = vadd.f32 %v1650, %v2356
      %v2495 = vadd.f32 %v1652, %v2358
      %v2496 = vadd.f32 %v1461, %v2167
      %v2497 = vadd.f32 %v1463, %v2169
      %v2498 = vadd.f32 %v1654, %v2360
      %v2499 = vadd.f32 %v1656, %v2362
      %v2500 = vadd.f32 %v1467, %v2173
      %v2501 = vadd.f32 %v1469, %v2175
      %v2502 = vadd.f32 %v1660, %v2366
      %v2503 = vadd.f32 %v1662, %v2368
      %v2504 = vadd.f32 %v1471, %v2177
      %v2505 = vadd.f32 %v1473, %v2179
      %v2506 = vadd.f32 %v1664, %v2370
      %v2507 = vadd.f32 %v1666, %v2372
      %v2508 = vadd.f32 %v1477, %v2183
      %v2509 = vadd.f32 %v1479, %v2185
      %v2510 = vadd.f32 %v1670, %v2376
      %v2511 = vadd.f32 %v1672, %v2378
      %v2512 = vadd.f32 %v1481, %v2187
      %v2513 = vadd.f32 %v1483, %v2189
      %v2514 = vadd.f32 %v1674, %v2380
      %v2515 = vadd.f32 %v1676, %v2382
      %v2516 = vadd.f32 %v1487, %v2193
      %v2517 = vadd.f32 %v1489, %v2195
      %v2518 = vadd.f32 %v1680, %v2386
      %v2519 = vadd.f32 %v1682, %v2388
      %v2520 = vadd.f32 %v1491, %v2197
      %v2521 = vadd.f32 %v1493, %v2199
      %v2522 = vadd.f32 %v1684, %v2390
      %v2523 = vadd.f32 %v1686, %v2392
      %v2524 = vadd.f32 %v1497, %v2203
      %v2525 = vadd.f32 %v1499, %v2205
      %v2526 = vadd.f32 %v1690, %v2396
      %v2527 = vadd.f32 %v1692, %v2398
      %v2528 = vadd.f32 %v1501, %v2207
      %v2529 = vadd.f32 %v1503, %v2209
      %v2530 = vadd.f32 %v1694, %v2400
      %v2531 = vadd.f32 %v1696, %v2402
      %v2532 = vmul.f32 %v2404, %v2404
      %v2533 = vmul.f32 %v2405, %v2405
      %v2534 = vmul.f32 %v2408, %v2408
      %v2535 = vmul.f32 %v2409, %v2409
      %v2536 = vmul.f32 %v2412, %v2412
      %v2537 = vmul.f32 %v2413, %v2413
      %v2538 = vmul.f32 %v2416, %v2416
      %v2539 = vmul.f32 %v2417, %v2417
      %v2540 = vmul.f32 %v2420, %v2420
      %v2541 = vmul.f32 %v2421, %v2421
      %v2542 = vmul.f32 %v2424, %v2424
      %v2543 = vmul.f32 %v2425, %v2425
      %v2544 = vmul.f32 %v2428, %v2428
      %v2545 = vmul.f32 %v2429, %v2429
      %v2546 = vmul.f32 %v2432, %v2432
      %v2547 = vmul.f32 %v2433, %v2433
      %v2548 = vmul.f32 %v2436, %v2436
      %v2549 = vmul.f32 %v2437, %v2437
      %v2550 = vmul.f32 %v2440, %v2440
      %v2551 = vmul.f32 %v2441, %v2441
      %v2552 = vmul.f32 %v2444, %v2444
      %v2553 = vmul.f32 %v2445, %v2445
      %v2554 = vmul.f32 %v2448, %v2448
      %v2555 = vmul.f32 %v2449, %v2449
      %v2556 = vmul.f32 %v2452, %v2452
      %v2557 = vmul.f32 %v2453, %v2453
      %v2558 = vmul.f32 %v2456, %v2456
      %v2559 = vmul.f32 %v2457, %v2457
      %v2560 = vmul.f32 %v2460, %v2460
      %v2561 = vmul.f32 %v2461, %v2461
      %v2562 = vmul.f32 %v2464, %v2464
      %v2563 = vmul.f32 %v2465, %v2465
      %v2564 = vmul.f32 %v2468, %v2468
      %v2565 = vmul.f32 %v2469, %v2469
      %v2566 = vmul.f32 %v2472, %v2472
      %v2567 = vmul.f32 %v2473, %v2473
      %v2568 = vmul.f32 %v2476, %v2476
      %v2569 = vmul.f32 %v2477, %v2477
      %v2570 = vmul.f32 %v2480, %v2480
      %v2571 = vmul.f32 %v2481, %v2481
      %v2572 = vmul.f32 %v2484, %v2484
      %v2573 = vmul.f32 %v2485, %v2485
      %v2574 = vmul.f32 %v2488, %v2488
      %v2575 = vmul.f32 %v2489, %v2489
      %v2576 = vmul.f32 %v2492, %v2492
      %v2577 = vmul.f32 %v2493, %v2493
      %v2578 = vmul.f32 %v2496, %v2496
      %v2579 = vmul.f32 %v2497, %v2497
      %v2580 = vmul.f32 %v2500, %v2500
      %v2581 = vmul.f32 %v2501, %v2501
      %v2582 = vmul.f32 %v2504, %v2504
      %v2583 = vmul.f32 %v2505, %v2505
      %v2584 = vmul.f32 %v2508, %v2508
      %v2585 = vmul.f32 %v2509, %v2509
      %v2586 = vmul.f32 %v2512, %v2512
      %v2587 = vmul.f32 %v2513, %v2513
      %v2588 = vmul.f32 %v2516, %v2516
      %v2589 = vmul.f32 %v2517, %v2517
      %v2590 = vmul.f32 %v2520, %v2520
      %v2591 = vmul.f32 %v2521, %v2521
      %v2592 = vmul.f32 %v2524, %v2524
      %v2593 = vmul.f32 %v2525, %v2525
      %v2594 = vmul.f32 %v2528, %v2528
      %v2595 = vmul.f32 %v2529, %v2529
      %v2596 = vmul.f32 %v2406, %v2406
      %v2597 = vmul.f32 %v2407, %v2407
      %v2598 = vmul.f32 %v2410, %v2410
      %v2599 = vmul.f32 %v2411, %v2411
      %v2600 = vmul.f32 %v2414, %v2414
      %v2601 = vmul.f32 %v2415, %v2415
      %v2602 = vmul.f32 %v2418, %v2418
      %v2603 = vmul.f32 %v2419, %v2419
      %v2604 = vmul.f32 %v2422, %v2422
      %v2605 = vmul.f32 %v2423, %v2423
      %v2606 = vmul.f32 %v2426, %v2426
      %v2607 = vmul.f32 %v2427, %v2427
      %v2608 = vmul.f32 %v2430, %v2430
      %v2609 = vmul.f32 %v2431, %v2431
      %v2610 = vmul.f32 %v2434, %v2434
      %v2611 = vmul.f32 %v2435, %v2435
      %v2612 = vmul.f32 %v2438, %v2438
      %v2613 = vmul.f32 %v2439, %v2439
      %v2614 = vmul.f32 %v2442, %v2442
      %v2615 = vmul.f32 %v2443, %v2443
      %v2616 = vmul.f32 %v2446, %v2446
      %v2617 = vmul.f32 %v2447, %v2447
      %v2618 = vmul.f32 %v2450, %v2450
      %v2619 = vmul.f32 %v2451, %v2451
      %v2620 = vmul.f32 %v2454, %v2454
      %v2621 = vmul.f32 %v2455, %v2455
      %v2622 = vmul.f32 %v2458, %v2458
      %v2623 = vmul.f32 %v2459, %v2459
      %v2624 = vmul.f32 %v2462, %v2462
      %v2625 = vmul.f32 %v2463, %v2463
      %v2626 = vmul.f32 %v2466, %v2466
      %v2627 = vmul.f32 %v2467, %v2467
      %v2628 = vmul.f32 %v2470, %v2470
      %v2629 = vmul.f32 %v2471, %v2471
      %v2630 = vmul.f32 %v2474, %v2474
      %v2631 = vmul.f32 %v2475, %v2475
      %v2632 = vmul.f32 %v2478, %v2478
      %v2633 = vmul.f32 %v2479, %v2479
      %v2634 = vmul.f32 %v2482, %v2482
      %v2635 = vmul.f32 %v2483, %v2483
      %v2636 = vmul.f32 %v2486, %v2486
      %v2637 = vmul.f32 %v2487, %v2487
      %v2638 = vmul.f32 %v2490, %v2490
      %v2639 = vmul.f32 %v2491, %v2491
      %v2640 = vmul.f32 %v2494, %v2494
      %v2641 = vmul.f32 %v2495, %v2495
      %v2642 = vmul.f32 %v2498, %v2498
      %v2643 = vmul.f32 %v2499, %v2499
      %v2644 = vmul.f32 %v2502, %v2502
      %v2645 = vmul.f32 %v2503, %v2503
      %v2646 = vmul.f32 %v2506, %v2506
      %v2647 = vmul.f32 %v2507, %v2507
      %v2648 = vmul.f32 %v2510, %v2510
      %v2649 = vmul.f32 %v2511, %v2511
      %v2650 = vmul.f32 %v2514, %v2514
      %v2651 = vmul.f32 %v2515, %v2515
      %v2652 = vmul.f32 %v2518, %v2518
      %v2653 = vmul.f32 %v2519, %v2519
      %v2654 = vmul.f32 %v2522, %v2522
      %v2655 = vmul.f32 %v2523, %v2523
      %v2656 = vmul.f32 %v2526, %v2526
      %v2657 = vmul.f32 %v2527, %v2527
      %v2658 = vmul.f32 %v2530, %v2530
      %v2659 = vmul.f32 %v2531, %v2531
      %v2660 = vadd.f32 %v2532, %v2596
      %v2661 = vadd.f32 %v2533, %v2597
      %v2662 = vadd.f32 %v2534, %v2598
      %v2663 = vadd.f32 %v2535, %v2599
      %v2664 = vadd.f32 %v2536, %v2600
      %v2665 = vadd.f32 %v2537, %v2601
      %v2666 = vadd.f32 %v2538, %v2602
      %v2667 = vadd.f32 %v2539, %v2603
      %v2668 = vadd.f32 %v2540, %v2604
      %v2669 = vadd.f32 %v2541, %v2605
      %v2670 = vadd.f32 %v2542, %v2606
      %v2671 = vadd.f32 %v2543, %v2607
      %v2672 = vadd.f32 %v2544, %v2608
      %v2673 = vadd.f32 %v2545, %v2609
      %v2674 = vadd.f32 %v2546, %v2610
      %v2675 = vadd.f32 %v2547, %v2611
      %v2676 = vadd.f32 %v2548, %v2612
      %v2677 = vadd.f32 %v2549, %v2613
      %v2678 = vadd.f32 %v2550, %v2614
      %v2679 = vadd.f32 %v2551, %v2615
      %v2680 = vadd.f32 %v2552, %v2616
      %v2681 = vadd.f32 %v2553, %v2617
      %v2682 = vadd.f32 %v2554, %v2618
      %v2683 = vadd.f32 %v2555, %v2619
      %v2684 = vadd.f32 %v2556, %v2620
      %v2685 = vadd.f32 %v2557, %v2621
      %v2686 = vadd.f32 %v2558, %v2622
      %v2687 = vadd.f32 %v2559, %v2623
      %v2688 = vadd.f32 %v2560, %v2624
      %v2689 = vadd.f32 %v2561, %v2625
      %v2690 = vadd.f32 %v2562, %v2626
      %v2691 = vadd.f32 %v2563, %v2627
      %v2692 = vadd.f32 %v2564, %v2628
      %v2693 = vadd.f32 %v2565, %v2629
      %v2694 = vadd.f32 %v2566, %v2630
      %v2695 = vadd.f32 %v2567, %v2631
      %v2696 = vadd.f32 %v2568, %v2632
      %v2697 = vadd.f32 %v2569, %v2633
      %v2698 = vadd.f32 %v2570, %v2634
      %v2699 = vadd.f32 %v2571, %v2635
      %v2700 = vadd.f32 %v2572, %v2636
      %v2701 = vadd.f32 %v2573, %v2637
      %v2702 = vadd.f32 %v2574, %v2638
      %v2703 = vadd.f32 %v2575, %v2639
      %v2704 = vadd.f32 %v2576, %v2640
      %v2705 = vadd.f32 %v2577, %v2641
      %v2706 = vadd.f32 %v2578, %v2642
      %v2707 = vadd.f32 %v2579, %v2643
      %v2708 = vadd.f32 %v2580, %v2644
      %v2709 = vadd.f32 %v2581, %v2645
      %v2710 = vadd.f32 %v2582, %v2646
      %v2711 = vadd.f32 %v2583, %v2647
      %v2712 = vadd.f32 %v2584, %v2648
      %v2713 = vadd.f32 %v2585, %v2649
      %v2714 = vadd.f32 %v2586, %v2650
      %v2715 = vadd.f32 %v2587, %v2651
      %v2716 = vadd.f32 %v2588, %v2652
      %v2717 = vadd.f32 %v2589, %v2653
      %v2718 = vadd.f32 %v2590, %v2654
      %v2719 = vadd.f32 %v2591, %v2655
      %v2720 = vadd.f32 %v2592, %v2656
      %v2721 = vadd.f32 %v2593, %v2657
      %v2722 = vadd.f32 %v2594, %v2658
      %v2723 = vadd.f32 %v2595, %v2659
      %v2724 = vrsqrt.pop %v2660
      %v2725 = vmul.f32 %v2660, %v2724
      %vm2726 = vcmp.eq.f32.partialorder %v2660, inf
      %v2727 = vsel %vm2726, %v2660, %v2725
      %vm2728 = vcmp.eq.f32.partialorder %v2660, 0.0
      %v2729 = vand.u32 %v2660, 2147483648
      %v2730 = vsel %vm2728, %v2729, %v2727
      %v2731 = vrsqrt.pop %v2661
      %v2732 = vmul.f32 %v2661, %v2731
      %vm2733 = vcmp.eq.f32.partialorder %v2661, inf
      %v2734 = vsel %vm2733, %v2661, %v2732
      %vm2735 = vcmp.eq.f32.partialorder %v2661, 0.0
      %v2736 = vand.u32 %v2661, 2147483648
      %v2737 = vsel %vm2735, %v2736, %v2734
      %v2738 = vrsqrt.pop %v2662
      %v2739 = vmul.f32 %v2662, %v2738
      %vm2740 = vcmp.eq.f32.partialorder %v2662, inf
      %v2741 = vsel %vm2740, %v2662, %v2739
      %vm2742 = vcmp.eq.f32.partialorder %v2662, 0.0
      %v2743 = vand.u32 %v2662, 2147483648
      %v2744 = vsel %vm2742, %v2743, %v2741
      %v2745 = vrsqrt.pop %v2663
      %v2746 = vmul.f32 %v2663, %v2745
      %vm2747 = vcmp.eq.f32.partialorder %v2663, inf
      %v2748 = vsel %vm2747, %v2663, %v2746
      %vm2749 = vcmp.eq.f32.partialorder %v2663, 0.0
      %v2750 = vand.u32 %v2663, 2147483648
      %v2751 = vsel %vm2749, %v2750, %v2748
      %v2752 = vrsqrt.pop %v2664
      %v2753 = vmul.f32 %v2664, %v2752
      %vm2754 = vcmp.eq.f32.partialorder %v2664, inf
      %v2755 = vsel %vm2754, %v2664, %v2753
      %vm2756 = vcmp.eq.f32.partialorder %v2664, 0.0
      %v2757 = vand.u32 %v2664, 2147483648
      %v2758 = vsel %vm2756, %v2757, %v2755
      %v2759 = vrsqrt.pop %v2665
      %v2760 = vmul.f32 %v2665, %v2759
      %vm2761 = vcmp.eq.f32.partialorder %v2665, inf
      %v2762 = vsel %vm2761, %v2665, %v2760
      %vm2763 = vcmp.eq.f32.partialorder %v2665, 0.0
      %v2764 = vand.u32 %v2665, 2147483648
      %v2765 = vsel %vm2763, %v2764, %v2762
      %v2766 = vrsqrt.pop %v2666
      %v2767 = vmul.f32 %v2666, %v2766
      %vm2768 = vcmp.eq.f32.partialorder %v2666, inf
      %v2769 = vsel %vm2768, %v2666, %v2767
      %vm2770 = vcmp.eq.f32.partialorder %v2666, 0.0
      %v2771 = vand.u32 %v2666, 2147483648
      %v2772 = vsel %vm2770, %v2771, %v2769
      %v2773 = vrsqrt.pop %v2667
      %v2774 = vmul.f32 %v2667, %v2773
      %vm2775 = vcmp.eq.f32.partialorder %v2667, inf
      %v2776 = vsel %vm2775, %v2667, %v2774
      %vm2777 = vcmp.eq.f32.partialorder %v2667, 0.0
      %v2778 = vand.u32 %v2667, 2147483648
      %v2779 = vsel %vm2777, %v2778, %v2776
      %v2780 = vrsqrt.pop %v2668
      %v2781 = vmul.f32 %v2668, %v2780
      %vm2782 = vcmp.eq.f32.partialorder %v2668, inf
      %v2783 = vsel %vm2782, %v2668, %v2781
      %vm2784 = vcmp.eq.f32.partialorder %v2668, 0.0
      %v2785 = vand.u32 %v2668, 2147483648
      %v2786 = vsel %vm2784, %v2785, %v2783
      %v2787 = vrsqrt.pop %v2669
      %v2788 = vmul.f32 %v2669, %v2787
      %vm2789 = vcmp.eq.f32.partialorder %v2669, inf
      %v2790 = vsel %vm2789, %v2669, %v2788
      %vm2791 = vcmp.eq.f32.partialorder %v2669, 0.0
      %v2792 = vand.u32 %v2669, 2147483648
      %v2793 = vsel %vm2791, %v2792, %v2790
      %v2794 = vrsqrt.pop %v2670
      %v2795 = vmul.f32 %v2670, %v2794
      %vm2796 = vcmp.eq.f32.partialorder %v2670, inf
      %v2797 = vsel %vm2796, %v2670, %v2795
      %vm2798 = vcmp.eq.f32.partialorder %v2670, 0.0
      %v2799 = vand.u32 %v2670, 2147483648
      %v2800 = vsel %vm2798, %v2799, %v2797
      %v2801 = vrsqrt.pop %v2671
      %v2802 = vmul.f32 %v2671, %v2801
      %vm2803 = vcmp.eq.f32.partialorder %v2671, inf
      %v2804 = vsel %vm2803, %v2671, %v2802
      %vm2805 = vcmp.eq.f32.partialorder %v2671, 0.0
      %v2806 = vand.u32 %v2671, 2147483648
      %v2807 = vsel %vm2805, %v2806, %v2804
      %v2808 = vrsqrt.pop %v2672
      %v2809 = vmul.f32 %v2672, %v2808
      %vm2810 = vcmp.eq.f32.partialorder %v2672, inf
      %v2811 = vsel %vm2810, %v2672, %v2809
      %vm2812 = vcmp.eq.f32.partialorder %v2672, 0.0
      %v2813 = vand.u32 %v2672, 2147483648
      %v2814 = vsel %vm2812, %v2813, %v2811
      %v2815 = vrsqrt.pop %v2673
      %v2816 = vmul.f32 %v2673, %v2815
      %vm2817 = vcmp.eq.f32.partialorder %v2673, inf
      %v2818 = vsel %vm2817, %v2673, %v2816
      %vm2819 = vcmp.eq.f32.partialorder %v2673, 0.0
      %v2820 = vand.u32 %v2673, 2147483648
      %v2821 = vsel %vm2819, %v2820, %v2818
      %v2822 = vrsqrt.pop %v2674
      %v2823 = vmul.f32 %v2674, %v2822
      %vm2824 = vcmp.eq.f32.partialorder %v2674, inf
      %v2825 = vsel %vm2824, %v2674, %v2823
      %vm2826 = vcmp.eq.f32.partialorder %v2674, 0.0
      %v2827 = vand.u32 %v2674, 2147483648
      %v2828 = vsel %vm2826, %v2827, %v2825
      %v2829 = vrsqrt.pop %v2675
      %v2830 = vmul.f32 %v2675, %v2829
      %vm2831 = vcmp.eq.f32.partialorder %v2675, inf
      %v2832 = vsel %vm2831, %v2675, %v2830
      %vm2833 = vcmp.eq.f32.partialorder %v2675, 0.0
      %v2834 = vand.u32 %v2675, 2147483648
      %v2835 = vsel %vm2833, %v2834, %v2832
      %v2836 = vrsqrt.pop %v2676
      %v2837 = vmul.f32 %v2676, %v2836
      %vm2838 = vcmp.eq.f32.partialorder %v2676, inf
      %v2839 = vsel %vm2838, %v2676, %v2837
      %vm2840 = vcmp.eq.f32.partialorder %v2676, 0.0
      %v2841 = vand.u32 %v2676, 2147483648
      %v2842 = vsel %vm2840, %v2841, %v2839
      %v2843 = vrsqrt.pop %v2677
      %v2844 = vmul.f32 %v2677, %v2843
      %vm2845 = vcmp.eq.f32.partialorder %v2677, inf
      %v2846 = vsel %vm2845, %v2677, %v2844
      %vm2847 = vcmp.eq.f32.partialorder %v2677, 0.0
      %v2848 = vand.u32 %v2677, 2147483648
      %v2849 = vsel %vm2847, %v2848, %v2846
      %v2850 = vrsqrt.pop %v2678
      %v2851 = vmul.f32 %v2678, %v2850
      %vm2852 = vcmp.eq.f32.partialorder %v2678, inf
      %v2853 = vsel %vm2852, %v2678, %v2851
      %vm2854 = vcmp.eq.f32.partialorder %v2678, 0.0
      %v2855 = vand.u32 %v2678, 2147483648
      %v2856 = vsel %vm2854, %v2855, %v2853
      %v2857 = vrsqrt.pop %v2679
      %v2858 = vmul.f32 %v2679, %v2857
      %vm2859 = vcmp.eq.f32.partialorder %v2679, inf
      %v2860 = vsel %vm2859, %v2679, %v2858
      %vm2861 = vcmp.eq.f32.partialorder %v2679, 0.0
      %v2862 = vand.u32 %v2679, 2147483648
      %v2863 = vsel %vm2861, %v2862, %v2860
      %v2864 = vrsqrt.pop %v2680
      %v2865 = vmul.f32 %v2680, %v2864
      %vm2866 = vcmp.eq.f32.partialorder %v2680, inf
      %v2867 = vsel %vm2866, %v2680, %v2865
      %vm2868 = vcmp.eq.f32.partialorder %v2680, 0.0
      %v2869 = vand.u32 %v2680, 2147483648
      %v2870 = vsel %vm2868, %v2869, %v2867
      %v2871 = vrsqrt.pop %v2681
      %v2872 = vmul.f32 %v2681, %v2871
      %vm2873 = vcmp.eq.f32.partialorder %v2681, inf
      %v2874 = vsel %vm2873, %v2681, %v2872
      %vm2875 = vcmp.eq.f32.partialorder %v2681, 0.0
      %v2876 = vand.u32 %v2681, 2147483648
      %v2877 = vsel %vm2875, %v2876, %v2874
      %v2878 = vrsqrt.pop %v2682
      %v2879 = vmul.f32 %v2682, %v2878
      %vm2880 = vcmp.eq.f32.partialorder %v2682, inf
      %v2881 = vsel %vm2880, %v2682, %v2879
      %vm2882 = vcmp.eq.f32.partialorder %v2682, 0.0
      %v2883 = vand.u32 %v2682, 2147483648
      %v2884 = vsel %vm2882, %v2883, %v2881
      %v2885 = vrsqrt.pop %v2683
      %v2886 = vmul.f32 %v2683, %v2885
      %vm2887 = vcmp.eq.f32.partialorder %v2683, inf
      %v2888 = vsel %vm2887, %v2683, %v2886
      %vm2889 = vcmp.eq.f32.partialorder %v2683, 0.0
      %v2890 = vand.u32 %v2683, 2147483648
      %v2891 = vsel %vm2889, %v2890, %v2888
      %v2892 = vrsqrt.pop %v2684
      %v2893 = vmul.f32 %v2684, %v2892
      %vm2894 = vcmp.eq.f32.partialorder %v2684, inf
      %v2895 = vsel %vm2894, %v2684, %v2893
      %vm2896 = vcmp.eq.f32.partialorder %v2684, 0.0
      %v2897 = vand.u32 %v2684, 2147483648
      %v2898 = vsel %vm2896, %v2897, %v2895
      %v2899 = vrsqrt.pop %v2685
      %v2900 = vmul.f32 %v2685, %v2899
      %vm2901 = vcmp.eq.f32.partialorder %v2685, inf
      %v2902 = vsel %vm2901, %v2685, %v2900
      %vm2903 = vcmp.eq.f32.partialorder %v2685, 0.0
      %v2904 = vand.u32 %v2685, 2147483648
      %v2905 = vsel %vm2903, %v2904, %v2902
      %v2906 = vrsqrt.pop %v2686
      %v2907 = vmul.f32 %v2686, %v2906
      %vm2908 = vcmp.eq.f32.partialorder %v2686, inf
      %v2909 = vsel %vm2908, %v2686, %v2907
      %vm2910 = vcmp.eq.f32.partialorder %v2686, 0.0
      %v2911 = vand.u32 %v2686, 2147483648
      %v2912 = vsel %vm2910, %v2911, %v2909
      %v2913 = vrsqrt.pop %v2687
      %v2914 = vmul.f32 %v2687, %v2913
      %vm2915 = vcmp.eq.f32.partialorder %v2687, inf
      %v2916 = vsel %vm2915, %v2687, %v2914
      %vm2917 = vcmp.eq.f32.partialorder %v2687, 0.0
      %v2918 = vand.u32 %v2687, 2147483648
      %v2919 = vsel %vm2917, %v2918, %v2916
      %v2920 = vrsqrt.pop %v2688
      %v2921 = vmul.f32 %v2688, %v2920
      %vm2922 = vcmp.eq.f32.partialorder %v2688, inf
      %v2923 = vsel %vm2922, %v2688, %v2921
      %vm2924 = vcmp.eq.f32.partialorder %v2688, 0.0
      %v2925 = vand.u32 %v2688, 2147483648
      %v2926 = vsel %vm2924, %v2925, %v2923
      %v2927 = vrsqrt.pop %v2689
      %v2928 = vmul.f32 %v2689, %v2927
      %vm2929 = vcmp.eq.f32.partialorder %v2689, inf
      %v2930 = vsel %vm2929, %v2689, %v2928
      %vm2931 = vcmp.eq.f32.partialorder %v2689, 0.0
      %v2932 = vand.u32 %v2689, 2147483648
      %v2933 = vsel %vm2931, %v2932, %v2930
      %v2934 = vrsqrt.pop %v2690
      %v2935 = vmul.f32 %v2690, %v2934
      %vm2936 = vcmp.eq.f32.partialorder %v2690, inf
      %v2937 = vsel %vm2936, %v2690, %v2935
      %vm2938 = vcmp.eq.f32.partialorder %v2690, 0.0
      %v2939 = vand.u32 %v2690, 2147483648
      %v2940 = vsel %vm2938, %v2939, %v2937
      %v2941 = vrsqrt.pop %v2691
      %v2942 = vmul.f32 %v2691, %v2941
      %vm2943 = vcmp.eq.f32.partialorder %v2691, inf
      %v2944 = vsel %vm2943, %v2691, %v2942
      %vm2945 = vcmp.eq.f32.partialorder %v2691, 0.0
      %v2946 = vand.u32 %v2691, 2147483648
      %v2947 = vsel %vm2945, %v2946, %v2944
      %v2948 = vrsqrt.pop %v2692
      %v2949 = vmul.f32 %v2692, %v2948
      %vm2950 = vcmp.eq.f32.partialorder %v2692, inf
      %v2951 = vsel %vm2950, %v2692, %v2949
      %vm2952 = vcmp.eq.f32.partialorder %v2692, 0.0
      %v2953 = vand.u32 %v2692, 2147483648
      %v2954 = vsel %vm2952, %v2953, %v2951
      %v2955 = vrsqrt.pop %v2693
      %v2956 = vmul.f32 %v2693, %v2955
      %vm2957 = vcmp.eq.f32.partialorder %v2693, inf
      %v2958 = vsel %vm2957, %v2693, %v2956
      %vm2959 = vcmp.eq.f32.partialorder %v2693, 0.0
      %v2960 = vand.u32 %v2693, 2147483648
      %v2961 = vsel %vm2959, %v2960, %v2958
      %v2962 = vrsqrt.pop %v2694
      %v2963 = vmul.f32 %v2694, %v2962
      %vm2964 = vcmp.eq.f32.partialorder %v2694, inf
      %v2965 = vsel %vm2964, %v2694, %v2963
      %vm2966 = vcmp.eq.f32.partialorder %v2694, 0.0
      %v2967 = vand.u32 %v2694, 2147483648
      %v2968 = vsel %vm2966, %v2967, %v2965
      %v2969 = vrsqrt.pop %v2695
      %v2970 = vmul.f32 %v2695, %v2969
      %vm2971 = vcmp.eq.f32.partialorder %v2695, inf
      %v2972 = vsel %vm2971, %v2695, %v2970
      %vm2973 = vcmp.eq.f32.partialorder %v2695, 0.0
      %v2974 = vand.u32 %v2695, 2147483648
      %v2975 = vsel %vm2973, %v2974, %v2972
      %v2976 = vrsqrt.pop %v2696
      %v2977 = vmul.f32 %v2696, %v2976
      %vm2978 = vcmp.eq.f32.partialorder %v2696, inf
      %v2979 = vsel %vm2978, %v2696, %v2977
      %vm2980 = vcmp.eq.f32.partialorder %v2696, 0.0
      %v2981 = vand.u32 %v2696, 2147483648
      %v2982 = vsel %vm2980, %v2981, %v2979
      %v2983 = vrsqrt.pop %v2697
      %v2984 = vmul.f32 %v2697, %v2983
      %vm2985 = vcmp.eq.f32.partialorder %v2697, inf
      %v2986 = vsel %vm2985, %v2697, %v2984
      %vm2987 = vcmp.eq.f32.partialorder %v2697, 0.0
      %v2988 = vand.u32 %v2697, 2147483648
      %v2989 = vsel %vm2987, %v2988, %v2986
      %v2990 = vrsqrt.pop %v2698
      %v2991 = vmul.f32 %v2698, %v2990
      %vm2992 = vcmp.eq.f32.partialorder %v2698, inf
      %v2993 = vsel %vm2992, %v2698, %v2991
      %vm2994 = vcmp.eq.f32.partialorder %v2698, 0.0
      %v2995 = vand.u32 %v2698, 2147483648
      %v2996 = vsel %vm2994, %v2995, %v2993
      %v2997 = vrsqrt.pop %v2699
      %v2998 = vmul.f32 %v2699, %v2997
      %vm2999 = vcmp.eq.f32.partialorder %v2699, inf
      %v3000 = vsel %vm2999, %v2699, %v2998
      %vm3001 = vcmp.eq.f32.partialorder %v2699, 0.0
      %v3002 = vand.u32 %v2699, 2147483648
      %v3003 = vsel %vm3001, %v3002, %v3000
      %v3004 = vrsqrt.pop %v2700
      %v3005 = vmul.f32 %v2700, %v3004
      %vm3006 = vcmp.eq.f32.partialorder %v2700, inf
      %v3007 = vsel %vm3006, %v2700, %v3005
      %vm3008 = vcmp.eq.f32.partialorder %v2700, 0.0
      %v3009 = vand.u32 %v2700, 2147483648
      %v3010 = vsel %vm3008, %v3009, %v3007
      %v3011 = vrsqrt.pop %v2701
      %v3012 = vmul.f32 %v2701, %v3011
      %vm3013 = vcmp.eq.f32.partialorder %v2701, inf
      %v3014 = vsel %vm3013, %v2701, %v3012
      %vm3015 = vcmp.eq.f32.partialorder %v2701, 0.0
      %v3016 = vand.u32 %v2701, 2147483648
      %v3017 = vsel %vm3015, %v3016, %v3014
      %v3018 = vrsqrt.pop %v2702
      %v3019 = vmul.f32 %v2702, %v3018
      %vm3020 = vcmp.eq.f32.partialorder %v2702, inf
      %v3021 = vsel %vm3020, %v2702, %v3019
      %vm3022 = vcmp.eq.f32.partialorder %v2702, 0.0
      %v3023 = vand.u32 %v2702, 2147483648
      %v3024 = vsel %vm3022, %v3023, %v3021
      %v3025 = vrsqrt.pop %v2703
      %v3026 = vmul.f32 %v2703, %v3025
      %vm3027 = vcmp.eq.f32.partialorder %v2703, inf
      %v3028 = vsel %vm3027, %v2703, %v3026
      %vm3029 = vcmp.eq.f32.partialorder %v2703, 0.0
      %v3030 = vand.u32 %v2703, 2147483648
      %v3031 = vsel %vm3029, %v3030, %v3028
      %v3032 = vrsqrt.pop %v2704
      %v3033 = vmul.f32 %v2704, %v3032
      %vm3034 = vcmp.eq.f32.partialorder %v2704, inf
      %v3035 = vsel %vm3034, %v2704, %v3033
      %vm3036 = vcmp.eq.f32.partialorder %v2704, 0.0
      %v3037 = vand.u32 %v2704, 2147483648
      %v3038 = vsel %vm3036, %v3037, %v3035
      %v3039 = vrsqrt.pop %v2705
      %v3040 = vmul.f32 %v2705, %v3039
      %vm3041 = vcmp.eq.f32.partialorder %v2705, inf
      %v3042 = vsel %vm3041, %v2705, %v3040
      %vm3043 = vcmp.eq.f32.partialorder %v2705, 0.0
      %v3044 = vand.u32 %v2705, 2147483648
      %v3045 = vsel %vm3043, %v3044, %v3042
      %v3046 = vrsqrt.pop %v2706
      %v3047 = vmul.f32 %v2706, %v3046
      %vm3048 = vcmp.eq.f32.partialorder %v2706, inf
      %v3049 = vsel %vm3048, %v2706, %v3047
      %vm3050 = vcmp.eq.f32.partialorder %v2706, 0.0
      %v3051 = vand.u32 %v2706, 2147483648
      %v3052 = vsel %vm3050, %v3051, %v3049
      %v3053 = vrsqrt.pop %v2707
      %v3054 = vmul.f32 %v2707, %v3053
      %vm3055 = vcmp.eq.f32.partialorder %v2707, inf
      %v3056 = vsel %vm3055, %v2707, %v3054
      %vm3057 = vcmp.eq.f32.partialorder %v2707, 0.0
      %v3058 = vand.u32 %v2707, 2147483648
      %v3059 = vsel %vm3057, %v3058, %v3056
      %v3060 = vrsqrt.pop %v2708
      %v3061 = vmul.f32 %v2708, %v3060
      %vm3062 = vcmp.eq.f32.partialorder %v2708, inf
      %v3063 = vsel %vm3062, %v2708, %v3061
      %vm3064 = vcmp.eq.f32.partialorder %v2708, 0.0
      %v3065 = vand.u32 %v2708, 2147483648
      %v3066 = vsel %vm3064, %v3065, %v3063
      %v3067 = vrsqrt.pop %v2709
      %v3068 = vmul.f32 %v2709, %v3067
      %vm3069 = vcmp.eq.f32.partialorder %v2709, inf
      %v3070 = vsel %vm3069, %v2709, %v3068
      %vm3071 = vcmp.eq.f32.partialorder %v2709, 0.0
      %v3072 = vand.u32 %v2709, 2147483648
      %v3073 = vsel %vm3071, %v3072, %v3070
      %v3074 = vrsqrt.pop %v2710
      %v3075 = vmul.f32 %v2710, %v3074
      %vm3076 = vcmp.eq.f32.partialorder %v2710, inf
      %v3077 = vsel %vm3076, %v2710, %v3075
      %vm3078 = vcmp.eq.f32.partialorder %v2710, 0.0
      %v3079 = vand.u32 %v2710, 2147483648
      %v3080 = vsel %vm3078, %v3079, %v3077
      %v3081 = vrsqrt.pop %v2711
      %v3082 = vmul.f32 %v2711, %v3081
      %vm3083 = vcmp.eq.f32.partialorder %v2711, inf
      %v3084 = vsel %vm3083, %v2711, %v3082
      %vm3085 = vcmp.eq.f32.partialorder %v2711, 0.0
      %v3086 = vand.u32 %v2711, 2147483648
      %v3087 = vsel %vm3085, %v3086, %v3084
      %v3088 = vrsqrt.pop %v2712
      %v3089 = vmul.f32 %v2712, %v3088
      %vm3090 = vcmp.eq.f32.partialorder %v2712, inf
      %v3091 = vsel %vm3090, %v2712, %v3089
      %vm3092 = vcmp.eq.f32.partialorder %v2712, 0.0
      %v3093 = vand.u32 %v2712, 2147483648
      %v3094 = vsel %vm3092, %v3093, %v3091
      %v3095 = vrsqrt.pop %v2713
      %v3096 = vmul.f32 %v2713, %v3095
      %vm3097 = vcmp.eq.f32.partialorder %v2713, inf
      %v3098 = vsel %vm3097, %v2713, %v3096
      %vm3099 = vcmp.eq.f32.partialorder %v2713, 0.0
      %v3100 = vand.u32 %v2713, 2147483648
      %v3101 = vsel %vm3099, %v3100, %v3098
      %v3102 = vrsqrt.pop %v2714
      %v3103 = vmul.f32 %v2714, %v3102
      %vm3104 = vcmp.eq.f32.partialorder %v2714, inf
      %v3105 = vsel %vm3104, %v2714, %v3103
      %vm3106 = vcmp.eq.f32.partialorder %v2714, 0.0
      %v3107 = vand.u32 %v2714, 2147483648
      %v3108 = vsel %vm3106, %v3107, %v3105
      %v3109 = vrsqrt.pop %v2715
      %v3110 = vmul.f32 %v2715, %v3109
      %vm3111 = vcmp.eq.f32.partialorder %v2715, inf
      %v3112 = vsel %vm3111, %v2715, %v3110
      %vm3113 = vcmp.eq.f32.partialorder %v2715, 0.0
      %v3114 = vand.u32 %v2715, 2147483648
      %v3115 = vsel %vm3113, %v3114, %v3112
      %v3116 = vrsqrt.pop %v2716
      %v3117 = vmul.f32 %v2716, %v3116
      %vm3118 = vcmp.eq.f32.partialorder %v2716, inf
      %v3119 = vsel %vm3118, %v2716, %v3117
      %vm3120 = vcmp.eq.f32.partialorder %v2716, 0.0
      %v3121 = vand.u32 %v2716, 2147483648
      %v3122 = vsel %vm3120, %v3121, %v3119
      %v3123 = vrsqrt.pop %v2717
      %v3124 = vmul.f32 %v2717, %v3123
      %vm3125 = vcmp.eq.f32.partialorder %v2717, inf
      %v3126 = vsel %vm3125, %v2717, %v3124
      %vm3127 = vcmp.eq.f32.partialorder %v2717, 0.0
      %v3128 = vand.u32 %v2717, 2147483648
      %v3129 = vsel %vm3127, %v3128, %v3126
      %v3130 = vrsqrt.pop %v2718
      %v3131 = vmul.f32 %v2718, %v3130
      %vm3132 = vcmp.eq.f32.partialorder %v2718, inf
      %v3133 = vsel %vm3132, %v2718, %v3131
      %vm3134 = vcmp.eq.f32.partialorder %v2718, 0.0
      %v3135 = vand.u32 %v2718, 2147483648
      %v3136 = vsel %vm3134, %v3135, %v3133
      %v3137 = vrsqrt.pop %v2719
      %v3138 = vmul.f32 %v2719, %v3137
      %vm3139 = vcmp.eq.f32.partialorder %v2719, inf
      %v3140 = vsel %vm3139, %v2719, %v3138
      %vm3141 = vcmp.eq.f32.partialorder %v2719, 0.0
      %v3142 = vand.u32 %v2719, 2147483648
      %v3143 = vsel %vm3141, %v3142, %v3140
      %v3144 = vrsqrt.pop %v2720
      %v3145 = vmul.f32 %v2720, %v3144
      %vm3146 = vcmp.eq.f32.partialorder %v2720, inf
      %v3147 = vsel %vm3146, %v2720, %v3145
      %vm3148 = vcmp.eq.f32.partialorder %v2720, 0.0
      %v3149 = vand.u32 %v2720, 2147483648
      %v3150 = vsel %vm3148, %v3149, %v3147
      %v3151 = vrsqrt.pop %v2721
      %v3152 = vmul.f32 %v2721, %v3151
      %vm3153 = vcmp.eq.f32.partialorder %v2721, inf
      %v3154 = vsel %vm3153, %v2721, %v3152
      %vm3155 = vcmp.eq.f32.partialorder %v2721, 0.0
      %v3156 = vand.u32 %v2721, 2147483648
      %v3157 = vsel %vm3155, %v3156, %v3154
      %v3158 = vrsqrt.pop %v2722
      %v3159 = vmul.f32 %v2722, %v3158
      %vm3160 = vcmp.eq.f32.partialorder %v2722, inf
      %v3161 = vsel %vm3160, %v2722, %v3159
      %vm3162 = vcmp.eq.f32.partialorder %v2722, 0.0
      %v3163 = vand.u32 %v2722, 2147483648
      %v3164 = vsel %vm3162, %v3163, %v3161
      %v3165 = vrsqrt.pop %v2723
      %v3166 = vmul.f32 %v2723, %v3165
      %vm3167 = vcmp.eq.f32.partialorder %v2723, inf
      %v3168 = vsel %vm3167, %v2723, %v3166
      %vm3169 = vcmp.eq.f32.partialorder %v2723, 0.0
      %v3170 = vand.u32 %v2723, 2147483648
      %v3171 = vsel %vm3169, %v3170, %v3168
      %3172 = vst [vmem:[%s213] sm:$0xff] %v2730
      %3173 = vst [vmem:[%s213 + $0x8] sm:$0xff] %v2737
      %3174 = vst [vmem:[%s213 + $0x10] sm:$0xff] %v2744
      %3175 = vst [vmem:[%s213 + $0x18] sm:$0xff] %v2751
      %3176 = vst [vmem:[%s213 + $0x20] sm:$0xff] %v2758
      %3177 = vst [vmem:[%s213 + $0x28] sm:$0xff] %v2765
      %3178 = vst [vmem:[%s213 + $0x30] sm:$0xff] %v2772
      %3179 = vst [vmem:[%s213 + $0x38] sm:$0xff] %v2779
      %3180 = vst [vmem:[%s213 + $0x40] sm:$0xff] %v2786
      %3181 = vst [vmem:[%s213 + $0x48] sm:$0xff] %v2793
      %3182 = vst [vmem:[%s213 + $0x50] sm:$0xff] %v2800
      %3183 = vst [vmem:[%s213 + $0x58] sm:$0xff] %v2807
      %3184 = vst [vmem:[%s213 + $0x60] sm:$0xff] %v2814
      %3185 = vst [vmem:[%s213 + $0x68] sm:$0xff] %v2821
      %3186 = vst [vmem:[%s213 + $0x70] sm:$0xff] %v2828
      %3187 = vst [vmem:[%s213 + $0x78] sm:$0xff] %v2835
      %3188 = vst [vmem:[%s213 + $0x80] sm:$0xff] %v2842
      %3189 = vst [vmem:[%s213 + $0x88] sm:$0xff] %v2849
      %3190 = vst [vmem:[%s213 + $0x90] sm:$0xff] %v2856
      %3191 = vst [vmem:[%s213 + $0x98] sm:$0xff] %v2863
      %3192 = vst [vmem:[%s213 + $0xa0] sm:$0xff] %v2870
      %3193 = vst [vmem:[%s213 + $0xa8] sm:$0xff] %v2877
      %3194 = vst [vmem:[%s213 + $0xb0] sm:$0xff] %v2884
      %3195 = vst [vmem:[%s213 + $0xb8] sm:$0xff] %v2891
      %3196 = vst [vmem:[%s213 + $0xc0] sm:$0xff] %v2898
      %3197 = vst [vmem:[%s213 + $0xc8] sm:$0xff] %v2905
      %3198 = vst [vmem:[%s213 + $0xd0] sm:$0xff] %v2912
      %3199 = vst [vmem:[%s213 + $0xd8] sm:$0xff] %v2919
      %3200 = vst [vmem:[%s213 + $0xe0] sm:$0xff] %v2926
      %3201 = vst [vmem:[%s213 + $0xe8] sm:$0xff] %v2933
      %3202 = vst [vmem:[%s213 + $0xf0] sm:$0xff] %v2940
      %3203 = vst [vmem:[%s213 + $0xf8] sm:$0xff] %v2947
      %3204 = vst [vmem:[%s213 + $0x100] sm:$0xff] %v2954
      %3205 = vst [vmem:[%s213 + $0x108] sm:$0xff] %v2961
      %3206 = vst [vmem:[%s213 + $0x110] sm:$0xff] %v2968
      %3207 = vst [vmem:[%s213 + $0x118] sm:$0xff] %v2975
      %3208 = vst [vmem:[%s213 + $0x120] sm:$0xff] %v2982
      %3209 = vst [vmem:[%s213 + $0x128] sm:$0xff] %v2989
      %3210 = vst [vmem:[%s213 + $0x130] sm:$0xff] %v2996
      %3211 = vst [vmem:[%s213 + $0x138] sm:$0xff] %v3003
      %3212 = vst [vmem:[%s213 + $0x140] sm:$0xff] %v3010
      %3213 = vst [vmem:[%s213 + $0x148] sm:$0xff] %v3017
      %3214 = vst [vmem:[%s213 + $0x150] sm:$0xff] %v3024
      %3215 = vst [vmem:[%s213 + $0x158] sm:$0xff] %v3031
      %3216 = vst [vmem:[%s213 + $0x160] sm:$0xff] %v3038
      %3217 = vst [vmem:[%s213 + $0x168] sm:$0xff] %v3045
      %3218 = vst [vmem:[%s213 + $0x170] sm:$0xff] %v3052
      %3219 = vst [vmem:[%s213 + $0x178] sm:$0xff] %v3059
      %3220 = vst [vmem:[%s213 + $0x180] sm:$0xff] %v3066
      %3221 = vst [vmem:[%s213 + $0x188] sm:$0xff] %v3073
      %3222 = vst [vmem:[%s213 + $0x190] sm:$0xff] %v3080
      %3223 = vst [vmem:[%s213 + $0x198] sm:$0xff] %v3087
      %3224 = vst [vmem:[%s213 + $0x1a0] sm:$0xff] %v3094
      %3225 = vst [vmem:[%s213 + $0x1a8] sm:$0xff] %v3101
      %3226 = vst [vmem:[%s213 + $0x1b0] sm:$0xff] %v3108
      %3227 = vst [vmem:[%s213 + $0x1b8] sm:$0xff] %v3115
      %3228 = vst [vmem:[%s213 + $0x1c0] sm:$0xff] %v3122
      %3229 = vst [vmem:[%s213 + $0x1c8] sm:$0xff] %v3129
      %3230 = vst [vmem:[%s213 + $0x1d0] sm:$0xff] %v3136
      %3231 = vst [vmem:[%s213 + $0x1d8] sm:$0xff] %v3143
      %3232 = vst [vmem:[%s213 + $0x1e0] sm:$0xff] %v3150
      %3233 = vst [vmem:[%s213 + $0x1e8] sm:$0xff] %v3157
      %3234 = vst [vmem:[%s213 + $0x1f0] sm:$0xff] %v3164
      %3235 = vst [vmem:[%s213 + $0x1f8] sm:$0xff] %v3171
      %v3236 = vand.u32 2147483647, %v2404
      %v3237 = vand.u32 2147483647, %v2405
      %v3238 = vand.u32 2147483647, %v2408
      %v3239 = vand.u32 2147483647, %v2409
      %v3240 = vand.u32 2147483647, %v2412
      %v3241 = vand.u32 2147483647, %v2413
      %v3242 = vand.u32 2147483647, %v2416
      %v3243 = vand.u32 2147483647, %v2417
      %v3244 = vand.u32 2147483647, %v2420
      %v3245 = vand.u32 2147483647, %v2421
      %v3246 = vand.u32 2147483647, %v2424
      %v3247 = vand.u32 2147483647, %v2425
      %v3248 = vand.u32 2147483647, %v2428
      %v3249 = vand.u32 2147483647, %v2429
      %v3250 = vand.u32 2147483647, %v2432
      %v3251 = vand.u32 2147483647, %v2433
      %v3252 = vand.u32 2147483647, %v2436
      %v3253 = vand.u32 2147483647, %v2437
      %v3254 = vand.u32 2147483647, %v2440
      %v3255 = vand.u32 2147483647, %v2441
      %v3256 = vand.u32 2147483647, %v2444
      %v3257 = vand.u32 2147483647, %v2445
      %v3258 = vand.u32 2147483647, %v2448
      %v3259 = vand.u32 2147483647, %v2449
      %v3260 = vand.u32 2147483647, %v2452
      %v3261 = vand.u32 2147483647, %v2453
      %v3262 = vand.u32 2147483647, %v2456
      %v3263 = vand.u32 2147483647, %v2457
      %v3264 = vand.u32 2147483647, %v2460
      %v3265 = vand.u32 2147483647, %v2461
      %v3266 = vand.u32 2147483647, %v2464
      %v3267 = vand.u32 2147483647, %v2465
      %v3268 = vand.u32 2147483647, %v2468
      %v3269 = vand.u32 2147483647, %v2469
      %v3270 = vand.u32 2147483647, %v2472
      %v3271 = vand.u32 2147483647, %v2473
      %v3272 = vand.u32 2147483647, %v2476
      %v3273 = vand.u32 2147483647, %v2477
      %v3274 = vand.u32 2147483647, %v2480
      %v3275 = vand.u32 2147483647, %v2481
      %v3276 = vand.u32 2147483647, %v2484
      %v3277 = vand.u32 2147483647, %v2485
      %v3278 = vand.u32 2147483647, %v2488
      %v3279 = vand.u32 2147483647, %v2489
      %v3280 = vand.u32 2147483647, %v2492
      %v3281 = vand.u32 2147483647, %v2493
      %v3282 = vand.u32 2147483647, %v2496
      %v3283 = vand.u32 2147483647, %v2497
      %v3284 = vand.u32 2147483647, %v2500
      %v3285 = vand.u32 2147483647, %v2501
      %v3286 = vand.u32 2147483647, %v2504
      %v3287 = vand.u32 2147483647, %v2505
      %v3288 = vand.u32 2147483647, %v2508
      %v3289 = vand.u32 2147483647, %v2509
      %v3290 = vand.u32 2147483647, %v2512
      %v3291 = vand.u32 2147483647, %v2513
      %v3292 = vand.u32 2147483647, %v2516
      %v3293 = vand.u32 2147483647, %v2517
      %v3294 = vand.u32 2147483647, %v2520
      %v3295 = vand.u32 2147483647, %v2521
      %v3296 = vand.u32 2147483647, %v2524
      %v3297 = vand.u32 2147483647, %v2525
      %v3298 = vand.u32 2147483647, %v2528
      %v3299 = vand.u32 2147483647, %v2529
      %v3300 = vand.u32 2147483647, %v2406
      %v3301 = vand.u32 2147483647, %v2407
      %v3302 = vand.u32 2147483647, %v2410
      %v3303 = vand.u32 2147483647, %v2411
      %v3304 = vand.u32 2147483647, %v2414
      %v3305 = vand.u32 2147483647, %v2415
      %v3306 = vand.u32 2147483647, %v2418
      %v3307 = vand.u32 2147483647, %v2419
      %v3308 = vand.u32 2147483647, %v2422
      %v3309 = vand.u32 2147483647, %v2423
      %v3310 = vand.u32 2147483647, %v2426
      %v3311 = vand.u32 2147483647, %v2427
      %v3312 = vand.u32 2147483647, %v2430
      %v3313 = vand.u32 2147483647, %v2431
      %v3314 = vand.u32 2147483647, %v2434
      %v3315 = vand.u32 2147483647, %v2435
      %v3316 = vand.u32 2147483647, %v2438
      %v3317 = vand.u32 2147483647, %v2439
      %v3318 = vand.u32 2147483647, %v2442
      %v3319 = vand.u32 2147483647, %v2443
      %v3320 = vand.u32 2147483647, %v2446
      %v3321 = vand.u32 2147483647, %v2447
      %v3322 = vand.u32 2147483647, %v2450
      %v3323 = vand.u32 2147483647, %v2451
      %v3324 = vand.u32 2147483647, %v2454
      %v3325 = vand.u32 2147483647, %v2455
      %v3326 = vand.u32 2147483647, %v2458
      %v3327 = vand.u32 2147483647, %v2459
      %v3328 = vand.u32 2147483647, %v2462
      %v3329 = vand.u32 2147483647, %v2463
      %v3330 = vand.u32 2147483647, %v2466
      %v3331 = vand.u32 2147483647, %v2467
      %v3332 = vand.u32 2147483647, %v2470
      %v3333 = vand.u32 2147483647, %v2471
      %v3334 = vand.u32 2147483647, %v2474
      %v3335 = vand.u32 2147483647, %v2475
      %v3336 = vand.u32 2147483647, %v2478
      %v3337 = vand.u32 2147483647, %v2479
      %v3338 = vand.u32 2147483647, %v2482
      %v3339 = vand.u32 2147483647, %v2483
      %v3340 = vand.u32 2147483647, %v2486
      %v3341 = vand.u32 2147483647, %v2487
      %v3342 = vand.u32 2147483647, %v2490
      %v3343 = vand.u32 2147483647, %v2491
      %v3344 = vand.u32 2147483647, %v2494
      %v3345 = vand.u32 2147483647, %v2495
      %v3346 = vand.u32 2147483647, %v2498
      %v3347 = vand.u32 2147483647, %v2499
      %v3348 = vand.u32 2147483647, %v2502
      %v3349 = vand.u32 2147483647, %v2503
      %v3350 = vand.u32 2147483647, %v2506
      %v3351 = vand.u32 2147483647, %v2507
      %v3352 = vand.u32 2147483647, %v2510
      %v3353 = vand.u32 2147483647, %v2511
      %v3354 = vand.u32 2147483647, %v2514
      %v3355 = vand.u32 2147483647, %v2515
      %v3356 = vand.u32 2147483647, %v2518
      %v3357 = vand.u32 2147483647, %v2519
      %v3358 = vand.u32 2147483647, %v2522
      %v3359 = vand.u32 2147483647, %v2523
      %v3360 = vand.u32 2147483647, %v2526
      %v3361 = vand.u32 2147483647, %v2527
      %v3362 = vand.u32 2147483647, %v2530
      %v3363 = vand.u32 2147483647, %v2531
      %vm3364 = vcmp.eq.f32.partialorder %v3236, 0.0
      %vm3365 = vcmp.eq.f32.partialorder %v3237, 0.0
      %vm3366 = vcmp.eq.f32.partialorder %v3238, 0.0
      %vm3367 = vcmp.eq.f32.partialorder %v3239, 0.0
      %vm3368 = vcmp.eq.f32.partialorder %v3240, 0.0
      %vm3369 = vcmp.eq.f32.partialorder %v3241, 0.0
      %vm3370 = vcmp.eq.f32.partialorder %v3242, 0.0
      %vm3371 = vcmp.eq.f32.partialorder %v3243, 0.0
      %vm3372 = vcmp.eq.f32.partialorder %v3244, 0.0
      %vm3373 = vcmp.eq.f32.partialorder %v3245, 0.0
      %vm3374 = vcmp.eq.f32.partialorder %v3246, 0.0
      %vm3375 = vcmp.eq.f32.partialorder %v3247, 0.0
      %vm3376 = vcmp.eq.f32.partialorder %v3248, 0.0
      %vm3377 = vcmp.eq.f32.partialorder %v3249, 0.0
      %vm3378 = vcmp.eq.f32.partialorder %v3250, 0.0
      %vm3379 = vcmp.eq.f32.partialorder %v3251, 0.0
      %vm3380 = vcmp.eq.f32.partialorder %v3252, 0.0
      %vm3381 = vcmp.eq.f32.partialorder %v3253, 0.0
      %vm3382 = vcmp.eq.f32.partialorder %v3254, 0.0
      %vm3383 = vcmp.eq.f32.partialorder %v3255, 0.0
      %vm3384 = vcmp.eq.f32.partialorder %v3256, 0.0
      %vm3385 = vcmp.eq.f32.partialorder %v3257, 0.0
      %vm3386 = vcmp.eq.f32.partialorder %v3258, 0.0
      %vm3387 = vcmp.eq.f32.partialorder %v3259, 0.0
      %vm3388 = vcmp.eq.f32.partialorder %v3260, 0.0
      %vm3389 = vcmp.eq.f32.partialorder %v3261, 0.0
      %vm3390 = vcmp.eq.f32.partialorder %v3262, 0.0
      %vm3391 = vcmp.eq.f32.partialorder %v3263, 0.0
      %vm3392 = vcmp.eq.f32.partialorder %v3264, 0.0
      %vm3393 = vcmp.eq.f32.partialorder %v3265, 0.0
      %vm3394 = vcmp.eq.f32.partialorder %v3266, 0.0
      %vm3395 = vcmp.eq.f32.partialorder %v3267, 0.0
      %vm3396 = vcmp.eq.f32.partialorder %v3268, 0.0
      %vm3397 = vcmp.eq.f32.partialorder %v3269, 0.0
      %vm3398 = vcmp.eq.f32.partialorder %v3270, 0.0
      %vm3399 = vcmp.eq.f32.partialorder %v3271, 0.0
      %vm3400 = vcmp.eq.f32.partialorder %v3272, 0.0
      %vm3401 = vcmp.eq.f32.partialorder %v3273, 0.0
      %vm3402 = vcmp.eq.f32.partialorder %v3274, 0.0
      %vm3403 = vcmp.eq.f32.partialorder %v3275, 0.0
      %vm3404 = vcmp.eq.f32.partialorder %v3276, 0.0
      %vm3405 = vcmp.eq.f32.partialorder %v3277, 0.0
      %vm3406 = vcmp.eq.f32.partialorder %v3278, 0.0
      %vm3407 = vcmp.eq.f32.partialorder %v3279, 0.0
      %vm3408 = vcmp.eq.f32.partialorder %v3280, 0.0
      %vm3409 = vcmp.eq.f32.partialorder %v3281, 0.0
      %vm3410 = vcmp.eq.f32.partialorder %v3282, 0.0
      %vm3411 = vcmp.eq.f32.partialorder %v3283, 0.0
      %vm3412 = vcmp.eq.f32.partialorder %v3284, 0.0
      %vm3413 = vcmp.eq.f32.partialorder %v3285, 0.0
      %vm3414 = vcmp.eq.f32.partialorder %v3286, 0.0
      %vm3415 = vcmp.eq.f32.partialorder %v3287, 0.0
      %vm3416 = vcmp.eq.f32.partialorder %v3288, 0.0
      %vm3417 = vcmp.eq.f32.partialorder %v3289, 0.0
      %vm3418 = vcmp.eq.f32.partialorder %v3290, 0.0
      %vm3419 = vcmp.eq.f32.partialorder %v3291, 0.0
      %vm3420 = vcmp.eq.f32.partialorder %v3292, 0.0
      %vm3421 = vcmp.eq.f32.partialorder %v3293, 0.0
      %vm3422 = vcmp.eq.f32.partialorder %v3294, 0.0
      %vm3423 = vcmp.eq.f32.partialorder %v3295, 0.0
      %vm3424 = vcmp.eq.f32.partialorder %v3296, 0.0
      %vm3425 = vcmp.eq.f32.partialorder %v3297, 0.0
      %vm3426 = vcmp.eq.f32.partialorder %v3298, 0.0
      %vm3427 = vcmp.eq.f32.partialorder %v3299, 0.0
      %v3428 = vsel %vm3364, 1.0, %v3236
      %v3429 = vsel %vm3365, 1.0, %v3237
      %v3430 = vsel %vm3366, 1.0, %v3238
      %v3431 = vsel %vm3367, 1.0, %v3239
      %v3432 = vsel %vm3368, 1.0, %v3240
      %v3433 = vsel %vm3369, 1.0, %v3241
      %v3434 = vsel %vm3370, 1.0, %v3242
      %v3435 = vsel %vm3371, 1.0, %v3243
      %v3436 = vsel %vm3372, 1.0, %v3244
      %v3437 = vsel %vm3373, 1.0, %v3245
      %v3438 = vsel %vm3374, 1.0, %v3246
      %v3439 = vsel %vm3375, 1.0, %v3247
      %v3440 = vsel %vm3376, 1.0, %v3248
      %v3441 = vsel %vm3377, 1.0, %v3249
      %v3442 = vsel %vm3378, 1.0, %v3250
      %v3443 = vsel %vm3379, 1.0, %v3251
      %v3444 = vsel %vm3380, 1.0, %v3252
      %v3445 = vsel %vm3381, 1.0, %v3253
      %v3446 = vsel %vm3382, 1.0, %v3254
      %v3447 = vsel %vm3383, 1.0, %v3255
      %v3448 = vsel %vm3384, 1.0, %v3256
      %v3449 = vsel %vm3385, 1.0, %v3257
      %v3450 = vsel %vm3386, 1.0, %v3258
      %v3451 = vsel %vm3387, 1.0, %v3259
      %v3452 = vsel %vm3388, 1.0, %v3260
      %v3453 = vsel %vm3389, 1.0, %v3261
      %v3454 = vsel %vm3390, 1.0, %v3262
      %v3455 = vsel %vm3391, 1.0, %v3263
      %v3456 = vsel %vm3392, 1.0, %v3264
      %v3457 = vsel %vm3393, 1.0, %v3265
      %v3458 = vsel %vm3394, 1.0, %v3266
      %v3459 = vsel %vm3395, 1.0, %v3267
      %v3460 = vsel %vm3396, 1.0, %v3268
      %v3461 = vsel %vm3397, 1.0, %v3269
      %v3462 = vsel %vm3398, 1.0, %v3270
      %v3463 = vsel %vm3399, 1.0, %v3271
      %v3464 = vsel %vm3400, 1.0, %v3272
      %v3465 = vsel %vm3401, 1.0, %v3273
      %v3466 = vsel %vm3402, 1.0, %v3274
      %v3467 = vsel %vm3403, 1.0, %v3275
      %v3468 = vsel %vm3404, 1.0, %v3276
      %v3469 = vsel %vm3405, 1.0, %v3277
      %v3470 = vsel %vm3406, 1.0, %v3278
      %v3471 = vsel %vm3407, 1.0, %v3279
      %v3472 = vsel %vm3408, 1.0, %v3280
      %v3473 = vsel %vm3409, 1.0, %v3281
      %v3474 = vsel %vm3410, 1.0, %v3282
      %v3475 = vsel %vm3411, 1.0, %v3283
      %v3476 = vsel %vm3412, 1.0, %v3284
      %v3477 = vsel %vm3413, 1.0, %v3285
      %v3478 = vsel %vm3414, 1.0, %v3286
      %v3479 = vsel %vm3415, 1.0, %v3287
      %v3480 = vsel %vm3416, 1.0, %v3288
      %v3481 = vsel %vm3417, 1.0, %v3289
      %v3482 = vsel %vm3418, 1.0, %v3290
      %v3483 = vsel %vm3419, 1.0, %v3291
      %v3484 = vsel %vm3420, 1.0, %v3292
      %v3485 = vsel %vm3421, 1.0, %v3293
      %v3486 = vsel %vm3422, 1.0, %v3294
      %v3487 = vsel %vm3423, 1.0, %v3295
      %v3488 = vsel %vm3424, 1.0, %v3296
      %v3489 = vsel %vm3425, 1.0, %v3297
      %v3490 = vsel %vm3426, 1.0, %v3298
      %v3491 = vsel %vm3427, 1.0, %v3299
      %v3492 = vrcp.pop %v3428
      %v3493 = vmul.f32 %v3300, %v3492
      %v3494 = vrcp.pop %v3429
      %v3495 = vmul.f32 %v3301, %v3494
      %v3496 = vrcp.pop %v3430
      %v3497 = vmul.f32 %v3302, %v3496
      %v3498 = vrcp.pop %v3431
      %v3499 = vmul.f32 %v3303, %v3498
      %v3500 = vrcp.pop %v3432
      %v3501 = vmul.f32 %v3304, %v3500
      %v3502 = vrcp.pop %v3433
      %v3503 = vmul.f32 %v3305, %v3502
      %v3504 = vrcp.pop %v3434
      %v3505 = vmul.f32 %v3306, %v3504
      %v3506 = vrcp.pop %v3435
      %v3507 = vmul.f32 %v3307, %v3506
      %v3508 = vrcp.pop %v3436
      %v3509 = vmul.f32 %v3308, %v3508
      %v3510 = vrcp.pop %v3437
      %v3511 = vmul.f32 %v3309, %v3510
      %v3512 = vrcp.pop %v3438
      %v3513 = vmul.f32 %v3310, %v3512
      %v3514 = vrcp.pop %v3439
      %v3515 = vmul.f32 %v3311, %v3514
      %v3516 = vrcp.pop %v3440
      %v3517 = vmul.f32 %v3312, %v3516
      %v3518 = vrcp.pop %v3441
      %v3519 = vmul.f32 %v3313, %v3518
      %v3520 = vrcp.pop %v3442
      %v3521 = vmul.f32 %v3314, %v3520
      %v3522 = vrcp.pop %v3443
      %v3523 = vmul.f32 %v3315, %v3522
      %v3524 = vrcp.pop %v3444
      %v3525 = vmul.f32 %v3316, %v3524
      %v3526 = vrcp.pop %v3445
      %v3527 = vmul.f32 %v3317, %v3526
      %v3528 = vrcp.pop %v3446
      %v3529 = vmul.f32 %v3318, %v3528
      %v3530 = vrcp.pop %v3447
      %v3531 = vmul.f32 %v3319, %v3530
      %v3532 = vrcp.pop %v3448
      %v3533 = vmul.f32 %v3320, %v3532
      %v3534 = vrcp.pop %v3449
      %v3535 = vmul.f32 %v3321, %v3534
      %v3536 = vrcp.pop %v3450
      %v3537 = vmul.f32 %v3322, %v3536
      %v3538 = vrcp.pop %v3451
      %v3539 = vmul.f32 %v3323, %v3538
      %v3540 = vrcp.pop %v3452
      %v3541 = vmul.f32 %v3324, %v3540
      %v3542 = vrcp.pop %v3453
      %v3543 = vmul.f32 %v3325, %v3542
      %v3544 = vrcp.pop %v3454
      %v3545 = vmul.f32 %v3326, %v3544
      %v3546 = vrcp.pop %v3455
      %v3547 = vmul.f32 %v3327, %v3546
      %v3548 = vrcp.pop %v3456
      %v3549 = vmul.f32 %v3328, %v3548
      %v3550 = vrcp.pop %v3457
      %v3551 = vmul.f32 %v3329, %v3550
      %v3552 = vrcp.pop %v3458
      %v3553 = vmul.f32 %v3330, %v3552
      %v3554 = vrcp.pop %v3459
      %v3555 = vmul.f32 %v3331, %v3554
      %v3556 = vrcp.pop %v3460
      %v3557 = vmul.f32 %v3332, %v3556
      %v3558 = vrcp.pop %v3461
      %v3559 = vmul.f32 %v3333, %v3558
      %v3560 = vrcp.pop %v3462
      %v3561 = vmul.f32 %v3334, %v3560
      %v3562 = vrcp.pop %v3463
      %v3563 = vmul.f32 %v3335, %v3562
      %v3564 = vrcp.pop %v3464
      %v3565 = vmul.f32 %v3336, %v3564
      %v3566 = vrcp.pop %v3465
      %v3567 = vmul.f32 %v3337, %v3566
      %v3568 = vrcp.pop %v3466
      %v3569 = vmul.f32 %v3338, %v3568
      %v3570 = vrcp.pop %v3467
      %v3571 = vmul.f32 %v3339, %v3570
      %v3572 = vrcp.pop %v3468
      %v3573 = vmul.f32 %v3340, %v3572
      %v3574 = vrcp.pop %v3469
      %v3575 = vmul.f32 %v3341, %v3574
      %v3576 = vrcp.pop %v3470
      %v3577 = vmul.f32 %v3342, %v3576
      %v3578 = vrcp.pop %v3471
      %v3579 = vmul.f32 %v3343, %v3578
      %v3580 = vrcp.pop %v3472
      %v3581 = vmul.f32 %v3344, %v3580
      %v3582 = vrcp.pop %v3473
      %v3583 = vmul.f32 %v3345, %v3582
      %v3584 = vrcp.pop %v3474
      %v3585 = vmul.f32 %v3346, %v3584
      %v3586 = vrcp.pop %v3475
      %v3587 = vmul.f32 %v3347, %v3586
      %v3588 = vrcp.pop %v3476
      %v3589 = vmul.f32 %v3348, %v3588
      %v3590 = vrcp.pop %v3477
      %v3591 = vmul.f32 %v3349, %v3590
      %v3592 = vrcp.pop %v3478
      %v3593 = vmul.f32 %v3350, %v3592
      %v3594 = vrcp.pop %v3479
      %v3595 = vmul.f32 %v3351, %v3594
      %v3596 = vrcp.pop %v3480
      %v3597 = vmul.f32 %v3352, %v3596
      %v3598 = vrcp.pop %v3481
      %v3599 = vmul.f32 %v3353, %v3598
      %v3600 = vrcp.pop %v3482
      %v3601 = vmul.f32 %v3354, %v3600
      %v3602 = vrcp.pop %v3483
      %v3603 = vmul.f32 %v3355, %v3602
      %v3604 = vrcp.pop %v3484
      %v3605 = vmul.f32 %v3356, %v3604
      %v3606 = vrcp.pop %v3485
      %v3607 = vmul.f32 %v3357, %v3606
      %v3608 = vrcp.pop %v3486
      %v3609 = vmul.f32 %v3358, %v3608
      %v3610 = vrcp.pop %v3487
      %v3611 = vmul.f32 %v3359, %v3610
      %v3612 = vrcp.pop %v3488
      %v3613 = vmul.f32 %v3360, %v3612
      %v3614 = vrcp.pop %v3489
      %v3615 = vmul.f32 %v3361, %v3614
      %v3616 = vrcp.pop %v3490
      %v3617 = vmul.f32 %v3362, %v3616
      %v3618 = vrcp.pop %v3491
      %v3619 = vmul.f32 %v3363, %v3618
      %vm3620 = vcmp.gt.f32.partialorder %v3493, 2.4142137
      %vm3621 = vcmp.gt.f32.partialorder %v3495, 2.4142137
      %vm3622 = vcmp.gt.f32.partialorder %v3497, 2.4142137
      %vm3623 = vcmp.gt.f32.partialorder %v3499, 2.4142137
      %vm3624 = vcmp.gt.f32.partialorder %v3501, 2.4142137
      %vm3625 = vcmp.gt.f32.partialorder %v3503, 2.4142137
      %vm3626 = vcmp.gt.f32.partialorder %v3505, 2.4142137
      %vm3627 = vcmp.gt.f32.partialorder %v3507, 2.4142137
      %vm3628 = vcmp.gt.f32.partialorder %v3509, 2.4142137
      %vm3629 = vcmp.gt.f32.partialorder %v3511, 2.4142137
      %vm3630 = vcmp.gt.f32.partialorder %v3513, 2.4142137
      %vm3631 = vcmp.gt.f32.partialorder %v3515, 2.4142137
      %vm3632 = vcmp.gt.f32.partialorder %v3517, 2.4142137
      %vm3633 = vcmp.gt.f32.partialorder %v3519, 2.4142137
      %vm3634 = vcmp.gt.f32.partialorder %v3521, 2.4142137
      %vm3635 = vcmp.gt.f32.partialorder %v3523, 2.4142137
      %vm3636 = vcmp.gt.f32.partialorder %v3525, 2.4142137
      %vm3637 = vcmp.gt.f32.partialorder %v3527, 2.4142137
      %vm3638 = vcmp.gt.f32.partialorder %v3529, 2.4142137
      %vm3639 = vcmp.gt.f32.partialorder %v3531, 2.4142137
      %vm3640 = vcmp.gt.f32.partialorder %v3533, 2.4142137
      %vm3641 = vcmp.gt.f32.partialorder %v3535, 2.4142137
      %vm3642 = vcmp.gt.f32.partialorder %v3537, 2.4142137
      %vm3643 = vcmp.gt.f32.partialorder %v3539, 2.4142137
      %vm3644 = vcmp.gt.f32.partialorder %v3541, 2.4142137
      %vm3645 = vcmp.gt.f32.partialorder %v3543, 2.4142137
      %vm3646 = vcmp.gt.f32.partialorder %v3545, 2.4142137
      %vm3647 = vcmp.gt.f32.partialorder %v3547, 2.4142137
      %vm3648 = vcmp.gt.f32.partialorder %v3549, 2.4142137
      %vm3649 = vcmp.gt.f32.partialorder %v3551, 2.4142137
      %vm3650 = vcmp.gt.f32.partialorder %v3553, 2.4142137
      %vm3651 = vcmp.gt.f32.partialorder %v3555, 2.4142137
      %vm3652 = vcmp.gt.f32.partialorder %v3557, 2.4142137
      %vm3653 = vcmp.gt.f32.partialorder %v3559, 2.4142137
      %vm3654 = vcmp.gt.f32.partialorder %v3561, 2.4142137
      %vm3655 = vcmp.gt.f32.partialorder %v3563, 2.4142137
      %vm3656 = vcmp.gt.f32.partialorder %v3565, 2.4142137
      %vm3657 = vcmp.gt.f32.partialorder %v3567, 2.4142137
      %vm3658 = vcmp.gt.f32.partialorder %v3569, 2.4142137
      %vm3659 = vcmp.gt.f32.partialorder %v3571, 2.4142137
      %vm3660 = vcmp.gt.f32.partialorder %v3573, 2.4142137
      %vm3661 = vcmp.gt.f32.partialorder %v3575, 2.4142137
      %vm3662 = vcmp.gt.f32.partialorder %v3577, 2.4142137
      %vm3663 = vcmp.gt.f32.partialorder %v3579, 2.4142137
      %vm3664 = vcmp.gt.f32.partialorder %v3581, 2.4142137
      %vm3665 = vcmp.gt.f32.partialorder %v3583, 2.4142137
      %vm3666 = vcmp.gt.f32.partialorder %v3585, 2.4142137
      %vm3667 = vcmp.gt.f32.partialorder %v3587, 2.4142137
      %vm3668 = vcmp.gt.f32.partialorder %v3589, 2.4142137
      %vm3669 = vcmp.gt.f32.partialorder %v3591, 2.4142137
      %vm3670 = vcmp.gt.f32.partialorder %v3593, 2.4142137
      %vm3671 = vcmp.gt.f32.partialorder %v3595, 2.4142137
      %vm3672 = vcmp.gt.f32.partialorder %v3597, 2.4142137
      %vm3673 = vcmp.gt.f32.partialorder %v3599, 2.4142137
      %vm3674 = vcmp.gt.f32.partialorder %v3601, 2.4142137
      %vm3675 = vcmp.gt.f32.partialorder %v3603, 2.4142137
      %vm3676 = vcmp.gt.f32.partialorder %v3605, 2.4142137
      %vm3677 = vcmp.gt.f32.partialorder %v3607, 2.4142137
      %vm3678 = vcmp.gt.f32.partialorder %v3609, 2.4142137
      %vm3679 = vcmp.gt.f32.partialorder %v3611, 2.4142137
      %vm3680 = vcmp.gt.f32.partialorder %v3613, 2.4142137
      %vm3681 = vcmp.gt.f32.partialorder %v3615, 2.4142137
      %vm3682 = vcmp.gt.f32.partialorder %v3617, 2.4142137
      %vm3683 = vcmp.gt.f32.partialorder %v3619, 2.4142137
      %vm3684 = vcmp.gt.f32.partialorder %v3493, 0.41421357
      %vm3685 = vcmp.gt.f32.partialorder %v3495, 0.41421357
      %vm3686 = vcmp.gt.f32.partialorder %v3497, 0.41421357
      %vm3687 = vcmp.gt.f32.partialorder %v3499, 0.41421357
      %vm3688 = vcmp.gt.f32.partialorder %v3501, 0.41421357
      %vm3689 = vcmp.gt.f32.partialorder %v3503, 0.41421357
      %vm3690 = vcmp.gt.f32.partialorder %v3505, 0.41421357
      %vm3691 = vcmp.gt.f32.partialorder %v3507, 0.41421357
      %vm3692 = vcmp.gt.f32.partialorder %v3509, 0.41421357
      %vm3693 = vcmp.gt.f32.partialorder %v3511, 0.41421357
      %vm3694 = vcmp.gt.f32.partialorder %v3513, 0.41421357
      %vm3695 = vcmp.gt.f32.partialorder %v3515, 0.41421357
      %vm3696 = vcmp.gt.f32.partialorder %v3517, 0.41421357
      %vm3697 = vcmp.gt.f32.partialorder %v3519, 0.41421357
      %vm3698 = vcmp.gt.f32.partialorder %v3521, 0.41421357
      %vm3699 = vcmp.gt.f32.partialorder %v3523, 0.41421357
      %vm3700 = vcmp.gt.f32.partialorder %v3525, 0.41421357
      %vm3701 = vcmp.gt.f32.partialorder %v3527, 0.41421357
      %vm3702 = vcmp.gt.f32.partialorder %v3529, 0.41421357
      %vm3703 = vcmp.gt.f32.partialorder %v3531, 0.41421357
      %vm3704 = vcmp.gt.f32.partialorder %v3533, 0.41421357
      %vm3705 = vcmp.gt.f32.partialorder %v3535, 0.41421357
      %vm3706 = vcmp.gt.f32.partialorder %v3537, 0.41421357
      %vm3707 = vcmp.gt.f32.partialorder %v3539, 0.41421357
      %vm3708 = vcmp.gt.f32.partialorder %v3541, 0.41421357
      %vm3709 = vcmp.gt.f32.partialorder %v3543, 0.41421357
      %vm3710 = vcmp.gt.f32.partialorder %v3545, 0.41421357
      %vm3711 = vcmp.gt.f32.partialorder %v3547, 0.41421357
      %vm3712 = vcmp.gt.f32.partialorder %v3549, 0.41421357
      %vm3713 = vcmp.gt.f32.partialorder %v3551, 0.41421357
      %vm3714 = vcmp.gt.f32.partialorder %v3553, 0.41421357
      %vm3715 = vcmp.gt.f32.partialorder %v3555, 0.41421357
      %vm3716 = vcmp.gt.f32.partialorder %v3557, 0.41421357
      %vm3717 = vcmp.gt.f32.partialorder %v3559, 0.41421357
      %vm3718 = vcmp.gt.f32.partialorder %v3561, 0.41421357
      %vm3719 = vcmp.gt.f32.partialorder %v3563, 0.41421357
      %vm3720 = vcmp.gt.f32.partialorder %v3565, 0.41421357
      %vm3721 = vcmp.gt.f32.partialorder %v3567, 0.41421357
      %vm3722 = vcmp.gt.f32.partialorder %v3569, 0.41421357
      %vm3723 = vcmp.gt.f32.partialorder %v3571, 0.41421357
      %vm3724 = vcmp.gt.f32.partialorder %v3573, 0.41421357
      %vm3725 = vcmp.gt.f32.partialorder %v3575, 0.41421357
      %vm3726 = vcmp.gt.f32.partialorder %v3577, 0.41421357
      %vm3727 = vcmp.gt.f32.partialorder %v3579, 0.41421357
      %vm3728 = vcmp.gt.f32.partialorder %v3581, 0.41421357
      %vm3729 = vcmp.gt.f32.partialorder %v3583, 0.41421357
      %vm3730 = vcmp.gt.f32.partialorder %v3585, 0.41421357
      %vm3731 = vcmp.gt.f32.partialorder %v3587, 0.41421357
      %vm3732 = vcmp.gt.f32.partialorder %v3589, 0.41421357
      %vm3733 = vcmp.gt.f32.partialorder %v3591, 0.41421357
      %vm3734 = vcmp.gt.f32.partialorder %v3593, 0.41421357
      %vm3735 = vcmp.gt.f32.partialorder %v3595, 0.41421357
      %vm3736 = vcmp.gt.f32.partialorder %v3597, 0.41421357
      %vm3737 = vcmp.gt.f32.partialorder %v3599, 0.41421357
      %vm3738 = vcmp.gt.f32.partialorder %v3601, 0.41421357
      %vm3739 = vcmp.gt.f32.partialorder %v3603, 0.41421357
      %vm3740 = vcmp.gt.f32.partialorder %v3605, 0.41421357
      %vm3741 = vcmp.gt.f32.partialorder %v3607, 0.41421357
      %vm3742 = vcmp.gt.f32.partialorder %v3609, 0.41421357
      %vm3743 = vcmp.gt.f32.partialorder %v3611, 0.41421357
      %vm3744 = vcmp.gt.f32.partialorder %v3613, 0.41421357
      %vm3745 = vcmp.gt.f32.partialorder %v3615, 0.41421357
      %vm3746 = vcmp.gt.f32.partialorder %v3617, 0.41421357
      %vm3747 = vcmp.gt.f32.partialorder %v3619, 0.41421357
      %v3748 = vrcp.pop %v3493
      %v3749 = vmul.f32 -1.0, %v3748
      %v3750 = vrcp.pop %v3495
      %v3751 = vmul.f32 -1.0, %v3750
      %v3752 = vrcp.pop %v3497
      %v3753 = vmul.f32 -1.0, %v3752
      %v3754 = vrcp.pop %v3499
      %v3755 = vmul.f32 -1.0, %v3754
      %v3756 = vrcp.pop %v3501
      %v3757 = vmul.f32 -1.0, %v3756
      %v3758 = vrcp.pop %v3503
      %v3759 = vmul.f32 -1.0, %v3758
      %v3760 = vrcp.pop %v3505
      %v3761 = vmul.f32 -1.0, %v3760
      %v3762 = vrcp.pop %v3507
      %v3763 = vmul.f32 -1.0, %v3762
      %v3764 = vrcp.pop %v3509
      %v3765 = vmul.f32 -1.0, %v3764
      %v3766 = vrcp.pop %v3511
      %v3767 = vmul.f32 -1.0, %v3766
      %v3768 = vrcp.pop %v3513
      %v3769 = vmul.f32 -1.0, %v3768
      %v3770 = vrcp.pop %v3515
      %v3771 = vmul.f32 -1.0, %v3770
      %v3772 = vrcp.pop %v3517
      %v3773 = vmul.f32 -1.0, %v3772
      %v3774 = vrcp.pop %v3519
      %v3775 = vmul.f32 -1.0, %v3774
      %v3776 = vrcp.pop %v3521
      %v3777 = vmul.f32 -1.0, %v3776
      %v3778 = vrcp.pop %v3523
      %v3779 = vmul.f32 -1.0, %v3778
      %v3780 = vrcp.pop %v3525
      %v3781 = vmul.f32 -1.0, %v3780
      %v3782 = vrcp.pop %v3527
      %v3783 = vmul.f32 -1.0, %v3782
      %v3784 = vrcp.pop %v3529
      %v3785 = vmul.f32 -1.0, %v3784
      %v3786 = vrcp.pop %v3531
      %v3787 = vmul.f32 -1.0, %v3786
      %v3788 = vrcp.pop %v3533
      %v3789 = vmul.f32 -1.0, %v3788
      %v3790 = vrcp.pop %v3535
      %v3791 = vmul.f32 -1.0, %v3790
      %v3792 = vrcp.pop %v3537
      %v3793 = vmul.f32 -1.0, %v3792
      %v3794 = vrcp.pop %v3539
      %v3795 = vmul.f32 -1.0, %v3794
      %v3796 = vrcp.pop %v3541
      %v3797 = vmul.f32 -1.0, %v3796
      %v3798 = vrcp.pop %v3543
      %v3799 = vmul.f32 -1.0, %v3798
      %v3800 = vrcp.pop %v3545
      %v3801 = vmul.f32 -1.0, %v3800
      %v3802 = vrcp.pop %v3547
      %v3803 = vmul.f32 -1.0, %v3802
      %v3804 = vrcp.pop %v3549
      %v3805 = vmul.f32 -1.0, %v3804
      %v3806 = vrcp.pop %v3551
      %v3807 = vmul.f32 -1.0, %v3806
      %v3808 = vrcp.pop %v3553
      %v3809 = vmul.f32 -1.0, %v3808
      %v3810 = vrcp.pop %v3555
      %v3811 = vmul.f32 -1.0, %v3810
      %v3812 = vrcp.pop %v3557
      %v3813 = vmul.f32 -1.0, %v3812
      %v3814 = vrcp.pop %v3559
      %v3815 = vmul.f32 -1.0, %v3814
      %v3816 = vrcp.pop %v3561
      %v3817 = vmul.f32 -1.0, %v3816
      %v3818 = vrcp.pop %v3563
      %v3819 = vmul.f32 -1.0, %v3818
      %v3820 = vrcp.pop %v3565
      %v3821 = vmul.f32 -1.0, %v3820
      %v3822 = vrcp.pop %v3567
      %v3823 = vmul.f32 -1.0, %v3822
      %v3824 = vrcp.pop %v3569
      %v3825 = vmul.f32 -1.0, %v3824
      %v3826 = vrcp.pop %v3571
      %v3827 = vmul.f32 -1.0, %v3826
      %v3828 = vrcp.pop %v3573
      %v3829 = vmul.f32 -1.0, %v3828
      %v3830 = vrcp.pop %v3575
      %v3831 = vmul.f32 -1.0, %v3830
      %v3832 = vrcp.pop %v3577
      %v3833 = vmul.f32 -1.0, %v3832
      %v3834 = vrcp.pop %v3579
      %v3835 = vmul.f32 -1.0, %v3834
      %v3836 = vrcp.pop %v3581
      %v3837 = vmul.f32 -1.0, %v3836
      %v3838 = vrcp.pop %v3583
      %v3839 = vmul.f32 -1.0, %v3838
      %v3840 = vrcp.pop %v3585
      %v3841 = vmul.f32 -1.0, %v3840
      %v3842 = vrcp.pop %v3587
      %v3843 = vmul.f32 -1.0, %v3842
      %v3844 = vrcp.pop %v3589
      %v3845 = vmul.f32 -1.0, %v3844
      %v3846 = vrcp.pop %v3591
      %v3847 = vmul.f32 -1.0, %v3846
      %v3848 = vrcp.pop %v3593
      %v3849 = vmul.f32 -1.0, %v3848
      %v3850 = vrcp.pop %v3595
      %v3851 = vmul.f32 -1.0, %v3850
      %v3852 = vrcp.pop %v3597
      %v3853 = vmul.f32 -1.0, %v3852
      %v3854 = vrcp.pop %v3599
      %v3855 = vmul.f32 -1.0, %v3854
      %v3856 = vrcp.pop %v3601
      %v3857 = vmul.f32 -1.0, %v3856
      %v3858 = vrcp.pop %v3603
      %v3859 = vmul.f32 -1.0, %v3858
      %v3860 = vrcp.pop %v3605
      %v3861 = vmul.f32 -1.0, %v3860
      %v3862 = vrcp.pop %v3607
      %v3863 = vmul.f32 -1.0, %v3862
      %v3864 = vrcp.pop %v3609
      %v3865 = vmul.f32 -1.0, %v3864
      %v3866 = vrcp.pop %v3611
      %v3867 = vmul.f32 -1.0, %v3866
      %v3868 = vrcp.pop %v3613
      %v3869 = vmul.f32 -1.0, %v3868
      %v3870 = vrcp.pop %v3615
      %v3871 = vmul.f32 -1.0, %v3870
      %v3872 = vrcp.pop %v3617
      %v3873 = vmul.f32 -1.0, %v3872
      %v3874 = vrcp.pop %v3619
      %v3875 = vmul.f32 -1.0, %v3874
      %v3876 = vsub.f32 %v3493, 1.0
      %v3877 = vsub.f32 %v3495, 1.0
      %v3878 = vsub.f32 %v3497, 1.0
      %v3879 = vsub.f32 %v3499, 1.0
      %v3880 = vsub.f32 %v3501, 1.0
      %v3881 = vsub.f32 %v3503, 1.0
      %v3882 = vsub.f32 %v3505, 1.0
      %v3883 = vsub.f32 %v3507, 1.0
      %v3884 = vsub.f32 %v3509, 1.0
      %v3885 = vsub.f32 %v3511, 1.0
      %v3886 = vsub.f32 %v3513, 1.0
      %v3887 = vsub.f32 %v3515, 1.0
      %v3888 = vsub.f32 %v3517, 1.0
      %v3889 = vsub.f32 %v3519, 1.0
      %v3890 = vsub.f32 %v3521, 1.0
      %v3891 = vsub.f32 %v3523, 1.0
      %v3892 = vsub.f32 %v3525, 1.0
      %v3893 = vsub.f32 %v3527, 1.0
      %v3894 = vsub.f32 %v3529, 1.0
      %v3895 = vsub.f32 %v3531, 1.0
      %v3896 = vsub.f32 %v3533, 1.0
      %v3897 = vsub.f32 %v3535, 1.0
      %v3898 = vsub.f32 %v3537, 1.0
      %v3899 = vsub.f32 %v3539, 1.0
      %v3900 = vsub.f32 %v3541, 1.0
      %v3901 = vsub.f32 %v3543, 1.0
      %v3902 = vsub.f32 %v3545, 1.0
      %v3903 = vsub.f32 %v3547, 1.0
      %v3904 = vsub.f32 %v3549, 1.0
      %v3905 = vsub.f32 %v3551, 1.0
      %v3906 = vsub.f32 %v3553, 1.0
      %v3907 = vsub.f32 %v3555, 1.0
      %v3908 = vsub.f32 %v3557, 1.0
      %v3909 = vsub.f32 %v3559, 1.0
      %v3910 = vsub.f32 %v3561, 1.0
      %v3911 = vsub.f32 %v3563, 1.0
      %v3912 = vsub.f32 %v3565, 1.0
      %v3913 = vsub.f32 %v3567, 1.0
      %v3914 = vsub.f32 %v3569, 1.0
      %v3915 = vsub.f32 %v3571, 1.0
      %v3916 = vsub.f32 %v3573, 1.0
      %v3917 = vsub.f32 %v3575, 1.0
      %v3918 = vsub.f32 %v3577, 1.0
      %v3919 = vsub.f32 %v3579, 1.0
      %v3920 = vsub.f32 %v3581, 1.0
      %v3921 = vsub.f32 %v3583, 1.0
      %v3922 = vsub.f32 %v3585, 1.0
      %v3923 = vsub.f32 %v3587, 1.0
      %v3924 = vsub.f32 %v3589, 1.0
      %v3925 = vsub.f32 %v3591, 1.0
      %v3926 = vsub.f32 %v3593, 1.0
      %v3927 = vsub.f32 %v3595, 1.0
      %v3928 = vsub.f32 %v3597, 1.0
      %v3929 = vsub.f32 %v3599, 1.0
      %v3930 = vsub.f32 %v3601, 1.0
      %v3931 = vsub.f32 %v3603, 1.0
      %v3932 = vsub.f32 %v3605, 1.0
      %v3933 = vsub.f32 %v3607, 1.0
      %v3934 = vsub.f32 %v3609, 1.0
      %v3935 = vsub.f32 %v3611, 1.0
      %v3936 = vsub.f32 %v3613, 1.0
      %v3937 = vsub.f32 %v3615, 1.0
      %v3938 = vsub.f32 %v3617, 1.0
      %v3939 = vsub.f32 %v3619, 1.0
      %v3940 = vadd.f32 %v3493, 1.0
      %v3941 = vadd.f32 %v3495, 1.0
      %v3942 = vadd.f32 %v3497, 1.0
      %v3943 = vadd.f32 %v3499, 1.0
      %v3944 = vadd.f32 %v3501, 1.0
      %v3945 = vadd.f32 %v3503, 1.0
      %v3946 = vadd.f32 %v3505, 1.0
      %v3947 = vadd.f32 %v3507, 1.0
      %v3948 = vadd.f32 %v3509, 1.0
      %v3949 = vadd.f32 %v3511, 1.0
      %v3950 = vadd.f32 %v3513, 1.0
      %v3951 = vadd.f32 %v3515, 1.0
      %v3952 = vadd.f32 %v3517, 1.0
      %v3953 = vadd.f32 %v3519, 1.0
      %v3954 = vadd.f32 %v3521, 1.0
      %v3955 = vadd.f32 %v3523, 1.0
      %v3956 = vadd.f32 %v3525, 1.0
      %v3957 = vadd.f32 %v3527, 1.0
      %v3958 = vadd.f32 %v3529, 1.0
      %v3959 = vadd.f32 %v3531, 1.0
      %v3960 = vadd.f32 %v3533, 1.0
      %v3961 = vadd.f32 %v3535, 1.0
      %v3962 = vadd.f32 %v3537, 1.0
      %v3963 = vadd.f32 %v3539, 1.0
      %v3964 = vadd.f32 %v3541, 1.0
      %v3965 = vadd.f32 %v3543, 1.0
      %v3966 = vadd.f32 %v3545, 1.0
      %v3967 = vadd.f32 %v3547, 1.0
      %v3968 = vadd.f32 %v3549, 1.0
      %v3969 = vadd.f32 %v3551, 1.0
      %v3970 = vadd.f32 %v3553, 1.0
      %v3971 = vadd.f32 %v3555, 1.0
      %v3972 = vadd.f32 %v3557, 1.0
      %v3973 = vadd.f32 %v3559, 1.0
      %v3974 = vadd.f32 %v3561, 1.0
      %v3975 = vadd.f32 %v3563, 1.0
      %v3976 = vadd.f32 %v3565, 1.0
      %v3977 = vadd.f32 %v3567, 1.0
      %v3978 = vadd.f32 %v3569, 1.0
      %v3979 = vadd.f32 %v3571, 1.0
      %v3980 = vadd.f32 %v3573, 1.0
      %v3981 = vadd.f32 %v3575, 1.0
      %v3982 = vadd.f32 %v3577, 1.0
      %v3983 = vadd.f32 %v3579, 1.0
      %v3984 = vadd.f32 %v3581, 1.0
      %v3985 = vadd.f32 %v3583, 1.0
      %v3986 = vadd.f32 %v3585, 1.0
      %v3987 = vadd.f32 %v3587, 1.0
      %v3988 = vadd.f32 %v3589, 1.0
      %v3989 = vadd.f32 %v3591, 1.0
      %v3990 = vadd.f32 %v3593, 1.0
      %v3991 = vadd.f32 %v3595, 1.0
      %v3992 = vadd.f32 %v3597, 1.0
      %v3993 = vadd.f32 %v3599, 1.0
      %v3994 = vadd.f32 %v3601, 1.0
      %v3995 = vadd.f32 %v3603, 1.0
      %v3996 = vadd.f32 %v3605, 1.0
      %v3997 = vadd.f32 %v3607, 1.0
      %v3998 = vadd.f32 %v3609, 1.0
      %v3999 = vadd.f32 %v3611, 1.0
      %v4000 = vadd.f32 %v3613, 1.0
      %v4001 = vadd.f32 %v3615, 1.0
      %v4002 = vadd.f32 %v3617, 1.0
      %v4003 = vadd.f32 %v3619, 1.0
      %v4004 = vrcp.pop %v3940
      %v4005 = vmul.f32 %v3876, %v4004
      %v4006 = vrcp.pop %v3941
      %v4007 = vmul.f32 %v3877, %v4006
      %v4008 = vrcp.pop %v3942
      %v4009 = vmul.f32 %v3878, %v4008
      %v4010 = vrcp.pop %v3943
      %v4011 = vmul.f32 %v3879, %v4010
      %v4012 = vrcp.pop %v3944
      %v4013 = vmul.f32 %v3880, %v4012
      %v4014 = vrcp.pop %v3945
      %v4015 = vmul.f32 %v3881, %v4014
      %v4016 = vrcp.pop %v3946
      %v4017 = vmul.f32 %v3882, %v4016
      %v4018 = vrcp.pop %v3947
      %v4019 = vmul.f32 %v3883, %v4018
      %v4020 = vrcp.pop %v3948
      %v4021 = vmul.f32 %v3884, %v4020
      %v4022 = vrcp.pop %v3949
      %v4023 = vmul.f32 %v3885, %v4022
      %v4024 = vrcp.pop %v3950
      %v4025 = vmul.f32 %v3886, %v4024
      %v4026 = vrcp.pop %v3951
      %v4027 = vmul.f32 %v3887, %v4026
      %v4028 = vrcp.pop %v3952
      %v4029 = vmul.f32 %v3888, %v4028
      %v4030 = vrcp.pop %v3953
      %v4031 = vmul.f32 %v3889, %v4030
      %v4032 = vrcp.pop %v3954
      %v4033 = vmul.f32 %v3890, %v4032
      %v4034 = vrcp.pop %v3955
      %v4035 = vmul.f32 %v3891, %v4034
      %v4036 = vrcp.pop %v3956
      %v4037 = vmul.f32 %v3892, %v4036
      %v4038 = vrcp.pop %v3957
      %v4039 = vmul.f32 %v3893, %v4038
      %v4040 = vrcp.pop %v3958
      %v4041 = vmul.f32 %v3894, %v4040
      %v4042 = vrcp.pop %v3959
      %v4043 = vmul.f32 %v3895, %v4042
      %v4044 = vrcp.pop %v3960
      %v4045 = vmul.f32 %v3896, %v4044
      %v4046 = vrcp.pop %v3961
      %v4047 = vmul.f32 %v3897, %v4046
      %v4048 = vrcp.pop %v3962
      %v4049 = vmul.f32 %v3898, %v4048
      %v4050 = vrcp.pop %v3963
      %v4051 = vmul.f32 %v3899, %v4050
      %v4052 = vrcp.pop %v3964
      %v4053 = vmul.f32 %v3900, %v4052
      %v4054 = vrcp.pop %v3965
      %v4055 = vmul.f32 %v3901, %v4054
      %v4056 = vrcp.pop %v3966
      %v4057 = vmul.f32 %v3902, %v4056
      %v4058 = vrcp.pop %v3967
      %v4059 = vmul.f32 %v3903, %v4058
      %v4060 = vrcp.pop %v3968
      %v4061 = vmul.f32 %v3904, %v4060
      %v4062 = vrcp.pop %v3969
      %v4063 = vmul.f32 %v3905, %v4062
      %v4064 = vrcp.pop %v3970
      %v4065 = vmul.f32 %v3906, %v4064
      %v4066 = vrcp.pop %v3971
      %v4067 = vmul.f32 %v3907, %v4066
      %v4068 = vrcp.pop %v3972
      %v4069 = vmul.f32 %v3908, %v4068
      %v4070 = vrcp.pop %v3973
      %v4071 = vmul.f32 %v3909, %v4070
      %v4072 = vrcp.pop %v3974
      %v4073 = vmul.f32 %v3910, %v4072
      %v4074 = vrcp.pop %v3975
      %v4075 = vmul.f32 %v3911, %v4074
      %v4076 = vrcp.pop %v3976
      %v4077 = vmul.f32 %v3912, %v4076
      %v4078 = vrcp.pop %v3977
      %v4079 = vmul.f32 %v3913, %v4078
      %v4080 = vrcp.pop %v3978
      %v4081 = vmul.f32 %v3914, %v4080
      %v4082 = vrcp.pop %v3979
      %v4083 = vmul.f32 %v3915, %v4082
      %v4084 = vrcp.pop %v3980
      %v4085 = vmul.f32 %v3916, %v4084
      %v4086 = vrcp.pop %v3981
      %v4087 = vmul.f32 %v3917, %v4086
      %v4088 = vrcp.pop %v3982
      %v4089 = vmul.f32 %v3918, %v4088
      %v4090 = vrcp.pop %v3983
      %v4091 = vmul.f32 %v3919, %v4090
      %v4092 = vrcp.pop %v3984
      %v4093 = vmul.f32 %v3920, %v4092
      %v4094 = vrcp.pop %v3985
      %v4095 = vmul.f32 %v3921, %v4094
      %v4096 = vrcp.pop %v3986
      %v4097 = vmul.f32 %v3922, %v4096
      %v4098 = vrcp.pop %v3987
      %v4099 = vmul.f32 %v3923, %v4098
      %v4100 = vrcp.pop %v3988
      %v4101 = vmul.f32 %v3924, %v4100
      %v4102 = vrcp.pop %v3989
      %v4103 = vmul.f32 %v3925, %v4102
      %v4104 = vrcp.pop %v3990
      %v4105 = vmul.f32 %v3926, %v4104
      %v4106 = vrcp.pop %v3991
      %v4107 = vmul.f32 %v3927, %v4106
      %v4108 = vrcp.pop %v3992
      %v4109 = vmul.f32 %v3928, %v4108
      %v4110 = vrcp.pop %v3993
      %v4111 = vmul.f32 %v3929, %v4110
      %v4112 = vrcp.pop %v3994
      %v4113 = vmul.f32 %v3930, %v4112
      %v4114 = vrcp.pop %v3995
      %v4115 = vmul.f32 %v3931, %v4114
      %v4116 = vrcp.pop %v3996
      %v4117 = vmul.f32 %v3932, %v4116
      %v4118 = vrcp.pop %v3997
      %v4119 = vmul.f32 %v3933, %v4118
      %v4120 = vrcp.pop %v3998
      %v4121 = vmul.f32 %v3934, %v4120
      %v4122 = vrcp.pop %v3999
      %v4123 = vmul.f32 %v3935, %v4122
      %v4124 = vrcp.pop %v4000
      %v4125 = vmul.f32 %v3936, %v4124
      %v4126 = vrcp.pop %v4001
      %v4127 = vmul.f32 %v3937, %v4126
      %v4128 = vrcp.pop %v4002
      %v4129 = vmul.f32 %v3938, %v4128
      %v4130 = vrcp.pop %v4003
      %v4131 = vmul.f32 %v3939, %v4130
      %v4132 = vsel %vm3684, %v4005, %v3493
      %v4133 = vsel %vm3685, %v4007, %v3495
      %v4134 = vsel %vm3686, %v4009, %v3497
      %v4135 = vsel %vm3687, %v4011, %v3499
      %v4136 = vsel %vm3688, %v4013, %v3501
      %v4137 = vsel %vm3689, %v4015, %v3503
      %v4138 = vsel %vm3690, %v4017, %v3505
      %v4139 = vsel %vm3691, %v4019, %v3507
      %v4140 = vsel %vm3692, %v4021, %v3509
      %v4141 = vsel %vm3693, %v4023, %v3511
      %v4142 = vsel %vm3694, %v4025, %v3513
      %v4143 = vsel %vm3695, %v4027, %v3515
      %v4144 = vsel %vm3696, %v4029, %v3517
      %v4145 = vsel %vm3697, %v4031, %v3519
      %v4146 = vsel %vm3698, %v4033, %v3521
      %v4147 = vsel %vm3699, %v4035, %v3523
      %v4148 = vsel %vm3700, %v4037, %v3525
      %v4149 = vsel %vm3701, %v4039, %v3527
      %v4150 = vsel %vm3702, %v4041, %v3529
      %v4151 = vsel %vm3703, %v4043, %v3531
      %v4152 = vsel %vm3704, %v4045, %v3533
      %v4153 = vsel %vm3705, %v4047, %v3535
      %v4154 = vsel %vm3706, %v4049, %v3537
      %v4155 = vsel %vm3707, %v4051, %v3539
      %v4156 = vsel %vm3708, %v4053, %v3541
      %v4157 = vsel %vm3709, %v4055, %v3543
      %v4158 = vsel %vm3710, %v4057, %v3545
      %v4159 = vsel %vm3711, %v4059, %v3547
      %v4160 = vsel %vm3712, %v4061, %v3549
      %v4161 = vsel %vm3713, %v4063, %v3551
      %v4162 = vsel %vm3714, %v4065, %v3553
      %v4163 = vsel %vm3715, %v4067, %v3555
      %v4164 = vsel %vm3716, %v4069, %v3557
      %v4165 = vsel %vm3717, %v4071, %v3559
      %v4166 = vsel %vm3718, %v4073, %v3561
      %v4167 = vsel %vm3719, %v4075, %v3563
      %v4168 = vsel %vm3720, %v4077, %v3565
      %v4169 = vsel %vm3721, %v4079, %v3567
      %v4170 = vsel %vm3722, %v4081, %v3569
      %v4171 = vsel %vm3723, %v4083, %v3571
      %v4172 = vsel %vm3724, %v4085, %v3573
      %v4173 = vsel %vm3725, %v4087, %v3575
      %v4174 = vsel %vm3726, %v4089, %v3577
      %v4175 = vsel %vm3727, %v4091, %v3579
      %v4176 = vsel %vm3728, %v4093, %v3581
      %v4177 = vsel %vm3729, %v4095, %v3583
      %v4178 = vsel %vm3730, %v4097, %v3585
      %v4179 = vsel %vm3731, %v4099, %v3587
      %v4180 = vsel %vm3732, %v4101, %v3589
      %v4181 = vsel %vm3733, %v4103, %v3591
      %v4182 = vsel %vm3734, %v4105, %v3593
      %v4183 = vsel %vm3735, %v4107, %v3595
      %v4184 = vsel %vm3736, %v4109, %v3597
      %v4185 = vsel %vm3737, %v4111, %v3599
      %v4186 = vsel %vm3738, %v4113, %v3601
      %v4187 = vsel %vm3739, %v4115, %v3603
      %v4188 = vsel %vm3740, %v4117, %v3605
      %v4189 = vsel %vm3741, %v4119, %v3607
      %v4190 = vsel %vm3742, %v4121, %v3609
      %v4191 = vsel %vm3743, %v4123, %v3611
      %v4192 = vsel %vm3744, %v4125, %v3613
      %v4193 = vsel %vm3745, %v4127, %v3615
      %v4194 = vsel %vm3746, %v4129, %v3617
      %v4195 = vsel %vm3747, %v4131, %v3619
      %v4196 = vsel %vm3620, %v3749, %v4132
      %v4197 = vsel %vm3621, %v3751, %v4133
      %v4198 = vsel %vm3622, %v3753, %v4134
      %v4199 = vsel %vm3623, %v3755, %v4135
      %v4200 = vsel %vm3624, %v3757, %v4136
      %v4201 = vsel %vm3625, %v3759, %v4137
      %v4202 = vsel %vm3626, %v3761, %v4138
      %v4203 = vsel %vm3627, %v3763, %v4139
      %v4204 = vsel %vm3628, %v3765, %v4140
      %v4205 = vsel %vm3629, %v3767, %v4141
      %v4206 = vsel %vm3630, %v3769, %v4142
      %v4207 = vsel %vm3631, %v3771, %v4143
      %v4208 = vsel %vm3632, %v3773, %v4144
      %v4209 = vsel %vm3633, %v3775, %v4145
      %v4210 = vsel %vm3634, %v3777, %v4146
      %v4211 = vsel %vm3635, %v3779, %v4147
      %v4212 = vsel %vm3636, %v3781, %v4148
      %v4213 = vsel %vm3637, %v3783, %v4149
      %v4214 = vsel %vm3638, %v3785, %v4150
      %v4215 = vsel %vm3639, %v3787, %v4151
      %v4216 = vsel %vm3640, %v3789, %v4152
      %v4217 = vsel %vm3641, %v3791, %v4153
      %v4218 = vsel %vm3642, %v3793, %v4154
      %v4219 = vsel %vm3643, %v3795, %v4155
      %v4220 = vsel %vm3644, %v3797, %v4156
      %v4221 = vsel %vm3645, %v3799, %v4157
      %v4222 = vsel %vm3646, %v3801, %v4158
      %v4223 = vsel %vm3647, %v3803, %v4159
      %v4224 = vsel %vm3648, %v3805, %v4160
      %v4225 = vsel %vm3649, %v3807, %v4161
      %v4226 = vsel %vm3650, %v3809, %v4162
      %v4227 = vsel %vm3651, %v3811, %v4163
      %v4228 = vsel %vm3652, %v3813, %v4164
      %v4229 = vsel %vm3653, %v3815, %v4165
      %v4230 = vsel %vm3654, %v3817, %v4166
      %v4231 = vsel %vm3655, %v3819, %v4167
      %v4232 = vsel %vm3656, %v3821, %v4168
      %v4233 = vsel %vm3657, %v3823, %v4169
      %v4234 = vsel %vm3658, %v3825, %v4170
      %v4235 = vsel %vm3659, %v3827, %v4171
      %v4236 = vsel %vm3660, %v3829, %v4172
      %v4237 = vsel %vm3661, %v3831, %v4173
      %v4238 = vsel %vm3662, %v3833, %v4174
      %v4239 = vsel %vm3663, %v3835, %v4175
      %v4240 = vsel %vm3664, %v3837, %v4176
      %v4241 = vsel %vm3665, %v3839, %v4177
      %v4242 = vsel %vm3666, %v3841, %v4178
      %v4243 = vsel %vm3667, %v3843, %v4179
      %v4244 = vsel %vm3668, %v3845, %v4180
      %v4245 = vsel %vm3669, %v3847, %v4181
      %v4246 = vsel %vm3670, %v3849, %v4182
      %v4247 = vsel %vm3671, %v3851, %v4183
      %v4248 = vsel %vm3672, %v3853, %v4184
      %v4249 = vsel %vm3673, %v3855, %v4185
      %v4250 = vsel %vm3674, %v3857, %v4186
      %v4251 = vsel %vm3675, %v3859, %v4187
      %v4252 = vsel %vm3676, %v3861, %v4188
      %v4253 = vsel %vm3677, %v3863, %v4189
      %v4254 = vsel %vm3678, %v3865, %v4190
      %v4255 = vsel %vm3679, %v3867, %v4191
      %v4256 = vsel %vm3680, %v3869, %v4192
      %v4257 = vsel %vm3681, %v3871, %v4193
      %v4258 = vsel %vm3682, %v3873, %v4194
      %v4259 = vsel %vm3683, %v3875, %v4195
      %v4260 = vmul.f32 %v4196, %v4196
      %v4261 = vmul.f32 %v4197, %v4197
      %v4262 = vmul.f32 %v4198, %v4198
      %v4263 = vmul.f32 %v4199, %v4199
      %v4264 = vmul.f32 %v4200, %v4200
      %v4265 = vmul.f32 %v4201, %v4201
      %v4266 = vmul.f32 %v4202, %v4202
      %v4267 = vmul.f32 %v4203, %v4203
      %v4268 = vmul.f32 %v4204, %v4204
      %v4269 = vmul.f32 %v4205, %v4205
      %v4270 = vmul.f32 %v4206, %v4206
      %v4271 = vmul.f32 %v4207, %v4207
      %v4272 = vmul.f32 %v4208, %v4208
      %v4273 = vmul.f32 %v4209, %v4209
      %v4274 = vmul.f32 %v4210, %v4210
      %v4275 = vmul.f32 %v4211, %v4211
      %v4276 = vmul.f32 %v4212, %v4212
      %v4277 = vmul.f32 %v4213, %v4213
      %v4278 = vmul.f32 %v4214, %v4214
      %v4279 = vmul.f32 %v4215, %v4215
      %v4280 = vmul.f32 %v4216, %v4216
      %v4281 = vmul.f32 %v4217, %v4217
      %v4282 = vmul.f32 %v4218, %v4218
      %v4283 = vmul.f32 %v4219, %v4219
      %v4284 = vmul.f32 %v4220, %v4220
      %v4285 = vmul.f32 %v4221, %v4221
      %v4286 = vmul.f32 %v4222, %v4222
      %v4287 = vmul.f32 %v4223, %v4223
      %v4288 = vmul.f32 %v4224, %v4224
      %v4289 = vmul.f32 %v4225, %v4225
      %v4290 = vmul.f32 %v4226, %v4226
      %v4291 = vmul.f32 %v4227, %v4227
      %v4292 = vmul.f32 %v4228, %v4228
      %v4293 = vmul.f32 %v4229, %v4229
      %v4294 = vmul.f32 %v4230, %v4230
      %v4295 = vmul.f32 %v4231, %v4231
      %v4296 = vmul.f32 %v4232, %v4232
      %v4297 = vmul.f32 %v4233, %v4233
      %v4298 = vmul.f32 %v4234, %v4234
      %v4299 = vmul.f32 %v4235, %v4235
      %v4300 = vmul.f32 %v4236, %v4236
      %v4301 = vmul.f32 %v4237, %v4237
      %v4302 = vmul.f32 %v4238, %v4238
      %v4303 = vmul.f32 %v4239, %v4239
      %v4304 = vmul.f32 %v4240, %v4240
      %v4305 = vmul.f32 %v4241, %v4241
      %v4306 = vmul.f32 %v4242, %v4242
      %v4307 = vmul.f32 %v4243, %v4243
      %v4308 = vmul.f32 %v4244, %v4244
      %v4309 = vmul.f32 %v4245, %v4245
      %v4310 = vmul.f32 %v4246, %v4246
      %v4311 = vmul.f32 %v4247, %v4247
      %v4312 = vmul.f32 %v4248, %v4248
      %v4313 = vmul.f32 %v4249, %v4249
      %v4314 = vmul.f32 %v4250, %v4250
      %v4315 = vmul.f32 %v4251, %v4251
      %v4316 = vmul.f32 %v4252, %v4252
      %v4317 = vmul.f32 %v4253, %v4253
      %v4318 = vmul.f32 %v4254, %v4254
      %v4319 = vmul.f32 %v4255, %v4255
      %v4320 = vmul.f32 %v4256, %v4256
      %v4321 = vmul.f32 %v4257, %v4257
      %v4322 = vmul.f32 %v4258, %v4258
      %v4323 = vmul.f32 %v4259, %v4259
      %v4324 = vmul.f32 %v4260, 0.080537446
      %v4325 = vmul.f32 %v4261, 0.080537446
      %v4326 = vmul.f32 %v4262, 0.080537446
      %v4327 = vmul.f32 %v4263, 0.080537446
      %v4328 = vmul.f32 %v4264, 0.080537446
      %v4329 = vmul.f32 %v4265, 0.080537446
      %v4330 = vmul.f32 %v4266, 0.080537446
      %v4331 = vmul.f32 %v4267, 0.080537446
      %v4332 = vmul.f32 %v4268, 0.080537446
      %v4333 = vmul.f32 %v4269, 0.080537446
      %v4334 = vmul.f32 %v4270, 0.080537446
      %v4335 = vmul.f32 %v4271, 0.080537446
      %v4336 = vmul.f32 %v4272, 0.080537446
      %v4337 = vmul.f32 %v4273, 0.080537446
      %v4338 = vmul.f32 %v4274, 0.080537446
      %v4339 = vmul.f32 %v4275, 0.080537446
      %v4340 = vmul.f32 %v4276, 0.080537446
      %v4341 = vmul.f32 %v4277, 0.080537446
      %v4342 = vmul.f32 %v4278, 0.080537446
      %v4343 = vmul.f32 %v4279, 0.080537446
      %v4344 = vmul.f32 %v4280, 0.080537446
      %v4345 = vmul.f32 %v4281, 0.080537446
      %v4346 = vmul.f32 %v4282, 0.080537446
      %v4347 = vmul.f32 %v4283, 0.080537446
      %v4348 = vmul.f32 %v4284, 0.080537446
      %v4349 = vmul.f32 %v4285, 0.080537446
      %v4350 = vmul.f32 %v4286, 0.080537446
      %v4351 = vmul.f32 %v4287, 0.080537446
      %v4352 = vmul.f32 %v4288, 0.080537446
      %v4353 = vmul.f32 %v4289, 0.080537446
      %v4354 = vmul.f32 %v4290, 0.080537446
      %v4355 = vmul.f32 %v4291, 0.080537446
      %v4356 = vmul.f32 %v4292, 0.080537446
      %v4357 = vmul.f32 %v4293, 0.080537446
      %v4358 = vmul.f32 %v4294, 0.080537446
      %v4359 = vmul.f32 %v4295, 0.080537446
      %v4360 = vmul.f32 %v4296, 0.080537446
      %v4361 = vmul.f32 %v4297, 0.080537446
      %v4362 = vmul.f32 %v4298, 0.080537446
      %v4363 = vmul.f32 %v4299, 0.080537446
      %v4364 = vmul.f32 %v4300, 0.080537446
      %v4365 = vmul.f32 %v4301, 0.080537446
      %v4366 = vmul.f32 %v4302, 0.080537446
      %v4367 = vmul.f32 %v4303, 0.080537446
      %v4368 = vmul.f32 %v4304, 0.080537446
      %v4369 = vmul.f32 %v4305, 0.080537446
      %v4370 = vmul.f32 %v4306, 0.080537446
      %v4371 = vmul.f32 %v4307, 0.080537446
      %v4372 = vmul.f32 %v4308, 0.080537446
      %v4373 = vmul.f32 %v4309, 0.080537446
      %v4374 = vmul.f32 %v4310, 0.080537446
      %v4375 = vmul.f32 %v4311, 0.080537446
      %v4376 = vmul.f32 %v4312, 0.080537446
      %v4377 = vmul.f32 %v4313, 0.080537446
      %v4378 = vmul.f32 %v4314, 0.080537446
      %v4379 = vmul.f32 %v4315, 0.080537446
      %v4380 = vmul.f32 %v4316, 0.080537446
      %v4381 = vmul.f32 %v4317, 0.080537446
      %v4382 = vmul.f32 %v4318, 0.080537446
      %v4383 = vmul.f32 %v4319, 0.080537446
      %v4384 = vmul.f32 %v4320, 0.080537446
      %v4385 = vmul.f32 %v4321, 0.080537446
      %v4386 = vmul.f32 %v4322, 0.080537446
      %v4387 = vmul.f32 %v4323, 0.080537446
      %v4388 = vsub.f32 %v4324, 0.13877685
      %v4389 = vsub.f32 %v4325, 0.13877685
      %v4390 = vsub.f32 %v4326, 0.13877685
      %v4391 = vsub.f32 %v4327, 0.13877685
      %v4392 = vsub.f32 %v4328, 0.13877685
      %v4393 = vsub.f32 %v4329, 0.13877685
      %v4394 = vsub.f32 %v4330, 0.13877685
      %v4395 = vsub.f32 %v4331, 0.13877685
      %v4396 = vsub.f32 %v4332, 0.13877685
      %v4397 = vsub.f32 %v4333, 0.13877685
      %v4398 = vsub.f32 %v4334, 0.13877685
      %v4399 = vsub.f32 %v4335, 0.13877685
      %v4400 = vsub.f32 %v4336, 0.13877685
      %v4401 = vsub.f32 %v4337, 0.13877685
      %v4402 = vsub.f32 %v4338, 0.13877685
      %v4403 = vsub.f32 %v4339, 0.13877685
      %v4404 = vsub.f32 %v4340, 0.13877685
      %v4405 = vsub.f32 %v4341, 0.13877685
      %v4406 = vsub.f32 %v4342, 0.13877685
      %v4407 = vsub.f32 %v4343, 0.13877685
      %v4408 = vsub.f32 %v4344, 0.13877685
      %v4409 = vsub.f32 %v4345, 0.13877685
      %v4410 = vsub.f32 %v4346, 0.13877685
      %v4411 = vsub.f32 %v4347, 0.13877685
      %v4412 = vsub.f32 %v4348, 0.13877685
      %v4413 = vsub.f32 %v4349, 0.13877685
      %v4414 = vsub.f32 %v4350, 0.13877685
      %v4415 = vsub.f32 %v4351, 0.13877685
      %v4416 = vsub.f32 %v4352, 0.13877685
      %v4417 = vsub.f32 %v4353, 0.13877685
      %v4418 = vsub.f32 %v4354, 0.13877685
      %v4419 = vsub.f32 %v4355, 0.13877685
      %v4420 = vsub.f32 %v4356, 0.13877685
      %v4421 = vsub.f32 %v4357, 0.13877685
      %v4422 = vsub.f32 %v4358, 0.13877685
      %v4423 = vsub.f32 %v4359, 0.13877685
      %v4424 = vsub.f32 %v4360, 0.13877685
      %v4425 = vsub.f32 %v4361, 0.13877685
      %v4426 = vsub.f32 %v4362, 0.13877685
      %v4427 = vsub.f32 %v4363, 0.13877685
      %v4428 = vsub.f32 %v4364, 0.13877685
      %v4429 = vsub.f32 %v4365, 0.13877685
      %v4430 = vsub.f32 %v4366, 0.13877685
      %v4431 = vsub.f32 %v4367, 0.13877685
      %v4432 = vsub.f32 %v4368, 0.13877685
      %v4433 = vsub.f32 %v4369, 0.13877685
      %v4434 = vsub.f32 %v4370, 0.13877685
      %v4435 = vsub.f32 %v4371, 0.13877685
      %v4436 = vsub.f32 %v4372, 0.13877685
      %v4437 = vsub.f32 %v4373, 0.13877685
      %v4438 = vsub.f32 %v4374, 0.13877685
      %v4439 = vsub.f32 %v4375, 0.13877685
      %v4440 = vsub.f32 %v4376, 0.13877685
      %v4441 = vsub.f32 %v4377, 0.13877685
      %v4442 = vsub.f32 %v4378, 0.13877685
      %v4443 = vsub.f32 %v4379, 0.13877685
      %v4444 = vsub.f32 %v4380, 0.13877685
      %v4445 = vsub.f32 %v4381, 0.13877685
      %v4446 = vsub.f32 %v4382, 0.13877685
      %v4447 = vsub.f32 %v4383, 0.13877685
      %v4448 = vsub.f32 %v4384, 0.13877685
      %v4449 = vsub.f32 %v4385, 0.13877685
      %v4450 = vsub.f32 %v4386, 0.13877685
      %v4451 = vsub.f32 %v4387, 0.13877685
      %v4452 = vmul.f32 %v4388, %v4260
      %v4453 = vmul.f32 %v4389, %v4261
      %v4454 = vmul.f32 %v4390, %v4262
      %v4455 = vmul.f32 %v4391, %v4263
      %v4456 = vmul.f32 %v4392, %v4264
      %v4457 = vmul.f32 %v4393, %v4265
      %v4458 = vmul.f32 %v4394, %v4266
      %v4459 = vmul.f32 %v4395, %v4267
      %v4460 = vmul.f32 %v4396, %v4268
      %v4461 = vmul.f32 %v4397, %v4269
      %v4462 = vmul.f32 %v4398, %v4270
      %v4463 = vmul.f32 %v4399, %v4271
      %v4464 = vmul.f32 %v4400, %v4272
      %v4465 = vmul.f32 %v4401, %v4273
      %v4466 = vmul.f32 %v4402, %v4274
      %v4467 = vmul.f32 %v4403, %v4275
      %v4468 = vmul.f32 %v4404, %v4276
      %v4469 = vmul.f32 %v4405, %v4277
      %v4470 = vmul.f32 %v4406, %v4278
      %v4471 = vmul.f32 %v4407, %v4279
      %v4472 = vmul.f32 %v4408, %v4280
      %v4473 = vmul.f32 %v4409, %v4281
      %v4474 = vmul.f32 %v4410, %v4282
      %v4475 = vmul.f32 %v4411, %v4283
      %v4476 = vmul.f32 %v4412, %v4284
      %v4477 = vmul.f32 %v4413, %v4285
      %v4478 = vmul.f32 %v4414, %v4286
      %v4479 = vmul.f32 %v4415, %v4287
      %v4480 = vmul.f32 %v4416, %v4288
      %v4481 = vmul.f32 %v4417, %v4289
      %v4482 = vmul.f32 %v4418, %v4290
      %v4483 = vmul.f32 %v4419, %v4291
      %v4484 = vmul.f32 %v4420, %v4292
      %v4485 = vmul.f32 %v4421, %v4293
      %v4486 = vmul.f32 %v4422, %v4294
      %v4487 = vmul.f32 %v4423, %v4295
      %v4488 = vmul.f32 %v4424, %v4296
      %v4489 = vmul.f32 %v4425, %v4297
      %v4490 = vmul.f32 %v4426, %v4298
      %v4491 = vmul.f32 %v4427, %v4299
      %v4492 = vmul.f32 %v4428, %v4300
      %v4493 = vmul.f32 %v4429, %v4301
      %v4494 = vmul.f32 %v4430, %v4302
      %v4495 = vmul.f32 %v4431, %v4303
      %v4496 = vmul.f32 %v4432, %v4304
      %v4497 = vmul.f32 %v4433, %v4305
      %v4498 = vmul.f32 %v4434, %v4306
      %v4499 = vmul.f32 %v4435, %v4307
      %v4500 = vmul.f32 %v4436, %v4308
      %v4501 = vmul.f32 %v4437, %v4309
      %v4502 = vmul.f32 %v4438, %v4310
      %v4503 = vmul.f32 %v4439, %v4311
      %v4504 = vmul.f32 %v4440, %v4312
      %v4505 = vmul.f32 %v4441, %v4313
      %v4506 = vmul.f32 %v4442, %v4314
      %v4507 = vmul.f32 %v4443, %v4315
      %v4508 = vmul.f32 %v4444, %v4316
      %v4509 = vmul.f32 %v4445, %v4317
      %v4510 = vmul.f32 %v4446, %v4318
      %v4511 = vmul.f32 %v4447, %v4319
      %v4512 = vmul.f32 %v4448, %v4320
      %v4513 = vmul.f32 %v4449, %v4321
      %v4514 = vmul.f32 %v4450, %v4322
      %v4515 = vmul.f32 %v4451, %v4323
      %v4516 = vadd.f32 %v4452, 0.19977711
      %v4517 = vadd.f32 %v4453, 0.19977711
      %v4518 = vadd.f32 %v4454, 0.19977711
      %v4519 = vadd.f32 %v4455, 0.19977711
      %v4520 = vadd.f32 %v4456, 0.19977711
      %v4521 = vadd.f32 %v4457, 0.19977711
      %v4522 = vadd.f32 %v4458, 0.19977711
      %v4523 = vadd.f32 %v4459, 0.19977711
      %v4524 = vadd.f32 %v4460, 0.19977711
      %v4525 = vadd.f32 %v4461, 0.19977711
      %v4526 = vadd.f32 %v4462, 0.19977711
      %v4527 = vadd.f32 %v4463, 0.19977711
      %v4528 = vadd.f32 %v4464, 0.19977711
      %v4529 = vadd.f32 %v4465, 0.19977711
      %v4530 = vadd.f32 %v4466, 0.19977711
      %v4531 = vadd.f32 %v4467, 0.19977711
      %v4532 = vadd.f32 %v4468, 0.19977711
      %v4533 = vadd.f32 %v4469, 0.19977711
      %v4534 = vadd.f32 %v4470, 0.19977711
      %v4535 = vadd.f32 %v4471, 0.19977711
      %v4536 = vadd.f32 %v4472, 0.19977711
      %v4537 = vadd.f32 %v4473, 0.19977711
      %v4538 = vadd.f32 %v4474, 0.19977711
      %v4539 = vadd.f32 %v4475, 0.19977711
      %v4540 = vadd.f32 %v4476, 0.19977711
      %v4541 = vadd.f32 %v4477, 0.19977711
      %v4542 = vadd.f32 %v4478, 0.19977711
      %v4543 = vadd.f32 %v4479, 0.19977711
      %v4544 = vadd.f32 %v4480, 0.19977711
      %v4545 = vadd.f32 %v4481, 0.19977711
      %v4546 = vadd.f32 %v4482, 0.19977711
      %v4547 = vadd.f32 %v4483, 0.19977711
      %v4548 = vadd.f32 %v4484, 0.19977711
      %v4549 = vadd.f32 %v4485, 0.19977711
      %v4550 = vadd.f32 %v4486, 0.19977711
      %v4551 = vadd.f32 %v4487, 0.19977711
      %v4552 = vadd.f32 %v4488, 0.19977711
      %v4553 = vadd.f32 %v4489, 0.19977711
      %v4554 = vadd.f32 %v4490, 0.19977711
      %v4555 = vadd.f32 %v4491, 0.19977711
      %v4556 = vadd.f32 %v4492, 0.19977711
      %v4557 = vadd.f32 %v4493, 0.19977711
      %v4558 = vadd.f32 %v4494, 0.19977711
      %v4559 = vadd.f32 %v4495, 0.19977711
      %v4560 = vadd.f32 %v4496, 0.19977711
      %v4561 = vadd.f32 %v4497, 0.19977711
      %v4562 = vadd.f32 %v4498, 0.19977711
      %v4563 = vadd.f32 %v4499, 0.19977711
      %v4564 = vadd.f32 %v4500, 0.19977711
      %v4565 = vadd.f32 %v4501, 0.19977711
      %v4566 = vadd.f32 %v4502, 0.19977711
      %v4567 = vadd.f32 %v4503, 0.19977711
      %v4568 = vadd.f32 %v4504, 0.19977711
      %v4569 = vadd.f32 %v4505, 0.19977711
      %v4570 = vadd.f32 %v4506, 0.19977711
      %v4571 = vadd.f32 %v4507, 0.19977711
      %v4572 = vadd.f32 %v4508, 0.19977711
      %v4573 = vadd.f32 %v4509, 0.19977711
      %v4574 = vadd.f32 %v4510, 0.19977711
      %v4575 = vadd.f32 %v4511, 0.19977711
      %v4576 = vadd.f32 %v4512, 0.19977711
      %v4577 = vadd.f32 %v4513, 0.19977711
      %v4578 = vadd.f32 %v4514, 0.19977711
      %v4579 = vadd.f32 %v4515, 0.19977711
      %v4580 = vmul.f32 %v4516, %v4260
      %v4581 = vmul.f32 %v4517, %v4261
      %v4582 = vmul.f32 %v4518, %v4262
      %v4583 = vmul.f32 %v4519, %v4263
      %v4584 = vmul.f32 %v4520, %v4264
      %v4585 = vmul.f32 %v4521, %v4265
      %v4586 = vmul.f32 %v4522, %v4266
      %v4587 = vmul.f32 %v4523, %v4267
      %v4588 = vmul.f32 %v4524, %v4268
      %v4589 = vmul.f32 %v4525, %v4269
      %v4590 = vmul.f32 %v4526, %v4270
      %v4591 = vmul.f32 %v4527, %v4271
      %v4592 = vmul.f32 %v4528, %v4272
      %v4593 = vmul.f32 %v4529, %v4273
      %v4594 = vmul.f32 %v4530, %v4274
      %v4595 = vmul.f32 %v4531, %v4275
      %v4596 = vmul.f32 %v4532, %v4276
      %v4597 = vmul.f32 %v4533, %v4277
      %v4598 = vmul.f32 %v4534, %v4278
      %v4599 = vmul.f32 %v4535, %v4279
      %v4600 = vmul.f32 %v4536, %v4280
      %v4601 = vmul.f32 %v4537, %v4281
      %v4602 = vmul.f32 %v4538, %v4282
      %v4603 = vmul.f32 %v4539, %v4283
      %v4604 = vmul.f32 %v4540, %v4284
      %v4605 = vmul.f32 %v4541, %v4285
      %v4606 = vmul.f32 %v4542, %v4286
      %v4607 = vmul.f32 %v4543, %v4287
      %v4608 = vmul.f32 %v4544, %v4288
      %v4609 = vmul.f32 %v4545, %v4289
      %v4610 = vmul.f32 %v4546, %v4290
      %v4611 = vmul.f32 %v4547, %v4291
      %v4612 = vmul.f32 %v4548, %v4292
      %v4613 = vmul.f32 %v4549, %v4293
      %v4614 = vmul.f32 %v4550, %v4294
      %v4615 = vmul.f32 %v4551, %v4295
      %v4616 = vmul.f32 %v4552, %v4296
      %v4617 = vmul.f32 %v4553, %v4297
      %v4618 = vmul.f32 %v4554, %v4298
      %v4619 = vmul.f32 %v4555, %v4299
      %v4620 = vmul.f32 %v4556, %v4300
      %v4621 = vmul.f32 %v4557, %v4301
      %v4622 = vmul.f32 %v4558, %v4302
      %v4623 = vmul.f32 %v4559, %v4303
      %v4624 = vmul.f32 %v4560, %v4304
      %v4625 = vmul.f32 %v4561, %v4305
      %v4626 = vmul.f32 %v4562, %v4306
      %v4627 = vmul.f32 %v4563, %v4307
      %v4628 = vmul.f32 %v4564, %v4308
      %v4629 = vmul.f32 %v4565, %v4309
      %v4630 = vmul.f32 %v4566, %v4310
      %v4631 = vmul.f32 %v4567, %v4311
      %v4632 = vmul.f32 %v4568, %v4312
      %v4633 = vmul.f32 %v4569, %v4313
      %v4634 = vmul.f32 %v4570, %v4314
      %v4635 = vmul.f32 %v4571, %v4315
      %v4636 = vmul.f32 %v4572, %v4316
      %v4637 = vmul.f32 %v4573, %v4317
      %v4638 = vmul.f32 %v4574, %v4318
      %v4639 = vmul.f32 %v4575, %v4319
      %v4640 = vmul.f32 %v4576, %v4320
      %v4641 = vmul.f32 %v4577, %v4321
      %v4642 = vmul.f32 %v4578, %v4322
      %v4643 = vmul.f32 %v4579, %v4323
      %v4644 = vsub.f32 %v4580, 0.3333295
      %v4645 = vsub.f32 %v4581, 0.3333295
      %v4646 = vsub.f32 %v4582, 0.3333295
      %v4647 = vsub.f32 %v4583, 0.3333295
      %v4648 = vsub.f32 %v4584, 0.3333295
      %v4649 = vsub.f32 %v4585, 0.3333295
      %v4650 = vsub.f32 %v4586, 0.3333295
      %v4651 = vsub.f32 %v4587, 0.3333295
      %v4652 = vsub.f32 %v4588, 0.3333295
      %v4653 = vsub.f32 %v4589, 0.3333295
      %v4654 = vsub.f32 %v4590, 0.3333295
      %v4655 = vsub.f32 %v4591, 0.3333295
      %v4656 = vsub.f32 %v4592, 0.3333295
      %v4657 = vsub.f32 %v4593, 0.3333295
      %v4658 = vsub.f32 %v4594, 0.3333295
      %v4659 = vsub.f32 %v4595, 0.3333295
      %v4660 = vsub.f32 %v4596, 0.3333295
      %v4661 = vsub.f32 %v4597, 0.3333295
      %v4662 = vsub.f32 %v4598, 0.3333295
      %v4663 = vsub.f32 %v4599, 0.3333295
      %v4664 = vsub.f32 %v4600, 0.3333295
      %v4665 = vsub.f32 %v4601, 0.3333295
      %v4666 = vsub.f32 %v4602, 0.3333295
      %v4667 = vsub.f32 %v4603, 0.3333295
      %v4668 = vsub.f32 %v4604, 0.3333295
      %v4669 = vsub.f32 %v4605, 0.3333295
      %v4670 = vsub.f32 %v4606, 0.3333295
      %v4671 = vsub.f32 %v4607, 0.3333295
      %v4672 = vsub.f32 %v4608, 0.3333295
      %v4673 = vsub.f32 %v4609, 0.3333295
      %v4674 = vsub.f32 %v4610, 0.3333295
      %v4675 = vsub.f32 %v4611, 0.3333295
      %v4676 = vsub.f32 %v4612, 0.3333295
      %v4677 = vsub.f32 %v4613, 0.3333295
      %v4678 = vsub.f32 %v4614, 0.3333295
      %v4679 = vsub.f32 %v4615, 0.3333295
      %v4680 = vsub.f32 %v4616, 0.3333295
      %v4681 = vsub.f32 %v4617, 0.3333295
      %v4682 = vsub.f32 %v4618, 0.3333295
      %v4683 = vsub.f32 %v4619, 0.3333295
      %v4684 = vsub.f32 %v4620, 0.3333295
      %v4685 = vsub.f32 %v4621, 0.3333295
      %v4686 = vsub.f32 %v4622, 0.3333295
      %v4687 = vsub.f32 %v4623, 0.3333295
      %v4688 = vsub.f32 %v4624, 0.3333295
      %v4689 = vsub.f32 %v4625, 0.3333295
      %v4690 = vsub.f32 %v4626, 0.3333295
      %v4691 = vsub.f32 %v4627, 0.3333295
      %v4692 = vsub.f32 %v4628, 0.3333295
      %v4693 = vsub.f32 %v4629, 0.3333295
      %v4694 = vsub.f32 %v4630, 0.3333295
      %v4695 = vsub.f32 %v4631, 0.3333295
      %v4696 = vsub.f32 %v4632, 0.3333295
      %v4697 = vsub.f32 %v4633, 0.3333295
      %v4698 = vsub.f32 %v4634, 0.3333295
      %v4699 = vsub.f32 %v4635, 0.3333295
      %v4700 = vsub.f32 %v4636, 0.3333295
      %v4701 = vsub.f32 %v4637, 0.3333295
      %v4702 = vsub.f32 %v4638, 0.3333295
      %v4703 = vsub.f32 %v4639, 0.3333295
      %v4704 = vsub.f32 %v4640, 0.3333295
      %v4705 = vsub.f32 %v4641, 0.3333295
      %v4706 = vsub.f32 %v4642, 0.3333295
      %v4707 = vsub.f32 %v4643, 0.3333295
      %v4708 = vmul.f32 %v4644, %v4260
      %v4709 = vmul.f32 %v4645, %v4261
      %v4710 = vmul.f32 %v4646, %v4262
      %v4711 = vmul.f32 %v4647, %v4263
      %v4712 = vmul.f32 %v4648, %v4264
      %v4713 = vmul.f32 %v4649, %v4265
      %v4714 = vmul.f32 %v4650, %v4266
      %v4715 = vmul.f32 %v4651, %v4267
      %v4716 = vmul.f32 %v4652, %v4268
      %v4717 = vmul.f32 %v4653, %v4269
      %v4718 = vmul.f32 %v4654, %v4270
      %v4719 = vmul.f32 %v4655, %v4271
      %v4720 = vmul.f32 %v4656, %v4272
      %v4721 = vmul.f32 %v4657, %v4273
      %v4722 = vmul.f32 %v4658, %v4274
      %v4723 = vmul.f32 %v4659, %v4275
      %v4724 = vmul.f32 %v4660, %v4276
      %v4725 = vmul.f32 %v4661, %v4277
      %v4726 = vmul.f32 %v4662, %v4278
      %v4727 = vmul.f32 %v4663, %v4279
      %v4728 = vmul.f32 %v4664, %v4280
      %v4729 = vmul.f32 %v4665, %v4281
      %v4730 = vmul.f32 %v4666, %v4282
      %v4731 = vmul.f32 %v4667, %v4283
      %v4732 = vmul.f32 %v4668, %v4284
      %v4733 = vmul.f32 %v4669, %v4285
      %v4734 = vmul.f32 %v4670, %v4286
      %v4735 = vmul.f32 %v4671, %v4287
      %v4736 = vmul.f32 %v4672, %v4288
      %v4737 = vmul.f32 %v4673, %v4289
      %v4738 = vmul.f32 %v4674, %v4290
      %v4739 = vmul.f32 %v4675, %v4291
      %v4740 = vmul.f32 %v4676, %v4292
      %v4741 = vmul.f32 %v4677, %v4293
      %v4742 = vmul.f32 %v4678, %v4294
      %v4743 = vmul.f32 %v4679, %v4295
      %v4744 = vmul.f32 %v4680, %v4296
      %v4745 = vmul.f32 %v4681, %v4297
      %v4746 = vmul.f32 %v4682, %v4298
      %v4747 = vmul.f32 %v4683, %v4299
      %v4748 = vmul.f32 %v4684, %v4300
      %v4749 = vmul.f32 %v4685, %v4301
      %v4750 = vmul.f32 %v4686, %v4302
      %v4751 = vmul.f32 %v4687, %v4303
      %v4752 = vmul.f32 %v4688, %v4304
      %v4753 = vmul.f32 %v4689, %v4305
      %v4754 = vmul.f32 %v4690, %v4306
      %v4755 = vmul.f32 %v4691, %v4307
      %v4756 = vmul.f32 %v4692, %v4308
      %v4757 = vmul.f32 %v4693, %v4309
      %v4758 = vmul.f32 %v4694, %v4310
      %v4759 = vmul.f32 %v4695, %v4311
      %v4760 = vmul.f32 %v4696, %v4312
      %v4761 = vmul.f32 %v4697, %v4313
      %v4762 = vmul.f32 %v4698, %v4314
      %v4763 = vmul.f32 %v4699, %v4315
      %v4764 = vmul.f32 %v4700, %v4316
      %v4765 = vmul.f32 %v4701, %v4317
      %v4766 = vmul.f32 %v4702, %v4318
      %v4767 = vmul.f32 %v4703, %v4319
      %v4768 = vmul.f32 %v4704, %v4320
      %v4769 = vmul.f32 %v4705, %v4321
      %v4770 = vmul.f32 %v4706, %v4322
      %v4771 = vmul.f32 %v4707, %v4323
      %v4772 = vmul.f32 %v4708, %v4196
      %v4773 = vmul.f32 %v4709, %v4197
      %v4774 = vmul.f32 %v4710, %v4198
      %v4775 = vmul.f32 %v4711, %v4199
      %v4776 = vmul.f32 %v4712, %v4200
      %v4777 = vmul.f32 %v4713, %v4201
      %v4778 = vmul.f32 %v4714, %v4202
      %v4779 = vmul.f32 %v4715, %v4203
      %v4780 = vmul.f32 %v4716, %v4204
      %v4781 = vmul.f32 %v4717, %v4205
      %v4782 = vmul.f32 %v4718, %v4206
      %v4783 = vmul.f32 %v4719, %v4207
      %v4784 = vmul.f32 %v4720, %v4208
      %v4785 = vmul.f32 %v4721, %v4209
      %v4786 = vmul.f32 %v4722, %v4210
      %v4787 = vmul.f32 %v4723, %v4211
      %v4788 = vmul.f32 %v4724, %v4212
      %v4789 = vmul.f32 %v4725, %v4213
      %v4790 = vmul.f32 %v4726, %v4214
      %v4791 = vmul.f32 %v4727, %v4215
      %v4792 = vmul.f32 %v4728, %v4216
      %v4793 = vmul.f32 %v4729, %v4217
      %v4794 = vmul.f32 %v4730, %v4218
      %v4795 = vmul.f32 %v4731, %v4219
      %v4796 = vmul.f32 %v4732, %v4220
      %v4797 = vmul.f32 %v4733, %v4221
      %v4798 = vmul.f32 %v4734, %v4222
      %v4799 = vmul.f32 %v4735, %v4223
      %v4800 = vmul.f32 %v4736, %v4224
      %v4801 = vmul.f32 %v4737, %v4225
      %v4802 = vmul.f32 %v4738, %v4226
      %v4803 = vmul.f32 %v4739, %v4227
      %v4804 = vmul.f32 %v4740, %v4228
      %v4805 = vmul.f32 %v4741, %v4229
      %v4806 = vmul.f32 %v4742, %v4230
      %v4807 = vmul.f32 %v4743, %v4231
      %v4808 = vmul.f32 %v4744, %v4232
      %v4809 = vmul.f32 %v4745, %v4233
      %v4810 = vmul.f32 %v4746, %v4234
      %v4811 = vmul.f32 %v4747, %v4235
      %v4812 = vmul.f32 %v4748, %v4236
      %v4813 = vmul.f32 %v4749, %v4237
      %v4814 = vmul.f32 %v4750, %v4238
      %v4815 = vmul.f32 %v4751, %v4239
      %v4816 = vmul.f32 %v4752, %v4240
      %v4817 = vmul.f32 %v4753, %v4241
      %v4818 = vmul.f32 %v4754, %v4242
      %v4819 = vmul.f32 %v4755, %v4243
      %v4820 = vmul.f32 %v4756, %v4244
      %v4821 = vmul.f32 %v4757, %v4245
      %v4822 = vmul.f32 %v4758, %v4246
      %v4823 = vmul.f32 %v4759, %v4247
      %v4824 = vmul.f32 %v4760, %v4248
      %v4825 = vmul.f32 %v4761, %v4249
      %v4826 = vmul.f32 %v4762, %v4250
      %v4827 = vmul.f32 %v4763, %v4251
      %v4828 = vmul.f32 %v4764, %v4252
      %v4829 = vmul.f32 %v4765, %v4253
      %v4830 = vmul.f32 %v4766, %v4254
      %v4831 = vmul.f32 %v4767, %v4255
      %v4832 = vmul.f32 %v4768, %v4256
      %v4833 = vmul.f32 %v4769, %v4257
      %v4834 = vmul.f32 %v4770, %v4258
      %v4835 = vmul.f32 %v4771, %v4259
      %v4836 = vadd.f32 %v4772, %v4196
      %v4837 = vadd.f32 %v4773, %v4197
      %v4838 = vadd.f32 %v4774, %v4198
      %v4839 = vadd.f32 %v4775, %v4199
      %v4840 = vadd.f32 %v4776, %v4200
      %v4841 = vadd.f32 %v4777, %v4201
      %v4842 = vadd.f32 %v4778, %v4202
      %v4843 = vadd.f32 %v4779, %v4203
      %v4844 = vadd.f32 %v4780, %v4204
      %v4845 = vadd.f32 %v4781, %v4205
      %v4846 = vadd.f32 %v4782, %v4206
      %v4847 = vadd.f32 %v4783, %v4207
      %v4848 = vadd.f32 %v4784, %v4208
      %v4849 = vadd.f32 %v4785, %v4209
      %v4850 = vadd.f32 %v4786, %v4210
      %v4851 = vadd.f32 %v4787, %v4211
      %v4852 = vadd.f32 %v4788, %v4212
      %v4853 = vadd.f32 %v4789, %v4213
      %v4854 = vadd.f32 %v4790, %v4214
      %v4855 = vadd.f32 %v4791, %v4215
      %v4856 = vadd.f32 %v4792, %v4216
      %v4857 = vadd.f32 %v4793, %v4217
      %v4858 = vadd.f32 %v4794, %v4218
      %v4859 = vadd.f32 %v4795, %v4219
      %v4860 = vadd.f32 %v4796, %v4220
      %v4861 = vadd.f32 %v4797, %v4221
      %v4862 = vadd.f32 %v4798, %v4222
      %v4863 = vadd.f32 %v4799, %v4223
      %v4864 = vadd.f32 %v4800, %v4224
      %v4865 = vadd.f32 %v4801, %v4225
      %v4866 = vadd.f32 %v4802, %v4226
      %v4867 = vadd.f32 %v4803, %v4227
      %v4868 = vadd.f32 %v4804, %v4228
      %v4869 = vadd.f32 %v4805, %v4229
      %v4870 = vadd.f32 %v4806, %v4230
      %v4871 = vadd.f32 %v4807, %v4231
      %v4872 = vadd.f32 %v4808, %v4232
      %v4873 = vadd.f32 %v4809, %v4233
      %v4874 = vadd.f32 %v4810, %v4234
      %v4875 = vadd.f32 %v4811, %v4235
      %v4876 = vadd.f32 %v4812, %v4236
      %v4877 = vadd.f32 %v4813, %v4237
      %v4878 = vadd.f32 %v4814, %v4238
      %v4879 = vadd.f32 %v4815, %v4239
      %v4880 = vadd.f32 %v4816, %v4240
      %v4881 = vadd.f32 %v4817, %v4241
      %v4882 = vadd.f32 %v4818, %v4242
      %v4883 = vadd.f32 %v4819, %v4243
      %v4884 = vadd.f32 %v4820, %v4244
      %v4885 = vadd.f32 %v4821, %v4245
      %v4886 = vadd.f32 %v4822, %v4246
      %v4887 = vadd.f32 %v4823, %v4247
      %v4888 = vadd.f32 %v4824, %v4248
      %v4889 = vadd.f32 %v4825, %v4249
      %v4890 = vadd.f32 %v4826, %v4250
      %v4891 = vadd.f32 %v4827, %v4251
      %v4892 = vadd.f32 %v4828, %v4252
      %v4893 = vadd.f32 %v4829, %v4253
      %v4894 = vadd.f32 %v4830, %v4254
      %v4895 = vadd.f32 %v4831, %v4255
      %v4896 = vadd.f32 %v4832, %v4256
      %v4897 = vadd.f32 %v4833, %v4257
      %v4898 = vadd.f32 %v4834, %v4258
      %v4899 = vadd.f32 %v4835, %v4259
      %v4900 = vsel %vm3684, 0.7853982, 0.0
      %v4901 = vsel %vm3685, 0.7853982, 0.0
      %v4902 = vsel %vm3686, 0.7853982, 0.0
      %v4903 = vsel %vm3687, 0.7853982, 0.0
      %v4904 = vsel %vm3688, 0.7853982, 0.0
      %v4905 = vsel %vm3689, 0.7853982, 0.0
      %v4906 = vsel %vm3690, 0.7853982, 0.0
      %v4907 = vsel %vm3691, 0.7853982, 0.0
      %v4908 = vsel %vm3692, 0.7853982, 0.0
      %v4909 = vsel %vm3693, 0.7853982, 0.0
      %v4910 = vsel %vm3694, 0.7853982, 0.0
      %v4911 = vsel %vm3695, 0.7853982, 0.0
      %v4912 = vsel %vm3696, 0.7853982, 0.0
      %v4913 = vsel %vm3697, 0.7853982, 0.0
      %v4914 = vsel %vm3698, 0.7853982, 0.0
      %v4915 = vsel %vm3699, 0.7853982, 0.0
      %v4916 = vsel %vm3700, 0.7853982, 0.0
      %v4917 = vsel %vm3701, 0.7853982, 0.0
      %v4918 = vsel %vm3702, 0.7853982, 0.0
      %v4919 = vsel %vm3703, 0.7853982, 0.0
      %v4920 = vsel %vm3704, 0.7853982, 0.0
      %v4921 = vsel %vm3705, 0.7853982, 0.0
      %v4922 = vsel %vm3706, 0.7853982, 0.0
      %v4923 = vsel %vm3707, 0.7853982, 0.0
      %v4924 = vsel %vm3708, 0.7853982, 0.0
      %v4925 = vsel %vm3709, 0.7853982, 0.0
      %v4926 = vsel %vm3710, 0.7853982, 0.0
      %v4927 = vsel %vm3711, 0.7853982, 0.0
      %v4928 = vsel %vm3712, 0.7853982, 0.0
      %v4929 = vsel %vm3713, 0.7853982, 0.0
      %v4930 = vsel %vm3714, 0.7853982, 0.0
      %v4931 = vsel %vm3715, 0.7853982, 0.0
      %v4932 = vsel %vm3716, 0.7853982, 0.0
      %v4933 = vsel %vm3717, 0.7853982, 0.0
      %v4934 = vsel %vm3718, 0.7853982, 0.0
      %v4935 = vsel %vm3719, 0.7853982, 0.0
      %v4936 = vsel %vm3720, 0.7853982, 0.0
      %v4937 = vsel %vm3721, 0.7853982, 0.0
      %v4938 = vsel %vm3722, 0.7853982, 0.0
      %v4939 = vsel %vm3723, 0.7853982, 0.0
      %v4940 = vsel %vm3724, 0.7853982, 0.0
      %v4941 = vsel %vm3725, 0.7853982, 0.0
      %v4942 = vsel %vm3726, 0.7853982, 0.0
      %v4943 = vsel %vm3727, 0.7853982, 0.0
      %v4944 = vsel %vm3728, 0.7853982, 0.0
      %v4945 = vsel %vm3729, 0.7853982, 0.0
      %v4946 = vsel %vm3730, 0.7853982, 0.0
      %v4947 = vsel %vm3731, 0.7853982, 0.0
      %v4948 = vsel %vm3732, 0.7853982, 0.0
      %v4949 = vsel %vm3733, 0.7853982, 0.0
      %v4950 = vsel %vm3734, 0.7853982, 0.0
      %v4951 = vsel %vm3735, 0.7853982, 0.0
      %v4952 = vsel %vm3736, 0.7853982, 0.0
      %v4953 = vsel %vm3737, 0.7853982, 0.0
      %v4954 = vsel %vm3738, 0.7853982, 0.0
      %v4955 = vsel %vm3739, 0.7853982, 0.0
      %v4956 = vsel %vm3740, 0.7853982, 0.0
      %v4957 = vsel %vm3741, 0.7853982, 0.0
      %v4958 = vsel %vm3742, 0.7853982, 0.0
      %v4959 = vsel %vm3743, 0.7853982, 0.0
      %v4960 = vsel %vm3744, 0.7853982, 0.0
      %v4961 = vsel %vm3745, 0.7853982, 0.0
      %v4962 = vsel %vm3746, 0.7853982, 0.0
      %v4963 = vsel %vm3747, 0.7853982, 0.0
      %v4964 = vsel %vm3620, 1.5707964, %v4900
      %v4965 = vsel %vm3621, 1.5707964, %v4901
      %v4966 = vsel %vm3622, 1.5707964, %v4902
      %v4967 = vsel %vm3623, 1.5707964, %v4903
      %v4968 = vsel %vm3624, 1.5707964, %v4904
      %v4969 = vsel %vm3625, 1.5707964, %v4905
      %v4970 = vsel %vm3626, 1.5707964, %v4906
      %v4971 = vsel %vm3627, 1.5707964, %v4907
      %v4972 = vsel %vm3628, 1.5707964, %v4908
      %v4973 = vsel %vm3629, 1.5707964, %v4909
      %v4974 = vsel %vm3630, 1.5707964, %v4910
      %v4975 = vsel %vm3631, 1.5707964, %v4911
      %v4976 = vsel %vm3632, 1.5707964, %v4912
      %v4977 = vsel %vm3633, 1.5707964, %v4913
      %v4978 = vsel %vm3634, 1.5707964, %v4914
      %v4979 = vsel %vm3635, 1.5707964, %v4915
      %v4980 = vsel %vm3636, 1.5707964, %v4916
      %v4981 = vsel %vm3637, 1.5707964, %v4917
      %v4982 = vsel %vm3638, 1.5707964, %v4918
      %v4983 = vsel %vm3639, 1.5707964, %v4919
      %v4984 = vsel %vm3640, 1.5707964, %v4920
      %v4985 = vsel %vm3641, 1.5707964, %v4921
      %v4986 = vsel %vm3642, 1.5707964, %v4922
      %v4987 = vsel %vm3643, 1.5707964, %v4923
      %v4988 = vsel %vm3644, 1.5707964, %v4924
      %v4989 = vsel %vm3645, 1.5707964, %v4925
      %v4990 = vsel %vm3646, 1.5707964, %v4926
      %v4991 = vsel %vm3647, 1.5707964, %v4927
      %v4992 = vsel %vm3648, 1.5707964, %v4928
      %v4993 = vsel %vm3649, 1.5707964, %v4929
      %v4994 = vsel %vm3650, 1.5707964, %v4930
      %v4995 = vsel %vm3651, 1.5707964, %v4931
      %v4996 = vsel %vm3652, 1.5707964, %v4932
      %v4997 = vsel %vm3653, 1.5707964, %v4933
      %v4998 = vsel %vm3654, 1.5707964, %v4934
      %v4999 = vsel %vm3655, 1.5707964, %v4935
      %v5000 = vsel %vm3656, 1.5707964, %v4936
      %v5001 = vsel %vm3657, 1.5707964, %v4937
      %v5002 = vsel %vm3658, 1.5707964, %v4938
      %v5003 = vsel %vm3659, 1.5707964, %v4939
      %v5004 = vsel %vm3660, 1.5707964, %v4940
      %v5005 = vsel %vm3661, 1.5707964, %v4941
      %v5006 = vsel %vm3662, 1.5707964, %v4942
      %v5007 = vsel %vm3663, 1.5707964, %v4943
      %v5008 = vsel %vm3664, 1.5707964, %v4944
      %v5009 = vsel %vm3665, 1.5707964, %v4945
      %v5010 = vsel %vm3666, 1.5707964, %v4946
      %v5011 = vsel %vm3667, 1.5707964, %v4947
      %v5012 = vsel %vm3668, 1.5707964, %v4948
      %v5013 = vsel %vm3669, 1.5707964, %v4949
      %v5014 = vsel %vm3670, 1.5707964, %v4950
      %v5015 = vsel %vm3671, 1.5707964, %v4951
      %v5016 = vsel %vm3672, 1.5707964, %v4952
      %v5017 = vsel %vm3673, 1.5707964, %v4953
      %v5018 = vsel %vm3674, 1.5707964, %v4954
      %v5019 = vsel %vm3675, 1.5707964, %v4955
      %v5020 = vsel %vm3676, 1.5707964, %v4956
      %v5021 = vsel %vm3677, 1.5707964, %v4957
      %v5022 = vsel %vm3678, 1.5707964, %v4958
      %v5023 = vsel %vm3679, 1.5707964, %v4959
      %v5024 = vsel %vm3680, 1.5707964, %v4960
      %v5025 = vsel %vm3681, 1.5707964, %v4961
      %v5026 = vsel %vm3682, 1.5707964, %v4962
      %v5027 = vsel %vm3683, 1.5707964, %v4963
      %v5028 = vadd.f32 %v4964, %v4836
      %v5029 = vadd.f32 %v4965, %v4837
      %v5030 = vadd.f32 %v4966, %v4838
      %v5031 = vadd.f32 %v4967, %v4839
      %v5032 = vadd.f32 %v4968, %v4840
      %v5033 = vadd.f32 %v4969, %v4841
      %v5034 = vadd.f32 %v4970, %v4842
      %v5035 = vadd.f32 %v4971, %v4843
      %v5036 = vadd.f32 %v4972, %v4844
      %v5037 = vadd.f32 %v4973, %v4845
      %v5038 = vadd.f32 %v4974, %v4846
      %v5039 = vadd.f32 %v4975, %v4847
      %v5040 = vadd.f32 %v4976, %v4848
      %v5041 = vadd.f32 %v4977, %v4849
      %v5042 = vadd.f32 %v4978, %v4850
      %v5043 = vadd.f32 %v4979, %v4851
      %v5044 = vadd.f32 %v4980, %v4852
      %v5045 = vadd.f32 %v4981, %v4853
      %v5046 = vadd.f32 %v4982, %v4854
      %v5047 = vadd.f32 %v4983, %v4855
      %v5048 = vadd.f32 %v4984, %v4856
      %v5049 = vadd.f32 %v4985, %v4857
      %v5050 = vadd.f32 %v4986, %v4858
      %v5051 = vadd.f32 %v4987, %v4859
      %v5052 = vadd.f32 %v4988, %v4860
      %v5053 = vadd.f32 %v4989, %v4861
      %v5054 = vadd.f32 %v4990, %v4862
      %v5055 = vadd.f32 %v4991, %v4863
      %v5056 = vadd.f32 %v4992, %v4864
      %v5057 = vadd.f32 %v4993, %v4865
      %v5058 = vadd.f32 %v4994, %v4866
      %v5059 = vadd.f32 %v4995, %v4867
      %v5060 = vadd.f32 %v4996, %v4868
      %v5061 = vadd.f32 %v4997, %v4869
      %v5062 = vadd.f32 %v4998, %v4870
      %v5063 = vadd.f32 %v4999, %v4871
      %v5064 = vadd.f32 %v5000, %v4872
      %v5065 = vadd.f32 %v5001, %v4873
      %v5066 = vadd.f32 %v5002, %v4874
      %v5067 = vadd.f32 %v5003, %v4875
      %v5068 = vadd.f32 %v5004, %v4876
      %v5069 = vadd.f32 %v5005, %v4877
      %v5070 = vadd.f32 %v5006, %v4878
      %v5071 = vadd.f32 %v5007, %v4879
      %v5072 = vadd.f32 %v5008, %v4880
      %v5073 = vadd.f32 %v5009, %v4881
      %v5074 = vadd.f32 %v5010, %v4882
      %v5075 = vadd.f32 %v5011, %v4883
      %v5076 = vadd.f32 %v5012, %v4884
      %v5077 = vadd.f32 %v5013, %v4885
      %v5078 = vadd.f32 %v5014, %v4886
      %v5079 = vadd.f32 %v5015, %v4887
      %v5080 = vadd.f32 %v5016, %v4888
      %v5081 = vadd.f32 %v5017, %v4889
      %v5082 = vadd.f32 %v5018, %v4890
      %v5083 = vadd.f32 %v5019, %v4891
      %v5084 = vadd.f32 %v5020, %v4892
      %v5085 = vadd.f32 %v5021, %v4893
      %v5086 = vadd.f32 %v5022, %v4894
      %v5087 = vadd.f32 %v5023, %v4895
      %v5088 = vadd.f32 %v5024, %v4896
      %v5089 = vadd.f32 %v5025, %v4897
      %v5090 = vadd.f32 %v5026, %v4898
      %v5091 = vadd.f32 %v5027, %v4899
      %v5092 = vsel %vm3364, 1.5707964, %v5028
      %v5093 = vsel %vm3365, 1.5707964, %v5029
      %v5094 = vsel %vm3366, 1.5707964, %v5030
      %v5095 = vsel %vm3367, 1.5707964, %v5031
      %v5096 = vsel %vm3368, 1.5707964, %v5032
      %v5097 = vsel %vm3369, 1.5707964, %v5033
      %v5098 = vsel %vm3370, 1.5707964, %v5034
      %v5099 = vsel %vm3371, 1.5707964, %v5035
      %v5100 = vsel %vm3372, 1.5707964, %v5036
      %v5101 = vsel %vm3373, 1.5707964, %v5037
      %v5102 = vsel %vm3374, 1.5707964, %v5038
      %v5103 = vsel %vm3375, 1.5707964, %v5039
      %v5104 = vsel %vm3376, 1.5707964, %v5040
      %v5105 = vsel %vm3377, 1.5707964, %v5041
      %v5106 = vsel %vm3378, 1.5707964, %v5042
      %v5107 = vsel %vm3379, 1.5707964, %v5043
      %v5108 = vsel %vm3380, 1.5707964, %v5044
      %v5109 = vsel %vm3381, 1.5707964, %v5045
      %v5110 = vsel %vm3382, 1.5707964, %v5046
      %v5111 = vsel %vm3383, 1.5707964, %v5047
      %v5112 = vsel %vm3384, 1.5707964, %v5048
      %v5113 = vsel %vm3385, 1.5707964, %v5049
      %v5114 = vsel %vm3386, 1.5707964, %v5050
      %v5115 = vsel %vm3387, 1.5707964, %v5051
      %v5116 = vsel %vm3388, 1.5707964, %v5052
      %v5117 = vsel %vm3389, 1.5707964, %v5053
      %v5118 = vsel %vm3390, 1.5707964, %v5054
      %v5119 = vsel %vm3391, 1.5707964, %v5055
      %v5120 = vsel %vm3392, 1.5707964, %v5056
      %v5121 = vsel %vm3393, 1.5707964, %v5057
      %v5122 = vsel %vm3394, 1.5707964, %v5058
      %v5123 = vsel %vm3395, 1.5707964, %v5059
      %v5124 = vsel %vm3396, 1.5707964, %v5060
      %v5125 = vsel %vm3397, 1.5707964, %v5061
      %v5126 = vsel %vm3398, 1.5707964, %v5062
      %v5127 = vsel %vm3399, 1.5707964, %v5063
      %v5128 = vsel %vm3400, 1.5707964, %v5064
      %v5129 = vsel %vm3401, 1.5707964, %v5065
      %v5130 = vsel %vm3402, 1.5707964, %v5066
      %v5131 = vsel %vm3403, 1.5707964, %v5067
      %v5132 = vsel %vm3404, 1.5707964, %v5068
      %v5133 = vsel %vm3405, 1.5707964, %v5069
      %v5134 = vsel %vm3406, 1.5707964, %v5070
      %v5135 = vsel %vm3407, 1.5707964, %v5071
      %v5136 = vsel %vm3408, 1.5707964, %v5072
      %v5137 = vsel %vm3409, 1.5707964, %v5073
      %v5138 = vsel %vm3410, 1.5707964, %v5074
      %v5139 = vsel %vm3411, 1.5707964, %v5075
      %v5140 = vsel %vm3412, 1.5707964, %v5076
      %v5141 = vsel %vm3413, 1.5707964, %v5077
      %v5142 = vsel %vm3414, 1.5707964, %v5078
      %v5143 = vsel %vm3415, 1.5707964, %v5079
      %v5144 = vsel %vm3416, 1.5707964, %v5080
      %v5145 = vsel %vm3417, 1.5707964, %v5081
      %v5146 = vsel %vm3418, 1.5707964, %v5082
      %v5147 = vsel %vm3419, 1.5707964, %v5083
      %v5148 = vsel %vm3420, 1.5707964, %v5084
      %v5149 = vsel %vm3421, 1.5707964, %v5085
      %v5150 = vsel %vm3422, 1.5707964, %v5086
      %v5151 = vsel %vm3423, 1.5707964, %v5087
      %v5152 = vsel %vm3424, 1.5707964, %v5088
      %v5153 = vsel %vm3425, 1.5707964, %v5089
      %v5154 = vsel %vm3426, 1.5707964, %v5090
      %v5155 = vsel %vm3427, 1.5707964, %v5091
      %vm5156 = vcmp.lt.f32.partialorder %v2404, 0.0
      %vm5157 = vcmp.lt.f32.partialorder %v2405, 0.0
      %vm5158 = vcmp.lt.f32.partialorder %v2408, 0.0
      %vm5159 = vcmp.lt.f32.partialorder %v2409, 0.0
      %vm5160 = vcmp.lt.f32.partialorder %v2412, 0.0
      %vm5161 = vcmp.lt.f32.partialorder %v2413, 0.0
      %vm5162 = vcmp.lt.f32.partialorder %v2416, 0.0
      %vm5163 = vcmp.lt.f32.partialorder %v2417, 0.0
      %vm5164 = vcmp.lt.f32.partialorder %v2420, 0.0
      %vm5165 = vcmp.lt.f32.partialorder %v2421, 0.0
      %vm5166 = vcmp.lt.f32.partialorder %v2424, 0.0
      %vm5167 = vcmp.lt.f32.partialorder %v2425, 0.0
      %vm5168 = vcmp.lt.f32.partialorder %v2428, 0.0
      %vm5169 = vcmp.lt.f32.partialorder %v2429, 0.0
      %vm5170 = vcmp.lt.f32.partialorder %v2432, 0.0
      %vm5171 = vcmp.lt.f32.partialorder %v2433, 0.0
      %vm5172 = vcmp.lt.f32.partialorder %v2436, 0.0
      %vm5173 = vcmp.lt.f32.partialorder %v2437, 0.0
      %vm5174 = vcmp.lt.f32.partialorder %v2440, 0.0
      %vm5175 = vcmp.lt.f32.partialorder %v2441, 0.0
      %vm5176 = vcmp.lt.f32.partialorder %v2444, 0.0
      %vm5177 = vcmp.lt.f32.partialorder %v2445, 0.0
      %vm5178 = vcmp.lt.f32.partialorder %v2448, 0.0
      %vm5179 = vcmp.lt.f32.partialorder %v2449, 0.0
      %vm5180 = vcmp.lt.f32.partialorder %v2452, 0.0
      %vm5181 = vcmp.lt.f32.partialorder %v2453, 0.0
      %vm5182 = vcmp.lt.f32.partialorder %v2456, 0.0
      %vm5183 = vcmp.lt.f32.partialorder %v2457, 0.0
      %vm5184 = vcmp.lt.f32.partialorder %v2460, 0.0
      %vm5185 = vcmp.lt.f32.partialorder %v2461, 0.0
      %vm5186 = vcmp.lt.f32.partialorder %v2464, 0.0
      %vm5187 = vcmp.lt.f32.partialorder %v2465, 0.0
      %vm5188 = vcmp.lt.f32.partialorder %v2468, 0.0
      %vm5189 = vcmp.lt.f32.partialorder %v2469, 0.0
      %vm5190 = vcmp.lt.f32.partialorder %v2472, 0.0
      %vm5191 = vcmp.lt.f32.partialorder %v2473, 0.0
      %vm5192 = vcmp.lt.f32.partialorder %v2476, 0.0
      %vm5193 = vcmp.lt.f32.partialorder %v2477, 0.0
      %vm5194 = vcmp.lt.f32.partialorder %v2480, 0.0
      %vm5195 = vcmp.lt.f32.partialorder %v2481, 0.0
      %vm5196 = vcmp.lt.f32.partialorder %v2484, 0.0
      %vm5197 = vcmp.lt.f32.partialorder %v2485, 0.0
      %vm5198 = vcmp.lt.f32.partialorder %v2488, 0.0
      %vm5199 = vcmp.lt.f32.partialorder %v2489, 0.0
      %vm5200 = vcmp.lt.f32.partialorder %v2492, 0.0
      %vm5201 = vcmp.lt.f32.partialorder %v2493, 0.0
      %vm5202 = vcmp.lt.f32.partialorder %v2496, 0.0
      %vm5203 = vcmp.lt.f32.partialorder %v2497, 0.0
      %vm5204 = vcmp.lt.f32.partialorder %v2500, 0.0
      %vm5205 = vcmp.lt.f32.partialorder %v2501, 0.0
      %vm5206 = vcmp.lt.f32.partialorder %v2504, 0.0
      %vm5207 = vcmp.lt.f32.partialorder %v2505, 0.0
      %vm5208 = vcmp.lt.f32.partialorder %v2508, 0.0
      %vm5209 = vcmp.lt.f32.partialorder %v2509, 0.0
      %vm5210 = vcmp.lt.f32.partialorder %v2512, 0.0
      %vm5211 = vcmp.lt.f32.partialorder %v2513, 0.0
      %vm5212 = vcmp.lt.f32.partialorder %v2516, 0.0
      %vm5213 = vcmp.lt.f32.partialorder %v2517, 0.0
      %vm5214 = vcmp.lt.f32.partialorder %v2520, 0.0
      %vm5215 = vcmp.lt.f32.partialorder %v2521, 0.0
      %vm5216 = vcmp.lt.f32.partialorder %v2524, 0.0
      %vm5217 = vcmp.lt.f32.partialorder %v2525, 0.0
      %vm5218 = vcmp.lt.f32.partialorder %v2528, 0.0
      %vm5219 = vcmp.lt.f32.partialorder %v2529, 0.0
      %v5220 = vsub.f32 3.1415927, %v5092
      %v5221 = vsub.f32 3.1415927, %v5093
      %v5222 = vsub.f32 3.1415927, %v5094
      %v5223 = vsub.f32 3.1415927, %v5095
      %v5224 = vsub.f32 3.1415927, %v5096
      %v5225 = vsub.f32 3.1415927, %v5097
      %v5226 = vsub.f32 3.1415927, %v5098
      %v5227 = vsub.f32 3.1415927, %v5099
      %v5228 = vsub.f32 3.1415927, %v5100
      %v5229 = vsub.f32 3.1415927, %v5101
      %v5230 = vsub.f32 3.1415927, %v5102
      %v5231 = vsub.f32 3.1415927, %v5103
      %v5232 = vsub.f32 3.1415927, %v5104
      %v5233 = vsub.f32 3.1415927, %v5105
      %v5234 = vsub.f32 3.1415927, %v5106
      %v5235 = vsub.f32 3.1415927, %v5107
      %v5236 = vsub.f32 3.1415927, %v5108
      %v5237 = vsub.f32 3.1415927, %v5109
      %v5238 = vsub.f32 3.1415927, %v5110
      %v5239 = vsub.f32 3.1415927, %v5111
      %v5240 = vsub.f32 3.1415927, %v5112
      %v5241 = vsub.f32 3.1415927, %v5113
      %v5242 = vsub.f32 3.1415927, %v5114
      %v5243 = vsub.f32 3.1415927, %v5115
      %v5244 = vsub.f32 3.1415927, %v5116
      %v5245 = vsub.f32 3.1415927, %v5117
      %v5246 = vsub.f32 3.1415927, %v5118
      %v5247 = vsub.f32 3.1415927, %v5119
      %v5248 = vsub.f32 3.1415927, %v5120
      %v5249 = vsub.f32 3.1415927, %v5121
      %v5250 = vsub.f32 3.1415927, %v5122
      %v5251 = vsub.f32 3.1415927, %v5123
      %v5252 = vsub.f32 3.1415927, %v5124
      %v5253 = vsub.f32 3.1415927, %v5125
      %v5254 = vsub.f32 3.1415927, %v5126
      %v5255 = vsub.f32 3.1415927, %v5127
      %v5256 = vsub.f32 3.1415927, %v5128
      %v5257 = vsub.f32 3.1415927, %v5129
      %v5258 = vsub.f32 3.1415927, %v5130
      %v5259 = vsub.f32 3.1415927, %v5131
      %v5260 = vsub.f32 3.1415927, %v5132
      %v5261 = vsub.f32 3.1415927, %v5133
      %v5262 = vsub.f32 3.1415927, %v5134
      %v5263 = vsub.f32 3.1415927, %v5135
      %v5264 = vsub.f32 3.1415927, %v5136
      %v5265 = vsub.f32 3.1415927, %v5137
      %v5266 = vsub.f32 3.1415927, %v5138
      %v5267 = vsub.f32 3.1415927, %v5139
      %v5268 = vsub.f32 3.1415927, %v5140
      %v5269 = vsub.f32 3.1415927, %v5141
      %v5270 = vsub.f32 3.1415927, %v5142
      %v5271 = vsub.f32 3.1415927, %v5143
      %v5272 = vsub.f32 3.1415927, %v5144
      %v5273 = vsub.f32 3.1415927, %v5145
      %v5274 = vsub.f32 3.1415927, %v5146
      %v5275 = vsub.f32 3.1415927, %v5147
      %v5276 = vsub.f32 3.1415927, %v5148
      %v5277 = vsub.f32 3.1415927, %v5149
      %v5278 = vsub.f32 3.1415927, %v5150
      %v5279 = vsub.f32 3.1415927, %v5151
      %v5280 = vsub.f32 3.1415927, %v5152
      %v5281 = vsub.f32 3.1415927, %v5153
      %v5282 = vsub.f32 3.1415927, %v5154
      %v5283 = vsub.f32 3.1415927, %v5155
      %v5284 = vsel %vm5156, %v5220, %v5092
      %v5285 = vsel %vm5157, %v5221, %v5093
      %v5286 = vsel %vm5158, %v5222, %v5094
      %v5287 = vsel %vm5159, %v5223, %v5095
      %v5288 = vsel %vm5160, %v5224, %v5096
      %v5289 = vsel %vm5161, %v5225, %v5097
      %v5290 = vsel %vm5162, %v5226, %v5098
      %v5291 = vsel %vm5163, %v5227, %v5099
      %v5292 = vsel %vm5164, %v5228, %v5100
      %v5293 = vsel %vm5165, %v5229, %v5101
      %v5294 = vsel %vm5166, %v5230, %v5102
      %v5295 = vsel %vm5167, %v5231, %v5103
      %v5296 = vsel %vm5168, %v5232, %v5104
      %v5297 = vsel %vm5169, %v5233, %v5105
      %v5298 = vsel %vm5170, %v5234, %v5106
      %v5299 = vsel %vm5171, %v5235, %v5107
      %v5300 = vsel %vm5172, %v5236, %v5108
      %v5301 = vsel %vm5173, %v5237, %v5109
      %v5302 = vsel %vm5174, %v5238, %v5110
      %v5303 = vsel %vm5175, %v5239, %v5111
      %v5304 = vsel %vm5176, %v5240, %v5112
      %v5305 = vsel %vm5177, %v5241, %v5113
      %v5306 = vsel %vm5178, %v5242, %v5114
      %v5307 = vsel %vm5179, %v5243, %v5115
      %v5308 = vsel %vm5180, %v5244, %v5116
      %v5309 = vsel %vm5181, %v5245, %v5117
      %v5310 = vsel %vm5182, %v5246, %v5118
      %v5311 = vsel %vm5183, %v5247, %v5119
      %v5312 = vsel %vm5184, %v5248, %v5120
      %v5313 = vsel %vm5185, %v5249, %v5121
      %v5314 = vsel %vm5186, %v5250, %v5122
      %v5315 = vsel %vm5187, %v5251, %v5123
      %v5316 = vsel %vm5188, %v5252, %v5124
      %v5317 = vsel %vm5189, %v5253, %v5125
      %v5318 = vsel %vm5190, %v5254, %v5126
      %v5319 = vsel %vm5191, %v5255, %v5127
      %v5320 = vsel %vm5192, %v5256, %v5128
      %v5321 = vsel %vm5193, %v5257, %v5129
      %v5322 = vsel %vm5194, %v5258, %v5130
      %v5323 = vsel %vm5195, %v5259, %v5131
      %v5324 = vsel %vm5196, %v5260, %v5132
      %v5325 = vsel %vm5197, %v5261, %v5133
      %v5326 = vsel %vm5198, %v5262, %v5134
      %v5327 = vsel %vm5199, %v5263, %v5135
      %v5328 = vsel %vm5200, %v5264, %v5136
      %v5329 = vsel %vm5201, %v5265, %v5137
      %v5330 = vsel %vm5202, %v5266, %v5138
      %v5331 = vsel %vm5203, %v5267, %v5139
      %v5332 = vsel %vm5204, %v5268, %v5140
      %v5333 = vsel %vm5205, %v5269, %v5141
      %v5334 = vsel %vm5206, %v5270, %v5142
      %v5335 = vsel %vm5207, %v5271, %v5143
      %v5336 = vsel %vm5208, %v5272, %v5144
      %v5337 = vsel %vm5209, %v5273, %v5145
      %v5338 = vsel %vm5210, %v5274, %v5146
      %v5339 = vsel %vm5211, %v5275, %v5147
      %v5340 = vsel %vm5212, %v5276, %v5148
      %v5341 = vsel %vm5213, %v5277, %v5149
      %v5342 = vsel %vm5214, %v5278, %v5150
      %v5343 = vsel %vm5215, %v5279, %v5151
      %v5344 = vsel %vm5216, %v5280, %v5152
      %v5345 = vsel %vm5217, %v5281, %v5153
      %v5346 = vsel %vm5218, %v5282, %v5154
      %v5347 = vsel %vm5219, %v5283, %v5155
      %vm5348 = vcmp.lt.f32.partialorder %v2406, 0.0
      %vm5349 = vcmp.lt.f32.partialorder %v2407, 0.0
      %vm5350 = vcmp.lt.f32.partialorder %v2410, 0.0
      %vm5351 = vcmp.lt.f32.partialorder %v2411, 0.0
      %vm5352 = vcmp.lt.f32.partialorder %v2414, 0.0
      %vm5353 = vcmp.lt.f32.partialorder %v2415, 0.0
      %vm5354 = vcmp.lt.f32.partialorder %v2418, 0.0
      %vm5355 = vcmp.lt.f32.partialorder %v2419, 0.0
      %vm5356 = vcmp.lt.f32.partialorder %v2422, 0.0
      %vm5357 = vcmp.lt.f32.partialorder %v2423, 0.0
      %vm5358 = vcmp.lt.f32.partialorder %v2426, 0.0
      %vm5359 = vcmp.lt.f32.partialorder %v2427, 0.0
      %vm5360 = vcmp.lt.f32.partialorder %v2430, 0.0
      %vm5361 = vcmp.lt.f32.partialorder %v2431, 0.0
      %vm5362 = vcmp.lt.f32.partialorder %v2434, 0.0
      %vm5363 = vcmp.lt.f32.partialorder %v2435, 0.0
      %vm5364 = vcmp.lt.f32.partialorder %v2438, 0.0
      %vm5365 = vcmp.lt.f32.partialorder %v2439, 0.0
      %vm5366 = vcmp.lt.f32.partialorder %v2442, 0.0
      %vm5367 = vcmp.lt.f32.partialorder %v2443, 0.0
      %vm5368 = vcmp.lt.f32.partialorder %v2446, 0.0
      %vm5369 = vcmp.lt.f32.partialorder %v2447, 0.0
      %vm5370 = vcmp.lt.f32.partialorder %v2450, 0.0
      %vm5371 = vcmp.lt.f32.partialorder %v2451, 0.0
      %vm5372 = vcmp.lt.f32.partialorder %v2454, 0.0
      %vm5373 = vcmp.lt.f32.partialorder %v2455, 0.0
      %vm5374 = vcmp.lt.f32.partialorder %v2458, 0.0
      %vm5375 = vcmp.lt.f32.partialorder %v2459, 0.0
      %vm5376 = vcmp.lt.f32.partialorder %v2462, 0.0
      %vm5377 = vcmp.lt.f32.partialorder %v2463, 0.0
      %vm5378 = vcmp.lt.f32.partialorder %v2466, 0.0
      %vm5379 = vcmp.lt.f32.partialorder %v2467, 0.0
      %vm5380 = vcmp.lt.f32.partialorder %v2470, 0.0
      %vm5381 = vcmp.lt.f32.partialorder %v2471, 0.0
      %vm5382 = vcmp.lt.f32.partialorder %v2474, 0.0
      %vm5383 = vcmp.lt.f32.partialorder %v2475, 0.0
      %vm5384 = vcmp.lt.f32.partialorder %v2478, 0.0
      %vm5385 = vcmp.lt.f32.partialorder %v2479, 0.0
      %vm5386 = vcmp.lt.f32.partialorder %v2482, 0.0
      %vm5387 = vcmp.lt.f32.partialorder %v2483, 0.0
      %vm5388 = vcmp.lt.f32.partialorder %v2486, 0.0
      %vm5389 = vcmp.lt.f32.partialorder %v2487, 0.0
      %vm5390 = vcmp.lt.f32.partialorder %v2490, 0.0
      %vm5391 = vcmp.lt.f32.partialorder %v2491, 0.0
      %vm5392 = vcmp.lt.f32.partialorder %v2494, 0.0
      %vm5393 = vcmp.lt.f32.partialorder %v2495, 0.0
      %vm5394 = vcmp.lt.f32.partialorder %v2498, 0.0
      %vm5395 = vcmp.lt.f32.partialorder %v2499, 0.0
      %vm5396 = vcmp.lt.f32.partialorder %v2502, 0.0
      %vm5397 = vcmp.lt.f32.partialorder %v2503, 0.0
      %vm5398 = vcmp.lt.f32.partialorder %v2506, 0.0
      %vm5399 = vcmp.lt.f32.partialorder %v2507, 0.0
      %vm5400 = vcmp.lt.f32.partialorder %v2510, 0.0
      %vm5401 = vcmp.lt.f32.partialorder %v2511, 0.0
      %vm5402 = vcmp.lt.f32.partialorder %v2514, 0.0
      %vm5403 = vcmp.lt.f32.partialorder %v2515, 0.0
      %vm5404 = vcmp.lt.f32.partialorder %v2518, 0.0
      %vm5405 = vcmp.lt.f32.partialorder %v2519, 0.0
      %vm5406 = vcmp.lt.f32.partialorder %v2522, 0.0
      %vm5407 = vcmp.lt.f32.partialorder %v2523, 0.0
      %vm5408 = vcmp.lt.f32.partialorder %v2526, 0.0
      %vm5409 = vcmp.lt.f32.partialorder %v2527, 0.0
      %vm5410 = vcmp.lt.f32.partialorder %v2530, 0.0
      %vm5411 = vcmp.lt.f32.partialorder %v2531, 0.0
      %v5412 = vsub.f32 0.0, %v5284
      %v5413 = vsub.f32 0.0, %v5285
      %v5414 = vsub.f32 0.0, %v5286
      %v5415 = vsub.f32 0.0, %v5287
      %v5416 = vsub.f32 0.0, %v5288
      %v5417 = vsub.f32 0.0, %v5289
      %v5418 = vsub.f32 0.0, %v5290
      %v5419 = vsub.f32 0.0, %v5291
      %v5420 = vsub.f32 0.0, %v5292
      %v5421 = vsub.f32 0.0, %v5293
      %v5422 = vsub.f32 0.0, %v5294
      %v5423 = vsub.f32 0.0, %v5295
      %v5424 = vsub.f32 0.0, %v5296
      %v5425 = vsub.f32 0.0, %v5297
      %v5426 = vsub.f32 0.0, %v5298
      %v5427 = vsub.f32 0.0, %v5299
      %v5428 = vsub.f32 0.0, %v5300
      %v5429 = vsub.f32 0.0, %v5301
      %v5430 = vsub.f32 0.0, %v5302
      %v5431 = vsub.f32 0.0, %v5303
      %v5432 = vsub.f32 0.0, %v5304
      %v5433 = vsub.f32 0.0, %v5305
      %v5434 = vsub.f32 0.0, %v5306
      %v5435 = vsub.f32 0.0, %v5307
      %v5436 = vsub.f32 0.0, %v5308
      %v5437 = vsub.f32 0.0, %v5309
      %v5438 = vsub.f32 0.0, %v5310
      %v5439 = vsub.f32 0.0, %v5311
      %v5440 = vsub.f32 0.0, %v5312
      %v5441 = vsub.f32 0.0, %v5313
      %v5442 = vsub.f32 0.0, %v5314
      %v5443 = vsub.f32 0.0, %v5315
      %v5444 = vsub.f32 0.0, %v5316
      %v5445 = vsub.f32 0.0, %v5317
      %v5446 = vsub.f32 0.0, %v5318
      %v5447 = vsub.f32 0.0, %v5319
      %v5448 = vsub.f32 0.0, %v5320
      %v5449 = vsub.f32 0.0, %v5321
      %v5450 = vsub.f32 0.0, %v5322
      %v5451 = vsub.f32 0.0, %v5323
      %v5452 = vsub.f32 0.0, %v5324
      %v5453 = vsub.f32 0.0, %v5325
      %v5454 = vsub.f32 0.0, %v5326
      %v5455 = vsub.f32 0.0, %v5327
      %v5456 = vsub.f32 0.0, %v5328
      %v5457 = vsub.f32 0.0, %v5329
      %v5458 = vsub.f32 0.0, %v5330
      %v5459 = vsub.f32 0.0, %v5331
      %v5460 = vsub.f32 0.0, %v5332
      %v5461 = vsub.f32 0.0, %v5333
      %v5462 = vsub.f32 0.0, %v5334
      %v5463 = vsub.f32 0.0, %v5335
      %v5464 = vsub.f32 0.0, %v5336
      %v5465 = vsub.f32 0.0, %v5337
      %v5466 = vsub.f32 0.0, %v5338
      %v5467 = vsub.f32 0.0, %v5339
      %v5468 = vsub.f32 0.0, %v5340
      %v5469 = vsub.f32 0.0, %v5341
      %v5470 = vsub.f32 0.0, %v5342
      %v5471 = vsub.f32 0.0, %v5343
      %v5472 = vsub.f32 0.0, %v5344
      %v5473 = vsub.f32 0.0, %v5345
      %v5474 = vsub.f32 0.0, %v5346
      %v5475 = vsub.f32 0.0, %v5347
      %v5476 = vsel %vm5348, %v5412, %v5284
      %v5477 = vsel %vm5349, %v5413, %v5285
      %v5478 = vsel %vm5350, %v5414, %v5286
      %v5479 = vsel %vm5351, %v5415, %v5287
      %v5480 = vsel %vm5352, %v5416, %v5288
      %v5481 = vsel %vm5353, %v5417, %v5289
      %v5482 = vsel %vm5354, %v5418, %v5290
      %v5483 = vsel %vm5355, %v5419, %v5291
      %v5484 = vsel %vm5356, %v5420, %v5292
      %v5485 = vsel %vm5357, %v5421, %v5293
      %v5486 = vsel %vm5358, %v5422, %v5294
      %v5487 = vsel %vm5359, %v5423, %v5295
      %v5488 = vsel %vm5360, %v5424, %v5296
      %v5489 = vsel %vm5361, %v5425, %v5297
      %v5490 = vsel %vm5362, %v5426, %v5298
      %v5491 = vsel %vm5363, %v5427, %v5299
      %v5492 = vsel %vm5364, %v5428, %v5300
      %v5493 = vsel %vm5365, %v5429, %v5301
      %v5494 = vsel %vm5366, %v5430, %v5302
      %v5495 = vsel %vm5367, %v5431, %v5303
      %v5496 = vsel %vm5368, %v5432, %v5304
      %v5497 = vsel %vm5369, %v5433, %v5305
      %v5498 = vsel %vm5370, %v5434, %v5306
      %v5499 = vsel %vm5371, %v5435, %v5307
      %v5500 = vsel %vm5372, %v5436, %v5308
      %v5501 = vsel %vm5373, %v5437, %v5309
      %v5502 = vsel %vm5374, %v5438, %v5310
      %v5503 = vsel %vm5375, %v5439, %v5311
      %v5504 = vsel %vm5376, %v5440, %v5312
      %v5505 = vsel %vm5377, %v5441, %v5313
      %v5506 = vsel %vm5378, %v5442, %v5314
      %v5507 = vsel %vm5379, %v5443, %v5315
      %v5508 = vsel %vm5380, %v5444, %v5316
      %v5509 = vsel %vm5381, %v5445, %v5317
      %v5510 = vsel %vm5382, %v5446, %v5318
      %v5511 = vsel %vm5383, %v5447, %v5319
      %v5512 = vsel %vm5384, %v5448, %v5320
      %v5513 = vsel %vm5385, %v5449, %v5321
      %v5514 = vsel %vm5386, %v5450, %v5322
      %v5515 = vsel %vm5387, %v5451, %v5323
      %v5516 = vsel %vm5388, %v5452, %v5324
      %v5517 = vsel %vm5389, %v5453, %v5325
      %v5518 = vsel %vm5390, %v5454, %v5326
      %v5519 = vsel %vm5391, %v5455, %v5327
      %v5520 = vsel %vm5392, %v5456, %v5328
      %v5521 = vsel %vm5393, %v5457, %v5329
      %v5522 = vsel %vm5394, %v5458, %v5330
      %v5523 = vsel %vm5395, %v5459, %v5331
      %v5524 = vsel %vm5396, %v5460, %v5332
      %v5525 = vsel %vm5397, %v5461, %v5333
      %v5526 = vsel %vm5398, %v5462, %v5334
      %v5527 = vsel %vm5399, %v5463, %v5335
      %v5528 = vsel %vm5400, %v5464, %v5336
      %v5529 = vsel %vm5401, %v5465, %v5337
      %v5530 = vsel %vm5402, %v5466, %v5338
      %v5531 = vsel %vm5403, %v5467, %v5339
      %v5532 = vsel %vm5404, %v5468, %v5340
      %v5533 = vsel %vm5405, %v5469, %v5341
      %v5534 = vsel %vm5406, %v5470, %v5342
      %v5535 = vsel %vm5407, %v5471, %v5343
      %v5536 = vsel %vm5408, %v5472, %v5344
      %v5537 = vsel %vm5409, %v5473, %v5345
      %v5538 = vsel %vm5410, %v5474, %v5346
      %v5539 = vsel %vm5411, %v5475, %v5347
      %vm5540 = vcmp.eq.f32.partialorder %v3300, 0.0
      %vm5541 = vcmp.eq.f32.partialorder %v3301, 0.0
      %vm5542 = vcmp.eq.f32.partialorder %v3302, 0.0
      %vm5543 = vcmp.eq.f32.partialorder %v3303, 0.0
      %vm5544 = vcmp.eq.f32.partialorder %v3304, 0.0
      %vm5545 = vcmp.eq.f32.partialorder %v3305, 0.0
      %vm5546 = vcmp.eq.f32.partialorder %v3306, 0.0
      %vm5547 = vcmp.eq.f32.partialorder %v3307, 0.0
      %vm5548 = vcmp.eq.f32.partialorder %v3308, 0.0
      %vm5549 = vcmp.eq.f32.partialorder %v3309, 0.0
      %vm5550 = vcmp.eq.f32.partialorder %v3310, 0.0
      %vm5551 = vcmp.eq.f32.partialorder %v3311, 0.0
      %vm5552 = vcmp.eq.f32.partialorder %v3312, 0.0
      %vm5553 = vcmp.eq.f32.partialorder %v3313, 0.0
      %vm5554 = vcmp.eq.f32.partialorder %v3314, 0.0
      %vm5555 = vcmp.eq.f32.partialorder %v3315, 0.0
      %vm5556 = vcmp.eq.f32.partialorder %v3316, 0.0
      %vm5557 = vcmp.eq.f32.partialorder %v3317, 0.0
      %vm5558 = vcmp.eq.f32.partialorder %v3318, 0.0
      %vm5559 = vcmp.eq.f32.partialorder %v3319, 0.0
      %vm5560 = vcmp.eq.f32.partialorder %v3320, 0.0
      %vm5561 = vcmp.eq.f32.partialorder %v3321, 0.0
      %vm5562 = vcmp.eq.f32.partialorder %v3322, 0.0
      %vm5563 = vcmp.eq.f32.partialorder %v3323, 0.0
      %vm5564 = vcmp.eq.f32.partialorder %v3324, 0.0
      %vm5565 = vcmp.eq.f32.partialorder %v3325, 0.0
      %vm5566 = vcmp.eq.f32.partialorder %v3326, 0.0
      %vm5567 = vcmp.eq.f32.partialorder %v3327, 0.0
      %vm5568 = vcmp.eq.f32.partialorder %v3328, 0.0
      %vm5569 = vcmp.eq.f32.partialorder %v3329, 0.0
      %vm5570 = vcmp.eq.f32.partialorder %v3330, 0.0
      %vm5571 = vcmp.eq.f32.partialorder %v3331, 0.0
      %vm5572 = vcmp.eq.f32.partialorder %v3332, 0.0
      %vm5573 = vcmp.eq.f32.partialorder %v3333, 0.0
      %vm5574 = vcmp.eq.f32.partialorder %v3334, 0.0
      %vm5575 = vcmp.eq.f32.partialorder %v3335, 0.0
      %vm5576 = vcmp.eq.f32.partialorder %v3336, 0.0
      %vm5577 = vcmp.eq.f32.partialorder %v3337, 0.0
      %vm5578 = vcmp.eq.f32.partialorder %v3338, 0.0
      %vm5579 = vcmp.eq.f32.partialorder %v3339, 0.0
      %vm5580 = vcmp.eq.f32.partialorder %v3340, 0.0
      %vm5581 = vcmp.eq.f32.partialorder %v3341, 0.0
      %vm5582 = vcmp.eq.f32.partialorder %v3342, 0.0
      %vm5583 = vcmp.eq.f32.partialorder %v3343, 0.0
      %vm5584 = vcmp.eq.f32.partialorder %v3344, 0.0
      %vm5585 = vcmp.eq.f32.partialorder %v3345, 0.0
      %vm5586 = vcmp.eq.f32.partialorder %v3346, 0.0
      %vm5587 = vcmp.eq.f32.partialorder %v3347, 0.0
      %vm5588 = vcmp.eq.f32.partialorder %v3348, 0.0
      %vm5589 = vcmp.eq.f32.partialorder %v3349, 0.0
      %vm5590 = vcmp.eq.f32.partialorder %v3350, 0.0
      %vm5591 = vcmp.eq.f32.partialorder %v3351, 0.0
      %vm5592 = vcmp.eq.f32.partialorder %v3352, 0.0
      %vm5593 = vcmp.eq.f32.partialorder %v3353, 0.0
      %vm5594 = vcmp.eq.f32.partialorder %v3354, 0.0
      %vm5595 = vcmp.eq.f32.partialorder %v3355, 0.0
      %vm5596 = vcmp.eq.f32.partialorder %v3356, 0.0
      %vm5597 = vcmp.eq.f32.partialorder %v3357, 0.0
      %vm5598 = vcmp.eq.f32.partialorder %v3358, 0.0
      %vm5599 = vcmp.eq.f32.partialorder %v3359, 0.0
      %vm5600 = vcmp.eq.f32.partialorder %v3360, 0.0
      %vm5601 = vcmp.eq.f32.partialorder %v3361, 0.0
      %vm5602 = vcmp.eq.f32.partialorder %v3362, 0.0
      %vm5603 = vcmp.eq.f32.partialorder %v3363, 0.0
      %vm5604 = vmand %vm3364, %vm5540
      %vm5605 = vmand %vm3365, %vm5541
      %vm5606 = vmand %vm3366, %vm5542
      %vm5607 = vmand %vm3367, %vm5543
      %vm5608 = vmand %vm3368, %vm5544
      %vm5609 = vmand %vm3369, %vm5545
      %vm5610 = vmand %vm3370, %vm5546
      %vm5611 = vmand %vm3371, %vm5547
      %vm5612 = vmand %vm3372, %vm5548
      %vm5613 = vmand %vm3373, %vm5549
      %vm5614 = vmand %vm3374, %vm5550
      %vm5615 = vmand %vm3375, %vm5551
      %vm5616 = vmand %vm3376, %vm5552
      %vm5617 = vmand %vm3377, %vm5553
      %vm5618 = vmand %vm3378, %vm5554
      %vm5619 = vmand %vm3379, %vm5555
      %vm5620 = vmand %vm3380, %vm5556
      %vm5621 = vmand %vm3381, %vm5557
      %vm5622 = vmand %vm3382, %vm5558
      %vm5623 = vmand %vm3383, %vm5559
      %vm5624 = vmand %vm3384, %vm5560
      %vm5625 = vmand %vm3385, %vm5561
      %vm5626 = vmand %vm3386, %vm5562
      %vm5627 = vmand %vm3387, %vm5563
      %vm5628 = vmand %vm3388, %vm5564
      %vm5629 = vmand %vm3389, %vm5565
      %vm5630 = vmand %vm3390, %vm5566
      %vm5631 = vmand %vm3391, %vm5567
      %vm5632 = vmand %vm3392, %vm5568
      %vm5633 = vmand %vm3393, %vm5569
      %vm5634 = vmand %vm3394, %vm5570
      %vm5635 = vmand %vm3395, %vm5571
      %vm5636 = vmand %vm3396, %vm5572
      %vm5637 = vmand %vm3397, %vm5573
      %vm5638 = vmand %vm3398, %vm5574
      %vm5639 = vmand %vm3399, %vm5575
      %vm5640 = vmand %vm3400, %vm5576
      %vm5641 = vmand %vm3401, %vm5577
      %vm5642 = vmand %vm3402, %vm5578
      %vm5643 = vmand %vm3403, %vm5579
      %vm5644 = vmand %vm3404, %vm5580
      %vm5645 = vmand %vm3405, %vm5581
      %vm5646 = vmand %vm3406, %vm5582
      %vm5647 = vmand %vm3407, %vm5583
      %vm5648 = vmand %vm3408, %vm5584
      %vm5649 = vmand %vm3409, %vm5585
      %vm5650 = vmand %vm3410, %vm5586
      %vm5651 = vmand %vm3411, %vm5587
      %vm5652 = vmand %vm3412, %vm5588
      %vm5653 = vmand %vm3413, %vm5589
      %vm5654 = vmand %vm3414, %vm5590
      %vm5655 = vmand %vm3415, %vm5591
      %vm5656 = vmand %vm3416, %vm5592
      %vm5657 = vmand %vm3417, %vm5593
      %vm5658 = vmand %vm3418, %vm5594
      %vm5659 = vmand %vm3419, %vm5595
      %vm5660 = vmand %vm3420, %vm5596
      %vm5661 = vmand %vm3421, %vm5597
      %vm5662 = vmand %vm3422, %vm5598
      %vm5663 = vmand %vm3423, %vm5599
      %vm5664 = vmand %vm3424, %vm5600
      %vm5665 = vmand %vm3425, %vm5601
      %vm5666 = vmand %vm3426, %vm5602
      %vm5667 = vmand %vm3427, %vm5603
      %v5668 = vsel %vm5604, 0.0, %v5476
      %v5669 = vsel %vm5605, 0.0, %v5477
      %v5670 = vsel %vm5606, 0.0, %v5478
      %v5671 = vsel %vm5607, 0.0, %v5479
      %v5672 = vsel %vm5608, 0.0, %v5480
      %v5673 = vsel %vm5609, 0.0, %v5481
      %v5674 = vsel %vm5610, 0.0, %v5482
      %v5675 = vsel %vm5611, 0.0, %v5483
      %v5676 = vsel %vm5612, 0.0, %v5484
      %v5677 = vsel %vm5613, 0.0, %v5485
      %v5678 = vsel %vm5614, 0.0, %v5486
      %v5679 = vsel %vm5615, 0.0, %v5487
      %v5680 = vsel %vm5616, 0.0, %v5488
      %v5681 = vsel %vm5617, 0.0, %v5489
      %v5682 = vsel %vm5618, 0.0, %v5490
      %v5683 = vsel %vm5619, 0.0, %v5491
      %v5684 = vsel %vm5620, 0.0, %v5492
      %v5685 = vsel %vm5621, 0.0, %v5493
      %v5686 = vsel %vm5622, 0.0, %v5494
      %v5687 = vsel %vm5623, 0.0, %v5495
      %v5688 = vsel %vm5624, 0.0, %v5496
      %v5689 = vsel %vm5625, 0.0, %v5497
      %v5690 = vsel %vm5626, 0.0, %v5498
      %v5691 = vsel %vm5627, 0.0, %v5499
      %v5692 = vsel %vm5628, 0.0, %v5500
      %v5693 = vsel %vm5629, 0.0, %v5501
      %v5694 = vsel %vm5630, 0.0, %v5502
      %v5695 = vsel %vm5631, 0.0, %v5503
      %v5696 = vsel %vm5632, 0.0, %v5504
      %v5697 = vsel %vm5633, 0.0, %v5505
      %v5698 = vsel %vm5634, 0.0, %v5506
      %v5699 = vsel %vm5635, 0.0, %v5507
      %v5700 = vsel %vm5636, 0.0, %v5508
      %v5701 = vsel %vm5637, 0.0, %v5509
      %v5702 = vsel %vm5638, 0.0, %v5510
      %v5703 = vsel %vm5639, 0.0, %v5511
      %v5704 = vsel %vm5640, 0.0, %v5512
      %v5705 = vsel %vm5641, 0.0, %v5513
      %v5706 = vsel %vm5642, 0.0, %v5514
      %v5707 = vsel %vm5643, 0.0, %v5515
      %v5708 = vsel %vm5644, 0.0, %v5516
      %v5709 = vsel %vm5645, 0.0, %v5517
      %v5710 = vsel %vm5646, 0.0, %v5518
      %v5711 = vsel %vm5647, 0.0, %v5519
      %v5712 = vsel %vm5648, 0.0, %v5520
      %v5713 = vsel %vm5649, 0.0, %v5521
      %v5714 = vsel %vm5650, 0.0, %v5522
      %v5715 = vsel %vm5651, 0.0, %v5523
      %v5716 = vsel %vm5652, 0.0, %v5524
      %v5717 = vsel %vm5653, 0.0, %v5525
      %v5718 = vsel %vm5654, 0.0, %v5526
      %v5719 = vsel %vm5655, 0.0, %v5527
      %v5720 = vsel %vm5656, 0.0, %v5528
      %v5721 = vsel %vm5657, 0.0, %v5529
      %v5722 = vsel %vm5658, 0.0, %v5530
      %v5723 = vsel %vm5659, 0.0, %v5531
      %v5724 = vsel %vm5660, 0.0, %v5532
      %v5725 = vsel %vm5661, 0.0, %v5533
      %v5726 = vsel %vm5662, 0.0, %v5534
      %v5727 = vsel %vm5663, 0.0, %v5535
      %v5728 = vsel %vm5664, 0.0, %v5536
      %v5729 = vsel %vm5665, 0.0, %v5537
      %v5730 = vsel %vm5666, 0.0, %v5538
      %v5731 = vsel %vm5667, 0.0, %v5539
      %5732 = vst [vmem:[%s220] sm:$0xff] %v5668
      %5733 = vst [vmem:[%s220 + $0x8] sm:$0xff] %v5669
      %5734 = vst [vmem:[%s220 + $0x10] sm:$0xff] %v5670
      %5735 = vst [vmem:[%s220 + $0x18] sm:$0xff] %v5671
      %5736 = vst [vmem:[%s220 + $0x20] sm:$0xff] %v5672
      %5737 = vst [vmem:[%s220 + $0x28] sm:$0xff] %v5673
      %5738 = vst [vmem:[%s220 + $0x30] sm:$0xff] %v5674
      %5739 = vst [vmem:[%s220 + $0x38] sm:$0xff] %v5675
      %5740 = vst [vmem:[%s220 + $0x40] sm:$0xff] %v5676
      %5741 = vst [vmem:[%s220 + $0x48] sm:$0xff] %v5677
      %5742 = vst [vmem:[%s220 + $0x50] sm:$0xff] %v5678
      %5743 = vst [vmem:[%s220 + $0x58] sm:$0xff] %v5679
      %5744 = vst [vmem:[%s220 + $0x60] sm:$0xff] %v5680
      %5745 = vst [vmem:[%s220 + $0x68] sm:$0xff] %v5681
      %5746 = vst [vmem:[%s220 + $0x70] sm:$0xff] %v5682
      %5747 = vst [vmem:[%s220 + $0x78] sm:$0xff] %v5683
      %5748 = vst [vmem:[%s220 + $0x80] sm:$0xff] %v5684
      %5749 = vst [vmem:[%s220 + $0x88] sm:$0xff] %v5685
      %5750 = vst [vmem:[%s220 + $0x90] sm:$0xff] %v5686
      %5751 = vst [vmem:[%s220 + $0x98] sm:$0xff] %v5687
      %5752 = vst [vmem:[%s220 + $0xa0] sm:$0xff] %v5688
      %5753 = vst [vmem:[%s220 + $0xa8] sm:$0xff] %v5689
      %5754 = vst [vmem:[%s220 + $0xb0] sm:$0xff] %v5690
      %5755 = vst [vmem:[%s220 + $0xb8] sm:$0xff] %v5691
      %5756 = vst [vmem:[%s220 + $0xc0] sm:$0xff] %v5692
      %5757 = vst [vmem:[%s220 + $0xc8] sm:$0xff] %v5693
      %5758 = vst [vmem:[%s220 + $0xd0] sm:$0xff] %v5694
      %5759 = vst [vmem:[%s220 + $0xd8] sm:$0xff] %v5695
      %5760 = vst [vmem:[%s220 + $0xe0] sm:$0xff] %v5696
      %5761 = vst [vmem:[%s220 + $0xe8] sm:$0xff] %v5697
      %5762 = vst [vmem:[%s220 + $0xf0] sm:$0xff] %v5698
      %5763 = vst [vmem:[%s220 + $0xf8] sm:$0xff] %v5699
      %5764 = vst [vmem:[%s220 + $0x100] sm:$0xff] %v5700
      %5765 = vst [vmem:[%s220 + $0x108] sm:$0xff] %v5701
      %5766 = vst [vmem:[%s220 + $0x110] sm:$0xff] %v5702
      %5767 = vst [vmem:[%s220 + $0x118] sm:$0xff] %v5703
      %5768 = vst [vmem:[%s220 + $0x120] sm:$0xff] %v5704
      %5769 = vst [vmem:[%s220 + $0x128] sm:$0xff] %v5705
      %5770 = vst [vmem:[%s220 + $0x130] sm:$0xff] %v5706
      %5771 = vst [vmem:[%s220 + $0x138] sm:$0xff] %v5707
      %5772 = vst [vmem:[%s220 + $0x140] sm:$0xff] %v5708
      %5773 = vst [vmem:[%s220 + $0x148] sm:$0xff] %v5709
      %5774 = vst [vmem:[%s220 + $0x150] sm:$0xff] %v5710
      %5775 = vst [vmem:[%s220 + $0x158] sm:$0xff] %v5711
      %5776 = vst [vmem:[%s220 + $0x160] sm:$0xff] %v5712
      %5777 = vst [vmem:[%s220 + $0x168] sm:$0xff] %v5713
      %5778 = vst [vmem:[%s220 + $0x170] sm:$0xff] %v5714
      %5779 = vst [vmem:[%s220 + $0x178] sm:$0xff] %v5715
      %5780 = vst [vmem:[%s220 + $0x180] sm:$0xff] %v5716
      %5781 = vst [vmem:[%s220 + $0x188] sm:$0xff] %v5717
      %5782 = vst [vmem:[%s220 + $0x190] sm:$0xff] %v5718
      %5783 = vst [vmem:[%s220 + $0x198] sm:$0xff] %v5719
      %5784 = vst [vmem:[%s220 + $0x1a0] sm:$0xff] %v5720
      %5785 = vst [vmem:[%s220 + $0x1a8] sm:$0xff] %v5721
      %5786 = vst [vmem:[%s220 + $0x1b0] sm:$0xff] %v5722
      %5787 = vst [vmem:[%s220 + $0x1b8] sm:$0xff] %v5723
      %5788 = vst [vmem:[%s220 + $0x1c0] sm:$0xff] %v5724
      %5789 = vst [vmem:[%s220 + $0x1c8] sm:$0xff] %v5725
      %5790 = vst [vmem:[%s220 + $0x1d0] sm:$0xff] %v5726
      %5791 = vst [vmem:[%s220 + $0x1d8] sm:$0xff] %v5727
      %5792 = vst [vmem:[%s220 + $0x1e0] sm:$0xff] %v5728
      %5793 = vst [vmem:[%s220 + $0x1e8] sm:$0xff] %v5729
      %5794 = vst [vmem:[%s220 + $0x1f0] sm:$0xff] %v5730
      %5795 = vst [vmem:[%s220 + $0x1f8] sm:$0xff] %v5731
      %s5796 = smul.u32 32, %s16
      %p5797 = scmp.lt.s32.totalorder %s5796, 63
      %s5798 = scalar_select %p5797, %s5796, 63
      %s5799 = smul.addr %s5798, 2
      %s5800 = smul.addr %s5799, 8
      %s5801 = scalar_lea.vmem %s3, %s5800
      %s5802 = smul.u32 32, %s16
      %p5803 = scmp.lt.s32.totalorder %s5802, 63
      %s5804 = scalar_select %p5803, %s5802, 63
      %s5805 = smul.addr %s5804, 2
      %s5806 = smul.addr %s5805, 8
      %s5807 = scalar_lea.vmem %s4, %s5806
      // Predicated region
      $region33: #{spectrogram.1} parent=31 // pred_check
        %p5808 = pneg %p102
      $region34: #{spectrogram.1} parent=31 // pred_check_branch
        %5810 = sbr.rel (%p5808) target = $region36
      $region35: #{spectrogram.1} parent=31 // pred_region
        %s5811 = smul.u32 32, %s16
      $region36: #{spectrogram.1} parent=31 // pred_fallthru
        _
      // Predicated region
      $region37: #{spectrogram.1} parent=31 // pred_check
        %p5812 = pneg %p128
      $region38: #{spectrogram.1} parent=31 // pred_check_branch
        %5814 = sbr.rel (%p5812) target = $region40
      $region39: #{spectrogram.1} parent=31 // pred_region
        %s5815 = smul.u32 32, %s16
      $region40: #{spectrogram.1} parent=31 // pred_fallthru
        _
    $region32: #{spectrogram.1} parent=5 // pred_fallthru
      _
    %p5816 = scmp.le.s32.totalorder 2, %s11
    // Predicated region
    $region41: #{spectrogram.1} parent=5 // pred_check
      %p5817 = pneg %p5816
    $region42: #{spectrogram.1} parent=5 // pred_check_branch
      %5819 = sbr.rel (%p5817) target = $region44
    $region43: #{spectrogram.1} parent=5 // pred_region
      %s5820 = ssub.s32 %s11, 2
      // Predicated region
      $region45: #{spectrogram.1} parent=43 // pred_check
        %p5821 = pneg %p108
      $region46: #{spectrogram.1} parent=43 // pred_check_branch
        %5823 = sbr.rel (%p5821) target = $region48
      $region47: #{spectrogram.1} parent=43 // pred_region
        %s5824 = smul.u32 32, %s17
        %p5825 = scmp.lt.s32.totalorder %s5824, 63
        %s5826 = scalar_select %p5825, %s5824, 63
        %s5827 = smul.addr %s5826, 2
        %s5828 = smul.addr %s5827, 8
        %s5829 = scalar_lea.vmem %s3, %s5828
      $region48: #{spectrogram.1} parent=43 // pred_fallthru
        _
      // Predicated region
      $region49: #{spectrogram.1} parent=43 // pred_check
        %p5830 = pneg %p134
      $region50: #{spectrogram.1} parent=43 // pred_check_branch
        %5832 = sbr.rel (%p5830) target = $region52
      $region51: #{spectrogram.1} parent=43 // pred_region
        %s5833 = smul.u32 32, %s17
        %p5834 = scmp.lt.s32.totalorder %s5833, 63
        %s5835 = scalar_select %p5834, %s5833, 63
        %s5836 = smul.addr %s5835, 2
        %s5837 = smul.addr %s5836, 8
        %s5838 = scalar_lea.vmem %s4, %s5837
      $region52: #{spectrogram.1} parent=43 // pred_fallthru
        _
    $region44: #{spectrogram.1} parent=5 // pred_fallthru
      _
  $region6: #{spectrogram.1} parent=0 // loop_footer
    %s15 = sadd.s32 1, %s11
  $region7: #{spectrogram.1} parent=0 // loop_footer_branch
    %10 = sbr.rel target = $region3
  $region8: #{spectrogram.1} parent=0 // loop_exit
    _

</llo_original>
